<compile_context>
chip_gen: v5e
topology: v5e:2x2
jax: 0.10.0
libtpu: 0.0.40
codegen_flags: <defaults>
</compile_context>

<pallas_src>
import functools
import numpy as np
import jax
import jax.numpy as jnp
from jax.experimental import pallas as pl
from jax.experimental.pallas import tpu as pltpu


# ------------------------------ tiling helper -------------------------------

def _pick_tile(M, max_tile=1024):
    """Largest lane tile (multiple of 128) dividing M, capped, keeping >=2 steps."""
    if M <= 128 or M % 128 != 0:
        return M
    tm = 128
    while tm * 2 <= max_tile and M % (tm * 2) == 0 and M // (tm * 2) >= 2:
        tm *= 2
    return tm


# ----------------------- fused 1x1-conv kernels (C, M) ----------------------
# Transposed layout: activations are (channels, B*H*W); spatial index on lanes.

def _conv_t_kernel(x_ref, w_ref, b_ref, o_ref):
    o_ref[...] = (jnp.dot(w_ref[...], x_ref[...], preferred_element_type=jnp.float32)
                  + b_ref[...]).astype(o_ref.dtype)


def conv_t(x_t, w_t, b_col):
    """y = w_t @ x_t + b : x_t (Cin, M), w_t (Cout, Cin), b_col (Cout, 1)."""
    Cout, Cin = w_t.shape
    M = x_t.shape[1]
    TM = _pick_tile(M)
    return pl.pallas_call(
        _conv_t_kernel,
        out_shape=jax.ShapeDtypeStruct((Cout, M), jnp.float32),
        grid_spec=pltpu.PrefetchScalarGridSpec(
            num_scalar_prefetch=0, grid=(M // TM,),
            in_specs=[pl.BlockSpec((Cin, TM), lambda i: (0, i)),
                      pl.BlockSpec((Cout, Cin), lambda i: (0, 0)),
                      pl.BlockSpec((Cout, 1), lambda i: (0, 0))],
            out_specs=pl.BlockSpec((Cout, TM), lambda i: (0, i))),
        compiler_params=pltpu.CompilerParams(dimension_semantics=("parallel",)),
    )(x_t, w_t, b_col)


def _fused_block_kernel(x_ref, wc_ref, bc_ref, wr_ref, br_ref, net_ref, rgb_ref):
    """psu-conv+pixel-shuffle+feat-conv (weight-fused) + LeakyReLU + feat_2_rgb conv."""
    acc = jnp.dot(wc_ref[...], x_ref[...], preferred_element_type=jnp.float32) + bc_ref[...]
    net = jnp.where(acc >= 0.0, acc, 0.2 * acc)           # nn.LeakyReLU(0.2)
    net_ref[...] = net.astype(net_ref.dtype)
    rgb_ref[...] = (jnp.dot(wr_ref[...], net, preferred_element_type=jnp.float32)
                    + br_ref[...]).astype(rgb_ref.dtype)


def fused_block(net_t, w_comb_t, b_comb, w_rgb_blk, b_rgb4):
    """net_t (Cin, M) -> (net4 (4*Cout, M), rgb4 (4*out_dim, M)), sub-position major."""
    C4, Cin = w_comb_t.shape
    R4 = w_rgb_blk.shape[0]
    M = net_t.shape[1]
    TM = _pick_tile(M)
    return pl.pallas_call(
        _fused_block_kernel,
        out_shape=(jax.ShapeDtypeStruct((C4, M), jnp.float32),
                   jax.ShapeDtypeStruct((R4, M), jnp.float32)),
        grid_spec=pltpu.PrefetchScalarGridSpec(
            num_scalar_prefetch=0, grid=(M // TM,),
            in_specs=[pl.BlockSpec((Cin, TM), lambda i: (0, i)),
                      pl.BlockSpec((C4, Cin), lambda i: (0, 0)),
                      pl.BlockSpec((C4, 1), lambda i: (0, 0)),
                      pl.BlockSpec((R4, C4), lambda i: (0, 0)),
                      pl.BlockSpec((R4, 1), lambda i: (0, 0))],
            out_specs=(pl.BlockSpec((C4, TM), lambda i: (0, i)),
                       pl.BlockSpec((R4, TM), lambda i: (0, i)))),
        compiler_params=pltpu.CompilerParams(dimension_semantics=("parallel",)),
    )(net_t, w_comb_t, b_comb, w_rgb_blk, b_rgb4)


def fuse_block_weights(psu_w, psu_b, feat_w, feat_b, rgb_w, rgb_b):
    """Precompute the per-sub-position fused weights (pixel_shuffle channel c*4+i*2+j)."""
    Cin = psu_w.shape[0]
    Cout = feat_w.shape[1]
    out_dim = rgb_w.shape[1]
    wp = psu_w.reshape(Cin, Cin, 4).transpose(0, 2, 1)            # (in, p, c)
    w_comb = jnp.einsum('ipc,co->ipo', wp, feat_w)                # (in, p, cout)
    w_comb_t = w_comb.reshape(Cin, 4 * Cout).T                    # (4*Cout, Cin)
    bp = psu_b.reshape(Cin, 4).T                                  # (p, c)
    b_comb = (bp @ feat_w + feat_b[None, :]).reshape(4 * Cout, 1)
    w_rgb_blk = jnp.kron(jnp.eye(4, dtype=rgb_w.dtype), rgb_w.T)  # (4*out_dim, 4*Cout)
    b_rgb4 = jnp.tile(rgb_b, 4).reshape(4 * out_dim, 1)
    return w_comb_t, b_comb, w_rgb_blk, b_rgb4


def _pixel_shuffle_t(y4_t, C, B, h, w):
    """(4*C, B*h*w) sub-position-major rows -> (C, B, 2h, 2w)."""
    y = y4_t.reshape(2, 2, C, B, h, w)                 # (i, j, c, b, y, x)
    y = jnp.transpose(y, (2, 3, 4, 0, 5, 1))           # (c, b, y, i, x, j)
    return y.reshape(C, B, 2 * h, 2 * w)


# ----------------- bicubic x2 (align_corners=False) + blur ------------------
# Both ops are linear & separable -> dense 1-D matrices, applied as two MXU
# matmuls per grid step with a block-diagonal left operator batching nb images.

_CUBIC_EVEN = np.array([-0.03515625, 0.26171875, 0.87890625, -0.10546875], np.float64)
_CUBIC_ODD = np.array([-0.10546875, 0.87890625, 0.26171875, -0.03515625], np.float64)


def _bicubic_up2_matrix(n):
    """(2n, n) matrix = PyTorch bicubic x2 upsample (a=-0.75), clamped border."""
    m = np.zeros((2 * n, n), np.float64)
    for k in range(n):
        for t, wt in zip(range(k - 2, k + 2), _CUBIC_EVEN):      # output 2k
            m[2 * k, min(max(t, 0), n - 1)] += wt
        for t, wt in zip(range(k - 1, k + 3), _CUBIC_ODD):       # output 2k+1
            m[2 * k + 1, min(max(t, 0), n - 1)] += wt
    return m


def _blur_matrix(n):
    """(n, n) normalized [1,2,1]/4 blur with reflect border (kornia filter2d)."""
    m = np.zeros((n, n), np.float64)
    for i in range(n):
        for dt, wt in zip((-1, 0, 1), (0.25, 0.5, 0.25)):
            t = i + dt
            if t < 0:
                t = -t
            if t >= n:
                t = 2 * n - 2 - t
            m[i, t] += wt
    return m


def _upblur_kernel(x_ref, lbd_ref, r_ref, o_ref):
    z = jnp.dot(lbd_ref[...], x_ref[...], preferred_element_type=jnp.float32)
    o_ref[...] = jnp.dot(z, r_ref[...], preferred_element_type=jnp.float32).astype(o_ref.dtype)


def rgb_upsample_t(rgb_cbhw):
    """rgb (C, B, h, w) -> (C, B, 2h, 2w): bicubic x2 + blur, batched across images."""
    C, B, h, w = rgb_cbhw.shape
    N = C * B
    G = 2 if (N % 2 == 0 and N >= 2) else 1
    nb = N // G
    Lm = _blur_matrix(2 * h) @ _bicubic_up2_matrix(h)            # (2h, h)
    Rm = (_blur_matrix(2 * w) @ _bicubic_up2_matrix(w)).T        # (w, 2w)
    Lbd = np.kron(np.eye(nb), Lm)                                # (nb*2h, nb*h)
    xs = rgb_cbhw.reshape(N * h, w)
    out = pl.pallas_call(
        _upblur_kernel,
        out_shape=jax.ShapeDtypeStruct((N * 2 * h, 2 * w), jnp.float32),
        grid_spec=pltpu.PrefetchScalarGridSpec(
            num_scalar_prefetch=0, grid=(G,),
            in_specs=[pl.BlockSpec((nb * h, w), lambda i: (i, 0)),
                      pl.BlockSpec((nb * 2 * h, nb * h), lambda i: (0, 0)),
                      pl.BlockSpec((w, 2 * w), lambda i: (0, 0))],
            out_specs=pl.BlockSpec((nb * 2 * h, 2 * w), lambda i: (i, 0))),
        compiler_params=pltpu.CompilerParams(dimension_semantics=("parallel",)),
    )(xs, jnp.asarray(Lbd, jnp.float32), jnp.asarray(Rm, jnp.float32))
    return out.reshape(C, B, 2 * h, 2 * w)


# ----------------------- multi-level Haar DWT (1 kernel) --------------------

def _haar_full(n):
    """(n, n) stacked Haar analysis matrix [[lo],[hi]]; transpose gives [lo.T | hi.T]."""
    lo = np.zeros((n // 2, n), np.float32)
    hi = np.zeros((n // 2, n), np.float32)
    s = np.float32(1.0 / np.sqrt(2.0))
    for k in range(n // 2):
        lo[k, 2 * k] = s
        lo[k, 2 * k + 1] = s
        hi[k, 2 * k] = s
        hi[k, 2 * k + 1] = -s
    return np.concatenate([lo, hi], axis=0)


def _dwt_multi_kernel(*refs, nb, levels):
    x_ref = refs[0]
    mats = refs[1:1 + 2 * levels]                 # (h0, w0t, h1, w1t, ...)
    det_refs = refs[1 + 2 * levels:1 + 3 * levels]
    ll_ref = refs[1 + 3 * levels]
    for i in range(nb):                           # static unroll over images in block
        cur = x_ref[i]
        for lvl in range(levels):                 # LL band cascades in registers
            y = jnp.dot(mats[2 * lvl][...], cur, preferred_element_type=jnp.float32)
            y = jnp.dot(y, mats[2 * lvl + 1][...], preferred_element_type=jnp.float32)
            h2 = y.shape[0] // 2
            w2 = y.shape[1] // 2
            det_refs[lvl][i, 0] = y[:h2, w2:]     # LH
            det_refs[lvl][i, 1] = y[h2:, :w2]     # HL
            det_refs[lvl][i, 2] = y[h2:, w2:]     # HH
            cur = y[:h2, :w2]                     # LL
        ll_ref[i] = cur


def multi_level_dwt(rgb_nchw, levels=3):
    # TODO(synk): `multi_level_dwt` is not defined in the reference snippet; this is a
    # standard multi-level orthonormal Haar 2D DWT returning per-level detail stacks
    # [(B,C,3,h,w), ...] followed by the final LL band (B,C,h,w).
    B, C, H, W = rgb_nchw.shape
    N = B * C
    x = rgb_nchw.reshape(N, H, W)
    G = 2 if (N % 2 == 0 and N >= 2) else 1
    nb = N // G

    mats = []
    hh, ww = H, W
    for _ in range(levels):
        mats.append(jnp.asarray(_haar_full(hh), jnp.float32))        # (hh, hh)
        mats.append(jnp.asarray(_haar_full(ww).T, jnp.float32))      # (ww, ww)
        hh, ww = hh // 2, ww // 2

    out_shapes, out_specs = [], []
    hh, ww = H, W
    for _ in range(levels):
        hh, ww = hh // 2, ww // 2
        out_shapes.append(jax.ShapeDtypeStruct((N, 3, hh, ww), jnp.float32))
        out_specs.append(pl.BlockSpec((nb, 3, hh, ww), lambda i: (i, 0, 0, 0)))
    out_shapes.append(jax.ShapeDtypeStruct((N, hh, ww), jnp.float32))
    out_specs.append(pl.BlockSpec((nb, hh, ww), lambda i: (i, 0, 0)))

    in_specs = [pl.BlockSpec((nb, H, W), lambda i: (i, 0, 0))]
    for m in mats:
        in_specs.append(pl.BlockSpec(m.shape, lambda i: (0, 0)))

    outs = pl.pallas_call(
        functools.partial(_dwt_multi_kernel, nb=nb, levels=levels),
        out_shape=tuple(out_shapes),
        grid_spec=pltpu.PrefetchScalarGridSpec(
            num_scalar_prefetch=0, grid=(G,),
            in_specs=in_specs, out_specs=tuple(out_specs)),
        compiler_params=pltpu.CompilerParams(dimension_semantics=("parallel",)),
    )(x, *mats)

    result = []
    hh, ww = H, W
    for lvl in range(levels):
        hh, ww = hh // 2, ww // 2
        result.append(outs[lvl].reshape(B, C, 3, hh, ww))
    result.append(outs[levels].reshape(B, C, hh, ww))
    return result


# ------------------------------- params / glue -------------------------------

def init_params(key, feat_nc=32, out_dim=3, min_feat=8, featmap_size=8, img_size=32):
    n_blocks = int(np.log2(img_size) - np.log2(featmap_size))

    def conv_init(k, cin, cout):
        kw, kb = jax.random.split(k)
        w = jax.random.normal(kw, (cin, cout), jnp.float32) / np.sqrt(cin)
        b = 0.01 * jax.random.normal(kb, (cout,), jnp.float32)
        return w, b

    keys = iter(jax.random.split(key, 64))
    ch = lambda i: max(feat_nc // (2 ** i), min_feat)
    params = {
        # feat_2_rgb_list: Conv(feat_nc->3) then Conv(ch(i+1)->3) per block
        "feat_2_rgb": [conv_init(next(keys), feat_nc, out_dim)]
                      + [conv_init(next(keys), ch(i + 1), out_dim) for i in range(n_blocks)],
        # feat_layers: Conv(ch(i)->ch(i+1))
        "feat_layers": [conv_init(next(keys), ch(i), ch(i + 1)) for i in range(n_blocks)],
        # PixelShuffleUpsample(ch(i)): 1x1 conv ch(i) -> 4*ch(i), then pixel shuffle x2
        "psu": [conv_init(next(keys), ch(i), 4 * ch(i)) for i in range(n_blocks)],
        # bg_featmap ('white') -- created for fidelity, not used by forward()
        "bg_featmap": jnp.ones((1, feat_nc, featmap_size, featmap_size), jnp.float32),
    }
    return params, n_blocks


def neural_renderer_forward(params, x_nchw, final_actvn=True):
    # TODO(synk): aud is None here; the TransformerEncoderLayer cross-attention branch
    # of forward() (aud is not None) and the bg_layer path are not implemented.
    B, Cf, h, w = x_nchw.shape
    x_t = jnp.transpose(x_nchw, (1, 0, 2, 3)).reshape(Cf, B * h * w)   # (C, B*h*w)
    f2r = params["feat_2_rgb"]

    # rgb = rgb_upsample(feat_2_rgb[0](x))
    w0, b0 = f2r[0]
    rgb_t = conv_t(x_t, w0.T, b0.reshape(-1, 1))                       # (3, B*h*w)
    rgb = rgb_upsample_t(rgb_t.reshape(3, B, h, w))                    # (3, B, 2h, 2w)
    sync_mid = rgb

    net_t = x_t
    ch_, cw_ = h, w
    n_blocks = len(params["feat_layers"])
    for idx in range(n_blocks):
        psu_w, psu_b = params["psu"][idx]
        fw, fb = params["feat_layers"][idx]
        rw, rb = f2r[idx + 1]
        cout = fw.shape[1]
        wct, bc, wrb, br4 = fuse_block_weights(psu_w, psu_b, fw, fb, rw, rb)
        net4_t, rgb4_t = fused_block(net_t, wct, bc, wrb, br4)
        net_t = _pixel_shuffle_t(net4_t, cout, B, ch_, cw_).reshape(cout, -1)
        delta = _pixel_shuffle_t(rgb4_t, 3, B, ch_, cw_)               # (3, B, 2h, 2w)
        ch_, cw_ = 2 * ch_, 2 * cw_
        rgb = rgb + delta                                              # residual add
        if idx < n_blocks - 1:
            rgb = rgb_upsample_t(rgb)
    if final_actvn:
        rgb = jax.nn.sigmoid(rgb)

    rgb_nchw = jnp.transpose(rgb, (1, 0, 2, 3))                        # (B, 3, H, W)
    sync_mid_nchw = jnp.transpose(sync_mid, (1, 0, 2, 3))
    dwt = multi_level_dwt(rgb_nchw, levels=3)
    return rgb_nchw, dwt, sync_mid_nchw


if __name__ == "__main__":
    key = jax.random.PRNGKey(0)
    kx, kp = jax.random.split(key)

    # small config: feat_nc=32, featmap_size=8, img_size=32 -> n_blocks=2
    B, feat_nc, featmap_size, img_size, min_feat = 2, 32, 8, 32, 8
    x = jax.random.normal(kx, (B, feat_nc, featmap_size, featmap_size), jnp.float32)
    params, n_blocks = init_params(kp, feat_nc=feat_nc, out_dim=3, min_feat=min_feat,
                                   featmap_size=featmap_size, img_size=img_size)

    fwd = jax.jit(neural_renderer_forward)
    rgb, dwt, sync_mid = fwd(params, x)
    jax.block_until_ready((rgb, dwt, sync_mid))

    assert rgb.shape == (B, 3, img_size, img_size)
    assert sync_mid.shape == (B, 3, 2 * featmap_size, 2 * featmap_size)
    assert dwt[0].shape == (B, 3, 3, img_size // 2, img_size // 2)
    assert dwt[-1].shape == (B, 3, img_size // 8, img_size // 8)
    print("KERNEL_OK")
</pallas_src>

<mosaic_0001>
module attributes {stable_mosaic.version = 11 : i64} {
  func.func @_upblur_kernel(%arg0: i32, %arg1: memref<24x8xf32, #tpu.memory_space<vmem>>, %arg2: memref<48x24xf32, #tpu.memory_space<vmem>>, %arg3: memref<8x16xf32, #tpu.memory_space<vmem>>, %arg4: memref<48x16xf32, #tpu.memory_space<vmem>>) attributes {dimension_semantics = [#tpu.dimension_semantics<parallel>], iteration_bounds = array<i64: 2>, scalar_prefetch = 0 : i64, scratch_operands = 0 : i64, tpu.core_type = #tpu.core_type<tc>, window_params = [{transform_indices = @transform_0, window_bounds = array<i64: 24, 8>}, {pipeline_mode = #tpu.pipeline_mode<synchronous>, transform_indices = @transform_1, window_bounds = array<i64: 48, 24>}, {pipeline_mode = #tpu.pipeline_mode<synchronous>, transform_indices = @transform_2, window_bounds = array<i64: 8, 16>}, {transform_indices = @transform_3, window_bounds = array<i64: 48, 16>}]} {
    %c0 = arith.constant 0 : index
    %c0_0 = arith.constant 0 : index
    %0 = vector.load %arg2[%c0, %c0_0] : memref<48x24xf32, #tpu.memory_space<vmem>>, vector<48x24xf32>
    %c0_1 = arith.constant 0 : index
    %c0_2 = arith.constant 0 : index
    %1 = vector.load %arg1[%c0_1, %c0_2] : memref<24x8xf32, #tpu.memory_space<vmem>>, vector<24x8xf32>
    %cst = arith.constant dense<0.000000e+00> : vector<48x8xf32>
    %2 = tpu.matmul %0, %1, %cst {dimension_numbers = #tpu.dot_dimension_numbers<[1], [0], [0], [1], [0, 0, 1, 1], [], []>} : vector<48x24xf32>, vector<24x8xf32>, vector<48x8xf32> -> vector<48x8xf32>
    %c0_3 = arith.constant 0 : index
    %c0_4 = arith.constant 0 : index
    %3 = vector.load %arg3[%c0_3, %c0_4] : memref<8x16xf32, #tpu.memory_space<vmem>>, vector<8x16xf32>
    %cst_5 = arith.constant dense<0.000000e+00> : vector<48x16xf32>
    %4 = tpu.matmul %2, %3, %cst_5 {dimension_numbers = #tpu.dot_dimension_numbers<[1], [0], [0], [1], [0, 0, 1, 1], [], []>} : vector<48x8xf32>, vector<8x16xf32>, vector<48x16xf32> -> vector<48x16xf32>
    %c0_6 = arith.constant 0 : index
    %c0_7 = arith.constant 0 : index
    %5 = vector.load %arg4[%c0_6, %c0_7] : memref<48x16xf32, #tpu.memory_space<vmem>>, vector<48x16xf32>
    tpu.vector_store %arg4[%c0_6, %c0_7], %4 {strides = array<i32>} : memref<48x16xf32, #tpu.memory_space<vmem>>, vector<48x16xf32>,
    return
  }
  func.func @transform_0(%arg0: i32) -> (i32, i32) {
    %c0_i32 = arith.constant 0 : i32
    %c0_i32_0 = arith.constant 0 : i32
    return %arg0, %c0_i32 : i32, i32
  }
  func.func @transform_1(%arg0: i32) -> (i32, i32) {
    %c0_i32 = arith.constant 0 : i32
    %c0_i32_0 = arith.constant 0 : i32
    %c0_i32_1 = arith.constant 0 : i32
    return %c0_i32, %c0_i32_0 : i32, i32
  }
  func.func @transform_2(%arg0: i32) -> (i32, i32) {
    %c0_i32 = arith.constant 0 : i32
    %c0_i32_0 = arith.constant 0 : i32
    %c0_i32_1 = arith.constant 0 : i32
    return %c0_i32, %c0_i32_0 : i32, i32
  }
  func.func @transform_3(%arg0: i32) -> (i32, i32) {
    %c0_i32 = arith.constant 0 : i32
    %c0_i32_0 = arith.constant 0 : i32
    return %arg0, %c0_i32 : i32, i32
  }
}

module attributes {stable_mosaic.version = 11 : i64} {
  func.func @_conv_t_kernel(%arg0: i32, %arg1: memref<32x128xf32, #tpu.memory_space<vmem>>, %arg2: memref<3x32xf32, #tpu.memory_space<vmem>>, %arg3: memref<3x1xf32, #tpu.memory_space<vmem>>, %arg4: memref<3x128xf32, #tpu.memory_space<vmem>>) attributes {dimension_semantics = [#tpu.dimension_semantics<parallel>], iteration_bounds = array<i64: 1>, scalar_prefetch = 0 : i64, scratch_operands = 0 : i64, tpu.core_type = #tpu.core_type<tc>, window_params = [{transform_indices = @transform_0, window_bounds = array<i64: 32, 128>}, {pipeline_mode = #tpu.pipeline_mode<synchronous>, transform_indices = @transform_1, window_bounds = array<i64: 3, 32>}, {pipeline_mode = #tpu.pipeline_mode<synchronous>, transform_indices = @transform_2, window_bounds = array<i64: 3, 1>}, {transform_indices = @transform_3, window_bounds = array<i64: 3, 128>}]} {
    %c0 = arith.constant 0 : index
    %c0_0 = arith.constant 0 : index
    %0 = vector.load %arg2[%c0, %c0_0] : memref<3x32xf32, #tpu.memory_space<vmem>>, vector<3x32xf32>
    %c0_1 = arith.constant 0 : index
    %c0_2 = arith.constant 0 : index
    %1 = vector.load %arg1[%c0_1, %c0_2] : memref<32x128xf32, #tpu.memory_space<vmem>>, vector<32x128xf32>
    %cst = arith.constant dense<0.000000e+00> : vector<3x128xf32>
    %2 = tpu.matmul %0, %1, %cst {dimension_numbers = #tpu.dot_dimension_numbers<[1], [0], [0], [1], [0, 0, 1, 1], [], []>} : vector<3x32xf32>, vector<32x128xf32>, vector<3x128xf32> -> vector<3x128xf32>
    %c0_3 = arith.constant 0 : index
    %c0_4 = arith.constant 0 : index
    %3 = vector.load %arg3[%c0_3, %c0_4] : memref<3x1xf32, #tpu.memory_space<vmem>>, vector<3x1xf32>
    %4 = vector.broadcast %3 : vector<3x1xf32> to vector<3x128xf32>
    %5 = arith.addf %2, %4 : vector<3x128xf32>
    %c0_5 = arith.constant 0 : index
    %c0_6 = arith.constant 0 : index
    %6 = vector.load %arg4[%c0_5, %c0_6] : memref<3x128xf32, #tpu.memory_space<vmem>>, vector<3x128xf32>
    tpu.vector_store %arg4[%c0_5, %c0_6], %5 {strides = array<i32>} : memref<3x128xf32, #tpu.memory_space<vmem>>, vector<3x128xf32>,
    return
  }
  func.func @transform_0(%arg0: i32) -> (i32, i32) {
    %c0_i32 = arith.constant 0 : i32
    %c0_i32_0 = arith.constant 0 : i32
    return %c0_i32, %arg0 : i32, i32
  }
  func.func @transform_1(%arg0: i32) -> (i32, i32) {
    %c0_i32 = arith.constant 0 : i32
    %c0_i32_0 = arith.constant 0 : i32
    %c0_i32_1 = arith.constant 0 : i32
    return %c0_i32, %c0_i32_0 : i32, i32
  }
  func.func @transform_2(%arg0: i32) -> (i32, i32) {
    %c0_i32 = arith.constant 0 : i32
    %c0_i32_0 = arith.constant 0 : i32
    %c0_i32_1 = arith.constant 0 : i32
    return %c0_i32, %c0_i32_0 : i32, i32
  }
  func.func @transform_3(%arg0: i32) -> (i32, i32) {
    %c0_i32 = arith.constant 0 : i32
    %c0_i32_0 = arith.constant 0 : i32
    return %c0_i32, %arg0 : i32, i32
  }
}

module attributes {stable_mosaic.version = 11 : i64} {
  func.func @_fused_block_kernel(%arg0: i32, %arg1: memref<32x128xf32, #tpu.memory_space<vmem>>, %arg2: memref<64x32xf32, #tpu.memory_space<vmem>>, %arg3: memref<64x1xf32, #tpu.memory_space<vmem>>, %arg4: memref<12x64xf32, #tpu.memory_space<vmem>>, %arg5: memref<12x1xf32, #tpu.memory_space<vmem>>, %arg6: memref<64x128xf32, #tpu.memory_space<vmem>>, %arg7: memref<12x128xf32, #tpu.memory_space<vmem>>) attributes {dimension_semantics = [#tpu.dimension_semantics<parallel>], iteration_bounds = array<i64: 1>, scalar_prefetch = 0 : i64, scratch_operands = 0 : i64, tpu.core_type = #tpu.core_type<tc>, window_params = [{transform_indices = @transform_0, window_bounds = array<i64: 32, 128>}, {pipeline_mode = #tpu.pipeline_mode<synchronous>, transform_indices = @transform_1, window_bounds = array<i64: 64, 32>}, {pipeline_mode = #tpu.pipeline_mode<synchronous>, transform_indices = @transform_2, window_bounds = array<i64: 64, 1>}, {pipeline_mode = #tpu.pipeline_mode<synchronous>, transform_indices = @transform_3, window_bounds = array<i64: 12, 64>}, {pipeline_mode = #tpu.pipeline_mode<synchronous>, transform_indices = @transform_4, window_bounds = array<i64: 12, 1>}, {transform_indices = @transform_5, window_bounds = array<i64: 64, 128>}, {transform_indices = @transform_6, window_bounds = array<i64: 12, 128>}]} {
    %c0 = arith.constant 0 : index
    %c0_0 = arith.constant 0 : index
    %0 = vector.load %arg2[%c0, %c0_0] : memref<64x32xf32, #tpu.memory_space<vmem>>, vector<64x32xf32>
    %c0_1 = arith.constant 0 : index
    %c0_2 = arith.constant 0 : index
    %1 = vector.load %arg1[%c0_1, %c0_2] : memref<32x128xf32, #tpu.memory_space<vmem>>, vector<32x128xf32>
    %cst = arith.constant dense<0.000000e+00> : vector<64x128xf32>
    %2 = tpu.matmul %0, %1, %cst {dimension_numbers = #tpu.dot_dimension_numbers<[1], [0], [0], [1], [0, 0, 1, 1], [], []>} : vector<64x32xf32>, vector<32x128xf32>, vector<64x128xf32> -> vector<64x128xf32>
    %c0_3 = arith.constant 0 : index
    %c0_4 = arith.constant 0 : index
    %3 = vector.load %arg3[%c0_3, %c0_4] : memref<64x1xf32, #tpu.memory_space<vmem>>, vector<64x1xf32>
    %4 = vector.broadcast %3 : vector<64x1xf32> to vector<64x128xf32>
    %5 = arith.addf %2, %4 : vector<64x128xf32>
    %cst_5 = arith.constant 0.000000e+00 : f32
    %6 = vector.broadcast %cst_5 : f32 to vector<64x128xf32>
    %7 = arith.cmpf oge, %5, %6 : vector<64x128xf32>
    %cst_6 = arith.constant 2.000000e-01 : f32
    %8 = vector.broadcast %cst_6 : f32 to vector<64x128xf32>
    %9 = arith.mulf %8, %5 : vector<64x128xf32>
    %10 = arith.select %7, %5, %9 : vector<64x128xi1>, vector<64x128xf32>
    %c0_7 = arith.constant 0 : index
    %c0_8 = arith.constant 0 : index
    %11 = vector.load %arg6[%c0_7, %c0_8] : memref<64x128xf32, #tpu.memory_space<vmem>>, vector<64x128xf32>
    tpu.vector_store %arg6[%c0_7, %c0_8], %10 {strides = array<i32>} : memref<64x128xf32, #tpu.memory_space<vmem>>, vector<64x128xf32>,
    %c0_9 = arith.constant 0 : index
    %c0_10 = arith.constant 0 : index
    %12 = vector.load %arg4[%c0_9, %c0_10] : memref<12x64xf32, #tpu.memory_space<vmem>>, vector<12x64xf32>
    %cst_11 = arith.constant dense<0.000000e+00> : vector<12x128xf32>
    %13 = tpu.matmul %12, %10, %cst_11 {dimension_numbers = #tpu.dot_dimension_numbers<[1], [0], [0], [1], [0, 0, 1, 1], [], []>} : vector<12x64xf32>, vector<64x128xf32>, vector<12x128xf32> -> vector<12x128xf32>
    %c0_12 = arith.constant 0 : index
    %c0_13 = arith.constant 0 : index
    %14 = vector.load %arg5[%c0_12, %c0_13] : memref<12x1xf32, #tpu.memory_space<vmem>>, vector<12x1xf32>
    %15 = vector.broadcast %14 : vector<12x1xf32> to vector<12x128xf32>
    %16 = arith.addf %13, %15 : vector<12x128xf32>
    %c0_14 = arith.constant 0 : index
    %c0_15 = arith.constant 0 : index
    %17 = vector.load %arg7[%c0_14, %c0_15] : memref<12x128xf32, #tpu.memory_space<vmem>>, vector<12x128xf32>
    tpu.vector_store %arg7[%c0_14, %c0_15], %16 {strides = array<i32>} : memref<12x128xf32, #tpu.memory_space<vmem>>, vector<12x128xf32>,
    return
  }
  func.func @transform_0(%arg0: i32) -> (i32, i32) {
    %c0_i32 = arith.constant 0 : i32
    %c0_i32_0 = arith.constant 0 : i32
    return %c0_i32, %arg0 : i32, i32
  }
  func.func @transform_1(%arg0: i32) -> (i32, i32) {
    %c0_i32 = arith.constant 0 : i32
    %c0_i32_0 = arith.constant 0 : i32
    %c0_i32_1 = arith.constant 0 : i32
    return %c0_i32, %c0_i32_0 : i32, i32
  }
  func.func @transform_2(%arg0: i32) -> (i32, i32) {
    %c0_i32 = arith.constant 0 : i32
    %c0_i32_0 = arith.constant 0 : i32
    %c0_i32_1 = arith.constant 0 : i32
    return %c0_i32, %c0_i32_0 : i32, i32
  }
  func.func @transform_3(%arg0: i32) -> (i32, i32) {
    %c0_i32 = arith.constant 0 : i32
    %c0_i32_0 = arith.constant 0 : i32
    %c0_i32_1 = arith.constant 0 : i32
    return %c0_i32, %c0_i32_0 : i32, i32
  }
  func.func @transform_4(%arg0: i32) -> (i32, i32) {
    %c0_i32 = arith.constant 0 : i32
    %c0_i32_0 = arith.constant 0 : i32
    %c0_i32_1 = arith.constant 0 : i32
    return %c0_i32, %c0_i32_0 : i32, i32
  }
  func.func @transform_5(%arg0: i32) -> (i32, i32) {
    %c0_i32 = arith.constant 0 : i32
    %c0_i32_0 = arith.constant 0 : i32
    return %c0_i32, %arg0 : i32, i32
  }
  func.func @transform_6(%arg0: i32) -> (i32, i32) {
    %c0_i32 = arith.constant 0 : i32
    %c0_i32_0 = arith.constant 0 : i32
    return %c0_i32, %arg0 : i32, i32
  }
}

module attributes {stable_mosaic.version = 11 : i64} {
  func.func @_fused_block_kernel(%arg0: i32, %arg1: memref<16x256xf32, #tpu.memory_space<vmem>>, %arg2: memref<32x16xf32, #tpu.memory_space<vmem>>, %arg3: memref<32x1xf32, #tpu.memory_space<vmem>>, %arg4: memref<12x32xf32, #tpu.memory_space<vmem>>, %arg5: memref<12x1xf32, #tpu.memory_space<vmem>>, %arg6: memref<32x256xf32, #tpu.memory_space<vmem>>, %arg7: memref<12x256xf32, #tpu.memory_space<vmem>>) attributes {dimension_semantics = [#tpu.dimension_semantics<parallel>], iteration_bounds = array<i64: 2>, scalar_prefetch = 0 : i64, scratch_operands = 0 : i64, tpu.core_type = #tpu.core_type<tc>, window_params = [{transform_indices = @transform_0, window_bounds = array<i64: 16, 256>}, {pipeline_mode = #tpu.pipeline_mode<synchronous>, transform_indices = @transform_1, window_bounds = array<i64: 32, 16>}, {pipeline_mode = #tpu.pipeline_mode<synchronous>, transform_indices = @transform_2, window_bounds = array<i64: 32, 1>}, {pipeline_mode = #tpu.pipeline_mode<synchronous>, transform_indices = @transform_3, window_bounds = array<i64: 12, 32>}, {pipeline_mode = #tpu.pipeline_mode<synchronous>, transform_indices = @transform_4, window_bounds = array<i64: 12, 1>}, {transform_indices = @transform_5, window_bounds = array<i64: 32, 256>}, {transform_indices = @transform_6, window_bounds = array<i64: 12, 256>}]} {
    %c0 = arith.constant 0 : index
    %c0_0 = arith.constant 0 : index
    %0 = vector.load %arg2[%c0, %c0_0] : memref<32x16xf32, #tpu.memory_space<vmem>>, vector<32x16xf32>
    %c0_1 = arith.constant 0 : index
    %c0_2 = arith.constant 0 : index
    %1 = vector.load %arg1[%c0_1, %c0_2] : memref<16x256xf32, #tpu.memory_space<vmem>>, vector<16x256xf32>
    %cst = arith.constant dense<0.000000e+00> : vector<32x256xf32>
    %2 = tpu.matmul %0, %1, %cst {dimension_numbers = #tpu.dot_dimension_numbers<[1], [0], [0], [1], [0, 0, 1, 1], [], []>} : vector<32x16xf32>, vector<16x256xf32>, vector<32x256xf32> -> vector<32x256xf32>
    %c0_3 = arith.constant 0 : index
    %c0_4 = arith.constant 0 : index
    %3 = vector.load %arg3[%c0_3, %c0_4] : memref<32x1xf32, #tpu.memory_space<vmem>>, vector<32x1xf32>
    %4 = vector.broadcast %3 : vector<32x1xf32> to vector<32x256xf32>
    %5 = arith.addf %2, %4 : vector<32x256xf32>
    %cst_5 = arith.constant 0.000000e+00 : f32
    %6 = vector.broadcast %cst_5 : f32 to vector<32x256xf32>
    %7 = arith.cmpf oge, %5, %6 : vector<32x256xf32>
    %cst_6 = arith.constant 2.000000e-01 : f32
    %8 = vector.broadcast %cst_6 : f32 to vector<32x256xf32>
    %9 = arith.mulf %8, %5 : vector<32x256xf32>
    %10 = arith.select %7, %5, %9 : vector<32x256xi1>, vector<32x256xf32>
    %c0_7 = arith.constant 0 : index
    %c0_8 = arith.constant 0 : index
    %11 = vector.load %arg6[%c0_7, %c0_8] : memref<32x256xf32, #tpu.memory_space<vmem>>, vector<32x256xf32>
    tpu.vector_store %arg6[%c0_7, %c0_8], %10 {strides = array<i32>} : memref<32x256xf32, #tpu.memory_space<vmem>>, vector<32x256xf32>,
    %c0_9 = arith.constant 0 : index
    %c0_10 = arith.constant 0 : index
    %12 = vector.load %arg4[%c0_9, %c0_10] : memref<12x32xf32, #tpu.memory_space<vmem>>, vector<12x32xf32>
    %cst_11 = arith.constant dense<0.000000e+00> : vector<12x256xf32>
    %13 = tpu.matmul %12, %10, %cst_11 {dimension_numbers = #tpu.dot_dimension_numbers<[1], [0], [0], [1], [0, 0, 1, 1], [], []>} : vector<12x32xf32>, vector<32x256xf32>, vector<12x256xf32> -> vector<12x256xf32>
    %c0_12 = arith.constant 0 : index
    %c0_13 = arith.constant 0 : index
    %14 = vector.load %arg5[%c0_12, %c0_13] : memref<12x1xf32, #tpu.memory_space<vmem>>, vector<12x1xf32>
    %15 = vector.broadcast %14 : vector<12x1xf32> to vector<12x256xf32>
    %16 = arith.addf %13, %15 : vector<12x256xf32>
    %c0_14 = arith.constant 0 : index
    %c0_15 = arith.constant 0 : index
    %17 = vector.load %arg7[%c0_14, %c0_15] : memref<12x256xf32, #tpu.memory_space<vmem>>, vector<12x256xf32>
    tpu.vector_store %arg7[%c0_14, %c0_15], %16 {strides = array<i32>} : memref<12x256xf32, #tpu.memory_space<vmem>>, vector<12x256xf32>,
    return
  }
  func.func @transform_0(%arg0: i32) -> (i32, i32) {
    %c0_i32 = arith.constant 0 : i32
    %c0_i32_0 = arith.constant 0 : i32
    return %c0_i32, %arg0 : i32, i32
  }
  func.func @transform_1(%arg0: i32) -> (i32, i32) {
    %c0_i32 = arith.constant 0 : i32
    %c0_i32_0 = arith.constant 0 : i32
    %c0_i32_1 = arith.constant 0 : i32
    return %c0_i32, %c0_i32_0 : i32, i32
  }
  func.func @transform_2(%arg0: i32) -> (i32, i32) {
    %c0_i32 = arith.constant 0 : i32
    %c0_i32_0 = arith.constant 0 : i32
    %c0_i32_1 = arith.constant 0 : i32
    return %c0_i32, %c0_i32_0 : i32, i32
  }
  func.func @transform_3(%arg0: i32) -> (i32, i32) {
    %c0_i32 = arith.constant 0 : i32
    %c0_i32_0 = arith.constant 0 : i32
    %c0_i32_1 = arith.constant 0 : i32
    return %c0_i32, %c0_i32_0 : i32, i32
  }
  func.func @transform_4(%arg0: i32) -> (i32, i32) {
    %c0_i32 = arith.constant 0 : i32
    %c0_i32_0 = arith.constant 0 : i32
    %c0_i32_1 = arith.constant 0 : i32
    return %c0_i32, %c0_i32_0 : i32, i32
  }
  func.func @transform_5(%arg0: i32) -> (i32, i32) {
    %c0_i32 = arith.constant 0 : i32
    %c0_i32_0 = arith.constant 0 : i32
    return %c0_i32, %arg0 : i32, i32
  }
  func.func @transform_6(%arg0: i32) -> (i32, i32) {
    %c0_i32 = arith.constant 0 : i32
    %c0_i32_0 = arith.constant 0 : i32
    return %c0_i32, %arg0 : i32, i32
  }
}

module attributes {stable_mosaic.version = 11 : i64} {
  func.func @_upblur_kernel(%arg0: i32, %arg1: memref<48x16xf32, #tpu.memory_space<vmem>>, %arg2: memref<96x48xf32, #tpu.memory_space<vmem>>, %arg3: memref<16x32xf32, #tpu.memory_space<vmem>>, %arg4: memref<96x32xf32, #tpu.memory_space<vmem>>) attributes {dimension_semantics = [#tpu.dimension_semantics<parallel>], iteration_bounds = array<i64: 2>, scalar_prefetch = 0 : i64, scratch_operands = 0 : i64, tpu.core_type = #tpu.core_type<tc>, window_params = [{transform_indices = @transform_0, window_bounds = array<i64: 48, 16>}, {pipeline_mode = #tpu.pipeline_mode<synchronous>, transform_indices = @transform_1, window_bounds = array<i64: 96, 48>}, {pipeline_mode = #tpu.pipeline_mode<synchronous>, transform_indices = @transform_2, window_bounds = array<i64: 16, 32>}, {transform_indices = @transform_3, window_bounds = array<i64: 96, 32>}]} {
    %c0 = arith.constant 0 : index
    %c0_0 = arith.constant 0 : index
    %0 = vector.load %arg2[%c0, %c0_0] : memref<96x48xf32, #tpu.memory_space<vmem>>, vector<96x48xf32>
    %c0_1 = arith.constant 0 : index
    %c0_2 = arith.constant 0 : index
    %1 = vector.load %arg1[%c0_1, %c0_2] : memref<48x16xf32, #tpu.memory_space<vmem>>, vector<48x16xf32>
    %cst = arith.constant dense<0.000000e+00> : vector<96x16xf32>
    %2 = tpu.matmul %0, %1, %cst {dimension_numbers = #tpu.dot_dimension_numbers<[1], [0], [0], [1], [0, 0, 1, 1], [], []>} : vector<96x48xf32>, vector<48x16xf32>, vector<96x16xf32> -> vector<96x16xf32>
    %c0_3 = arith.constant 0 : index
    %c0_4 = arith.constant 0 : index
    %3 = vector.load %arg3[%c0_3, %c0_4] : memref<16x32xf32, #tpu.memory_space<vmem>>, vector<16x32xf32>
    %cst_5 = arith.constant dense<0.000000e+00> : vector<96x32xf32>
    %4 = tpu.matmul %2, %3, %cst_5 {dimension_numbers = #tpu.dot_dimension_numbers<[1], [0], [0], [1], [0, 0, 1, 1], [], []>} : vector<96x16xf32>, vector<16x32xf32>, vector<96x32xf32> -> vector<96x32xf32>
    %c0_6 = arith.constant 0 : index
    %c0_7 = arith.constant 0 : index
    %5 = vector.load %arg4[%c0_6, %c0_7] : memref<96x32xf32, #tpu.memory_space<vmem>>, vector<96x32xf32>
    tpu.vector_store %arg4[%c0_6, %c0_7], %4 {strides = array<i32>} : memref<96x32xf32, #tpu.memory_space<vmem>>, vector<96x32xf32>,
    return
  }
  func.func @transform_0(%arg0: i32) -> (i32, i32) {
    %c0_i32 = arith.constant 0 : i32
    %c0_i32_0 = arith.constant 0 : i32
    return %arg0, %c0_i32 : i32, i32
  }
  func.func @transform_1(%arg0: i32) -> (i32, i32) {
    %c0_i32 = arith.constant 0 : i32
    %c0_i32_0 = arith.constant 0 : i32
    %c0_i32_1 = arith.constant 0 : i32
    return %c0_i32, %c0_i32_0 : i32, i32
  }
  func.func @transform_2(%arg0: i32) -> (i32, i32) {
    %c0_i32 = arith.constant 0 : i32
    %c0_i32_0 = arith.constant 0 : i32
    %c0_i32_1 = arith.constant 0 : i32
    return %c0_i32, %c0_i32_0 : i32, i32
  }
  func.func @transform_3(%arg0: i32) -> (i32, i32) {
    %c0_i32 = arith.constant 0 : i32
    %c0_i32_0 = arith.constant 0 : i32
    return %arg0, %c0_i32 : i32, i32
  }
}

module attributes {stable_mosaic.version = 11 : i64} {
  func.func @_dwt_multi_kernel(%arg0: i32, %arg1: memref<3x32x32xf32, #tpu.memory_space<vmem>>, %arg2: memref<32x32xf32, #tpu.memory_space<vmem>>, %arg3: memref<32x32xf32, #tpu.memory_space<vmem>>, %arg4: memref<16x16xf32, #tpu.memory_space<vmem>>, %arg5: memref<16x16xf32, #tpu.memory_space<vmem>>, %arg6: memref<8x8xf32, #tpu.memory_space<vmem>>, %arg7: memref<8x8xf32, #tpu.memory_space<vmem>>, %arg8: memref<3x3x16x16xf32, #tpu.memory_space<vmem>>, %arg9: memref<3x3x8x8xf32, #tpu.memory_space<vmem>>, %arg10: memref<3x3x4x4xf32, #tpu.memory_space<vmem>>, %arg11: memref<3x4x4xf32, #tpu.memory_space<vmem>>) attributes {dimension_semantics = [#tpu.dimension_semantics<parallel>], iteration_bounds = array<i64: 2>, scalar_prefetch = 0 : i64, scratch_operands = 0 : i64, tpu.core_type = #tpu.core_type<tc>, window_params = [{transform_indices = @transform_0, window_bounds = array<i64: 3, 32, 32>}, {pipeline_mode = #tpu.pipeline_mode<synchronous>, transform_indices = @transform_1, window_bounds = array<i64: 32, 32>}, {pipeline_mode = #tpu.pipeline_mode<synchronous>, transform_indices = @transform_2, window_bounds = array<i64: 32, 32>}, {pipeline_mode = #tpu.pipeline_mode<synchronous>, transform_indices = @transform_3, window_bounds = array<i64: 16, 16>}, {pipeline_mode = #tpu.pipeline_mode<synchronous>, transform_indices = @transform_4, window_bounds = array<i64: 16, 16>}, {pipeline_mode = #tpu.pipeline_mode<synchronous>, transform_indices = @transform_5, window_bounds = array<i64: 8, 8>}, {pipeline_mode = #tpu.pipeline_mode<synchronous>, transform_indices = @transform_6, window_bounds = array<i64: 8, 8>}, {transform_indices = @transform_7, window_bounds = array<i64: 3, 3, 16, 16>}, {transform_indices = @transform_8, window_bounds = array<i64: 3, 3, 8, 8>}, {transform_indices = @transform_9, window_bounds = array<i64: 3, 3, 4, 4>}, {transform_indices = @transform_10, window_bounds = array<i64: 3, 4, 4>}]} {
    %c0 = arith.constant 0 : index
    %c0_0 = arith.constant 0 : index
    %c0_1 = arith.constant 0 : index
    %0 = vector.load %arg1[%c0, %c0_0, %c0_1] : memref<3x32x32xf32, #tpu.memory_space<vmem>>, vector<1x32x32xf32>
    %1 = vector.shape_cast %0 : vector<1x32x32xf32> to vector<32x32xf32>
    %c0_2 = arith.constant 0 : index
    %c0_3 = arith.constant 0 : index
    %2 = vector.load %arg2[%c0_2, %c0_3] : memref<32x32xf32, #tpu.memory_space<vmem>>, vector<32x32xf32>
    %cst = arith.constant dense<0.000000e+00> : vector<32x32xf32>
    %3 = tpu.matmul %2, %1, %cst {dimension_numbers = #tpu.dot_dimension_numbers<[1], [0], [0], [1], [0, 0, 1, 1], [], []>} : vector<32x32xf32>, vector<32x32xf32>, vector<32x32xf32> -> vector<32x32xf32>
    %c0_4 = arith.constant 0 : index
    %c0_5 = arith.constant 0 : index
    %4 = vector.load %arg3[%c0_4, %c0_5] : memref<32x32xf32, #tpu.memory_space<vmem>>, vector<32x32xf32>
    %cst_6 = arith.constant dense<0.000000e+00> : vector<32x32xf32>
    %5 = tpu.matmul %3, %4, %cst_6 {dimension_numbers = #tpu.dot_dimension_numbers<[1], [0], [0], [1], [0, 0, 1, 1], [], []>} : vector<32x32xf32>, vector<32x32xf32>, vector<32x32xf32> -> vector<32x32xf32>
    %6 = vector.extract_strided_slice %5 {offsets = [0, 16], sizes = [16, 16], strides = [1, 1]} : vector<32x32xf32> to vector<16x16xf32>
    %c0_7 = arith.constant 0 : index
    %c0_8 = arith.constant 0 : index
    %c0_9 = arith.constant 0 : index
    %c0_10 = arith.constant 0 : index
    %7 = vector.load %arg8[%c0_7, %c0_8, %c0_9, %c0_10] : memref<3x3x16x16xf32, #tpu.memory_space<vmem>>, vector<1x1x16x16xf32>
    %8 = vector.shape_cast %7 : vector<1x1x16x16xf32> to vector<16x16xf32>
    %9 = vector.shape_cast %6 : vector<16x16xf32> to vector<1x1x16x16xf32>
    tpu.vector_store %arg8[%c0_7, %c0_8, %c0_9, %c0_10], %9 {strides = array<i32>} : memref<3x3x16x16xf32, #tpu.memory_space<vmem>>, vector<1x1x16x16xf32>,
    %10 = vector.extract_strided_slice %5 {offsets = [16, 0], sizes = [16, 16], strides = [1, 1]} : vector<32x32xf32> to vector<16x16xf32>
    %c0_11 = arith.constant 0 : index
    %c1 = arith.constant 1 : index
    %c0_12 = arith.constant 0 : index
    %c0_13 = arith.constant 0 : index
    %11 = vector.load %arg8[%c0_11, %c1, %c0_12, %c0_13] : memref<3x3x16x16xf32, #tpu.memory_space<vmem>>, vector<1x1x16x16xf32>
    %12 = vector.shape_cast %11 : vector<1x1x16x16xf32> to vector<16x16xf32>
    %13 = vector.shape_cast %10 : vector<16x16xf32> to vector<1x1x16x16xf32>
    tpu.vector_store %arg8[%c0_11, %c1, %c0_12, %c0_13], %13 {strides = array<i32>} : memref<3x3x16x16xf32, #tpu.memory_space<vmem>>, vector<1x1x16x16xf32>,
    %14 = vector.extract_strided_slice %5 {offsets = [16, 16], sizes = [16, 16], strides = [1, 1]} : vector<32x32xf32> to vector<16x16xf32>
    %c0_14 = arith.constant 0 : index
    %c2 = arith.constant 2 : index
    %c0_15 = arith.constant 0 : index
    %c0_16 = arith.constant 0 : index
    %15 = vector.load %arg8[%c0_14, %c2, %c0_15, %c0_16] : memref<3x3x16x16xf32, #tpu.memory_space<vmem>>, vector<1x1x16x16xf32>
    %16 = vector.shape_cast %15 : vector<1x1x16x16xf32> to vector<16x16xf32>
    %17 = vector.shape_cast %14 : vector<16x16xf32> to vector<1x1x16x16xf32>
    tpu.vector_store %arg8[%c0_14, %c2, %c0_15, %c0_16], %17 {strides = array<i32>} : memref<3x3x16x16xf32, #tpu.memory_space<vmem>>, vector<1x1x16x16xf32>,
    %18 = vector.extract_strided_slice %5 {offsets = [0, 0], sizes = [16, 16], strides = [1, 1]} : vector<32x32xf32> to vector<16x16xf32>
    %c0_17 = arith.constant 0 : index
    %c0_18 = arith.constant 0 : index
    %19 = vector.load %arg4[%c0_17, %c0_18] : memref<16x16xf32, #tpu.memory_space<vmem>>, vector<16x16xf32>
    %cst_19 = arith.constant dense<0.000000e+00> : vector<16x16xf32>
    %20 = tpu.matmul %19, %18, %cst_19 {dimension_numbers = #tpu.dot_dimension_numbers<[1], [0], [0], [1], [0, 0, 1, 1], [], []>} : vector<16x16xf32>, vector<16x16xf32>, vector<16x16xf32> -> vector<16x16xf32>
    %c0_20 = arith.constant 0 : index
    %c0_21 = arith.constant 0 : index
    %21 = vector.load %arg5[%c0_20, %c0_21] : memref<16x16xf32, #tpu.memory_space<vmem>>, vector<16x16xf32>
    %cst_22 = arith.constant dense<0.000000e+00> : vector<16x16xf32>
    %22 = tpu.matmul %20, %21, %cst_22 {dimension_numbers = #tpu.dot_dimension_numbers<[1], [0], [0], [1], [0, 0, 1, 1], [], []>} : vector<16x16xf32>, vector<16x16xf32>, vector<16x16xf32> -> vector<16x16xf32>
    %23 = vector.extract_strided_slice %22 {offsets = [0, 8], sizes = [8, 8], strides = [1, 1]} : vector<16x16xf32> to vector<8x8xf32>
    %c0_23 = arith.constant 0 : index
    %c0_24 = arith.constant 0 : index
    %c0_25 = arith.constant 0 : index
    %c0_26 = arith.constant 0 : index
    %24 = vector.load %arg9[%c0_23, %c0_24, %c0_25, %c0_26] : memref<3x3x8x8xf32, #tpu.memory_space<vmem>>, vector<1x1x8x8xf32>
    %25 = vector.shape_cast %24 : vector<1x1x8x8xf32> to vector<8x8xf32>
    %26 = vector.shape_cast %23 : vector<8x8xf32> to vector<1x1x8x8xf32>
    tpu.vector_store %arg9[%c0_23, %c0_24, %c0_25, %c0_26], %26 {strides = array<i32>} : memref<3x3x8x8xf32, #tpu.memory_space<vmem>>, vector<1x1x8x8xf32>,
    %27 = vector.extract_strided_slice %22 {offsets = [8, 0], sizes = [8, 8], strides = [1, 1]} : vector<16x16xf32> to vector<8x8xf32>
    %c0_27 = arith.constant 0 : index
    %c1_28 = arith.constant 1 : index
    %c0_29 = arith.constant 0 : index
    %c0_30 = arith.constant 0 : index
    %28 = vector.load %arg9[%c0_27, %c1_28, %c0_29, %c0_30] : memref<3x3x8x8xf32, #tpu.memory_space<vmem>>, vector<1x1x8x8xf32>
    %29 = vector.shape_cast %28 : vector<1x1x8x8xf32> to vector<8x8xf32>
    %30 = vector.shape_cast %27 : vector<8x8xf32> to vector<1x1x8x8xf32>
    tpu.vector_store %arg9[%c0_27, %c1_28, %c0_29, %c0_30], %30 {strides = array<i32>} : memref<3x3x8x8xf32, #tpu.memory_space<vmem>>, vector<1x1x8x8xf32>,
    %31 = vector.extract_strided_slice %22 {offsets = [8, 8], sizes = [8, 8], strides = [1, 1]} : vector<16x16xf32> to vector<8x8xf32>
    %c0_31 = arith.constant 0 : index
    %c2_32 = arith.constant 2 : index
    %c0_33 = arith.constant 0 : index
    %c0_34 = arith.constant 0 : index
    %32 = vector.load %arg9[%c0_31, %c2_32, %c0_33, %c0_34] : memref<3x3x8x8xf32, #tpu.memory_space<vmem>>, vector<1x1x8x8xf32>
    %33 = vector.shape_cast %32 : vector<1x1x8x8xf32> to vector<8x8xf32>
    %34 = vector.shape_cast %31 : vector<8x8xf32> to vector<1x1x8x8xf32>
    tpu.vector_store %arg9[%c0_31, %c2_32, %c0_33, %c0_34], %34 {strides = array<i32>} : memref<3x3x8x8xf32, #tpu.memory_space<vmem>>, vector<1x1x8x8xf32>,
    %35 = vector.extract_strided_slice %22 {offsets = [0, 0], sizes = [8, 8], strides = [1, 1]} : vector<16x16xf32> to vector<8x8xf32>
    %c0_35 = arith.constant 0 : index
    %c0_36 = arith.constant 0 : index
    %36 = vector.load %arg6[%c0_35, %c0_36] : memref<8x8xf32, #tpu.memory_space<vmem>>, vector<8x8xf32>
    %cst_37 = arith.constant dense<0.000000e+00> : vector<8x8xf32>
    %37 = tpu.matmul %36, %35, %cst_37 {dimension_numbers = #tpu.dot_dimension_numbers<[1], [0], [0], [1], [0, 0, 1, 1], [], []>} : vector<8x8xf32>, vector<8x8xf32>, vector<8x8xf32> -> vector<8x8xf32>
    %c0_38 = arith.constant 0 : index
    %c0_39 = arith.constant 0 : index
    %38 = vector.load %arg7[%c0_38, %c0_39] : memref<8x8xf32, #tpu.memory_space<vmem>>, vector<8x8xf32>
    %cst_40 = arith.constant dense<0.000000e+00> : vector<8x8xf32>
    %39 = tpu.matmul %37, %38, %cst_40 {dimension_numbers = #tpu.dot_dimension_numbers<[1], [0], [0], [1], [0, 0, 1, 1], [], []>} : vector<8x8xf32>, vector<8x8xf32>, vector<8x8xf32> -> vector<8x8xf32>
    %40 = vector.extract_strided_slice %39 {offsets = [0, 4], sizes = [4, 4], strides = [1, 1]} : vector<8x8xf32> to vector<4x4xf32>
    %c0_41 = arith.constant 0 : index
    %c0_42 = arith.constant 0 : index
    %c0_43 = arith.constant 0 : index
    %c0_44 = arith.constant 0 : index
    %41 = vector.load %arg10[%c0_41, %c0_42, %c0_43, %c0_44] : memref<3x3x4x4xf32, #tpu.memory_space<vmem>>, vector<1x1x4x4xf32>
    %42 = vector.shape_cast %41 : vector<1x1x4x4xf32> to vector<4x4xf32>
    %43 = vector.shape_cast %40 : vector<4x4xf32> to vector<1x1x4x4xf32>
    tpu.vector_store %arg10[%c0_41, %c0_42, %c0_43, %c0_44], %43 {strides = array<i32>} : memref<3x3x4x4xf32, #tpu.memory_space<vmem>>, vector<1x1x4x4xf32>,
    %44 = vector.extract_strided_slice %39 {offsets = [4, 0], sizes = [4, 4], strides = [1, 1]} : vector<8x8xf32> to vector<4x4xf32>
    %c0_45 = arith.constant 0 : index
    %c1_46 = arith.constant 1 : index
    %c0_47 = arith.constant 0 : index
    %c0_48 = arith.constant 0 : index
    %45 = vector.load %arg10[%c0_45, %c1_46, %c0_47, %c0_48] : memref<3x3x4x4xf32, #tpu.memory_space<vmem>>, vector<1x1x4x4xf32>
    %46 = vector.shape_cast %45 : vector<1x1x4x4xf32> to vector<4x4xf32>
    %47 = vector.shape_cast %44 : vector<4x4xf32> to vector<1x1x4x4xf32>
    tpu.vector_store %arg10[%c0_45, %c1_46, %c0_47, %c0_48], %47 {strides = array<i32>} : memref<3x3x4x4xf32, #tpu.memory_space<vmem>>, vector<1x1x4x4xf32>,
    %48 = vector.extract_strided_slice %39 {offsets = [4, 4], sizes = [4, 4], strides = [1, 1]} : vector<8x8xf32> to vector<4x4xf32>
    %c0_49 = arith.constant 0 : index
    %c2_50 = arith.constant 2 : index
    %c0_51 = arith.constant 0 : index
    %c0_52 = arith.constant 0 : index
    %49 = vector.load %arg10[%c0_49, %c2_50, %c0_51, %c0_52] : memref<3x3x4x4xf32, #tpu.memory_space<vmem>>, vector<1x1x4x4xf32>
    %50 = vector.shape_cast %49 : vector<1x1x4x4xf32> to vector<4x4xf32>
    %51 = vector.shape_cast %48 : vector<4x4xf32> to vector<1x1x4x4xf32>
    tpu.vector_store %arg10[%c0_49, %c2_50, %c0_51, %c0_52], %51 {strides = array<i32>} : memref<3x3x4x4xf32, #tpu.memory_space<vmem>>, vector<1x1x4x4xf32>,
    %52 = vector.extract_strided_slice %39 {offsets = [0, 0], sizes = [4, 4], strides = [1, 1]} : vector<8x8xf32> to vector<4x4xf32>
    %c0_53 = arith.constant 0 : index
    %c0_54 = arith.constant 0 : index
    %c0_55 = arith.constant 0 : index
    %53 = vector.load %arg11[%c0_53, %c0_54, %c0_55] : memref<3x4x4xf32, #tpu.memory_space<vmem>>, vector<1x4x4xf32>
    %54 = vector.shape_cast %53 : vector<1x4x4xf32> to vector<4x4xf32>
    %55 = vector.shape_cast %52 : vector<4x4xf32> to vector<1x4x4xf32>
    tpu.vector_store %arg11[%c0_53, %c0_54, %c0_55], %55 {strides = array<i32>} : memref<3x4x4xf32, #tpu.memory_space<vmem>>, vector<1x4x4xf32>,
    %c1_56 = arith.constant 1 : index
    %c0_57 = arith.constant 0 : index
    %c0_58 = arith.constant 0 : index
    %56 = vector.load %arg1[%c1_56, %c0_57, %c0_58] : memref<3x32x32xf32, #tpu.memory_space<vmem>>, vector<1x32x32xf32>
    %57 = vector.shape_cast %56 : vector<1x32x32xf32> to vector<32x32xf32>
    %c0_59 = arith.constant 0 : index
    %c0_60 = arith.constant 0 : index
    %58 = vector.load %arg2[%c0_59, %c0_60] : memref<32x32xf32, #tpu.memory_space<vmem>>, vector<32x32xf32>
    %cst_61 = arith.constant dense<0.000000e+00> : vector<32x32xf32>
    %59 = tpu.matmul %58, %57, %cst_61 {dimension_numbers = #tpu.dot_dimension_numbers<[1], [0], [0], [1], [0, 0, 1, 1], [], []>} : vector<32x32xf32>, vector<32x32xf32>, vector<32x32xf32> -> vector<32x32xf32>
    %c0_62 = arith.constant 0 : index
    %c0_63 = arith.constant 0 : index
    %60 = vector.load %arg3[%c0_62, %c0_63] : memref<32x32xf32, #tpu.memory_space<vmem>>, vector<32x32xf32>
    %cst_64 = arith.constant dense<0.000000e+00> : vector<32x32xf32>
    %61 = tpu.matmul %59, %60, %cst_64 {dimension_numbers = #tpu.dot_dimension_numbers<[1], [0], [0], [1], [0, 0, 1, 1], [], []>} : vector<32x32xf32>, vector<32x32xf32>, vector<32x32xf32> -> vector<32x32xf32>
    %62 = vector.extract_strided_slice %61 {offsets = [0, 16], sizes = [16, 16], strides = [1, 1]} : vector<32x32xf32> to vector<16x16xf32>
    %c1_65 = arith.constant 1 : index
    %c0_66 = arith.constant 0 : index
    %c0_67 = arith.constant 0 : index
    %c0_68 = arith.constant 0 : index
    %63 = vector.load %arg8[%c1_65, %c0_66, %c0_67, %c0_68] : memref<3x3x16x16xf32, #tpu.memory_space<vmem>>, vector<1x1x16x16xf32>
    %64 = vector.shape_cast %63 : vector<1x1x16x16xf32> to vector<16x16xf32>
    %65 = vector.shape_cast %62 : vector<16x16xf32> to vector<1x1x16x16xf32>
    tpu.vector_store %arg8[%c1_65, %c0_66, %c0_67, %c0_68], %65 {strides = array<i32>} : memref<3x3x16x16xf32, #tpu.memory_space<vmem>>, vector<1x1x16x16xf32>,
    %66 = vector.extract_strided_slice %61 {offsets = [16, 0], sizes = [16, 16], strides = [1, 1]} : vector<32x32xf32> to vector<16x16xf32>
    %c1_69 = arith.constant 1 : index
    %c1_70 = arith.constant 1 : index
    %c0_71 = arith.constant 0 : index
    %c0_72 = arith.constant 0 : index
    %67 = vector.load %arg8[%c1_69, %c1_70, %c0_71, %c0_72] : memref<3x3x16x16xf32, #tpu.memory_space<vmem>>, vector<1x1x16x16xf32>
    %68 = vector.shape_cast %67 : vector<1x1x16x16xf32> to vector<16x16xf32>
    %69 = vector.shape_cast %66 : vector<16x16xf32> to vector<1x1x16x16xf32>
    tpu.vector_store %arg8[%c1_69, %c1_70, %c0_71, %c0_72], %69 {strides = array<i32>} : memref<3x3x16x16xf32, #tpu.memory_space<vmem>>, vector<1x1x16x16xf32>,
    %70 = vector.extract_strided_slice %61 {offsets = [16, 16], sizes = [16, 16], strides = [1, 1]} : vector<32x32xf32> to vector<16x16xf32>
    %c1_73 = arith.constant 1 : index
    %c2_74 = arith.constant 2 : index
    %c0_75 = arith.constant 0 : index
    %c0_76 = arith.constant 0 : index
    %71 = vector.load %arg8[%c1_73, %c2_74, %c0_75, %c0_76] : memref<3x3x16x16xf32, #tpu.memory_space<vmem>>, vector<1x1x16x16xf32>
    %72 = vector.shape_cast %71 : vector<1x1x16x16xf32> to vector<16x16xf32>
    %73 = vector.shape_cast %70 : vector<16x16xf32> to vector<1x1x16x16xf32>
    tpu.vector_store %arg8[%c1_73, %c2_74, %c0_75, %c0_76], %73 {strides = array<i32>} : memref<3x3x16x16xf32, #tpu.memory_space<vmem>>, vector<1x1x16x16xf32>,
    %74 = vector.extract_strided_slice %61 {offsets = [0, 0], sizes = [16, 16], strides = [1, 1]} : vector<32x32xf32> to vector<16x16xf32>
    %c0_77 = arith.constant 0 : index
    %c0_78 = arith.constant 0 : index
    %75 = vector.load %arg4[%c0_77, %c0_78] : memref<16x16xf32, #tpu.memory_space<vmem>>, vector<16x16xf32>
    %cst_79 = arith.constant dense<0.000000e+00> : vector<16x16xf32>
    %76 = tpu.matmul %75, %74, %cst_79 {dimension_numbers = #tpu.dot_dimension_numbers<[1], [0], [0], [1], [0, 0, 1, 1], [], []>} : vector<16x16xf32>, vector<16x16xf32>, vector<16x16xf32> -> vector<16x16xf32>
    %c0_80 = arith.constant 0 : index
    %c0_81 = arith.constant 0 : index
    %77 = vector.load %arg5[%c0_80, %c0_81] : memref<16x16xf32, #tpu.memory_space<vmem>>, vector<16x16xf32>
    %cst_82 = arith.constant dense<0.000000e+00> : vector<16x16xf32>
    %78 = tpu.matmul %76, %77, %cst_82 {dimension_numbers = #tpu.dot_dimension_numbers<[1], [0], [0], [1], [0, 0, 1, 1], [], []>} : vector<16x16xf32>, vector<16x16xf32>, vector<16x16xf32> -> vector<16x16xf32>
    %79 = vector.extract_strided_slice %78 {offsets = [0, 8], sizes = [8, 8], strides = [1, 1]} : vector<16x16xf32> to vector<8x8xf32>
    %c1_83 = arith.constant 1 : index
    %c0_84 = arith.constant 0 : index
    %c0_85 = arith.constant 0 : index
    %c0_86 = arith.constant 0 : index
    %80 = vector.load %arg9[%c1_83, %c0_84, %c0_85, %c0_86] : memref<3x3x8x8xf32, #tpu.memory_space<vmem>>, vector<1x1x8x8xf32>
    %81 = vector.shape_cast %80 : vector<1x1x8x8xf32> to vector<8x8xf32>
    %82 = vector.shape_cast %79 : vector<8x8xf32> to vector<1x1x8x8xf32>
    tpu.vector_store %arg9[%c1_83, %c0_84, %c0_85, %c0_86], %82 {strides = array<i32>} : memref<3x3x8x8xf32, #tpu.memory_space<vmem>>, vector<1x1x8x8xf32>,
    %83 = vector.extract_strided_slice %78 {offsets = [8, 0], sizes = [8, 8], strides = [1, 1]} : vector<16x16xf32> to vector<8x8xf32>
    %c1_87 = arith.constant 1 : index
    %c1_88 = arith.constant 1 : index
    %c0_89 = arith.constant 0 : index
    %c0_90 = arith.constant 0 : index
    %84 = vector.load %arg9[%c1_87, %c1_88, %c0_89, %c0_90] : memref<3x3x8x8xf32, #tpu.memory_space<vmem>>, vector<1x1x8x8xf32>
    %85 = vector.shape_cast %84 : vector<1x1x8x8xf32> to vector<8x8xf32>
    %86 = vector.shape_cast %83 : vector<8x8xf32> to vector<1x1x8x8xf32>
    tpu.vector_store %arg9[%c1_87, %c1_88, %c0_89, %c0_90], %86 {strides = array<i32>} : memref<3x3x8x8xf32, #tpu.memory_space<vmem>>, vector<1x1x8x8xf32>,
    %87 = vector.extract_strided_slice %78 {offsets = [8, 8], sizes = [8, 8], strides = [1, 1]} : vector<16x16xf32> to vector<8x8xf32>
    %c1_91 = arith.constant 1 : index
    %c2_92 = arith.constant 2 : index
    %c0_93 = arith.constant 0 : index
    %c0_94 = arith.constant 0 : index
    %88 = vector.load %arg9[%c1_91, %c2_92, %c0_93, %c0_94] : memref<3x3x8x8xf32, #tpu.memory_space<vmem>>, vector<1x1x8x8xf32>
    %89 = vector.shape_cast %88 : vector<1x1x8x8xf32> to vector<8x8xf32>
    %90 = vector.shape_cast %87 : vector<8x8xf32> to vector<1x1x8x8xf32>
    tpu.vector_store %arg9[%c1_91, %c2_92, %c0_93, %c0_94], %90 {strides = array<i32>} : memref<3x3x8x8xf32, #tpu.memory_space<vmem>>, vector<1x1x8x8xf32>,
    %91 = vector.extract_strided_slice %78 {offsets = [0, 0], sizes = [8, 8], strides = [1, 1]} : vector<16x16xf32> to vector<8x8xf32>
    %c0_95 = arith.constant 0 : index
    %c0_96 = arith.constant 0 : index
    %92 = vector.load %arg6[%c0_95, %c0_96] : memref<8x8xf32, #tpu.memory_space<vmem>>, vector<8x8xf32>
    %cst_97 = arith.constant dense<0.000000e+00> : vector<8x8xf32>
    %93 = tpu.matmul %92, %91, %cst_97 {dimension_numbers = #tpu.dot_dimension_numbers<[1], [0], [0], [1], [0, 0, 1, 1], [], []>} : vector<8x8xf32>, vector<8x8xf32>, vector<8x8xf32> -> vector<8x8xf32>
    %c0_98 = arith.constant 0 : index
    %c0_99 = arith.constant 0 : index
    %94 = vector.load %arg7[%c0_98, %c0_99] : memref<8x8xf32, #tpu.memory_space<vmem>>, vector<8x8xf32>
    %cst_100 = arith.constant dense<0.000000e+00> : vector<8x8xf32>
    %95 = tpu.matmul %93, %94, %cst_100 {dimension_numbers = #tpu.dot_dimension_numbers<[1], [0], [0], [1], [0, 0, 1, 1], [], []>} : vector<8x8xf32>, vector<8x8xf32>, vector<8x8xf32> -> vector<8x8xf32>
    %96 = vector.extract_strided_slice %95 {offsets = [0, 4], sizes = [4, 4], strides = [1, 1]} : vector<8x8xf32> to vector<4x4xf32>
    %c1_101 = arith.constant 1 : index
    %c0_102 = arith.constant 0 : index
    %c0_103 = arith.constant 0 : index
    %c0_104 = arith.constant 0 : index
    %97 = vector.load %arg10[%c1_101, %c0_102, %c0_103, %c0_104] : memref<3x3x4x4xf32, #tpu.memory_space<vmem>>, vector<1x1x4x4xf32>
    %98 = vector.shape_cast %97 : vector<1x1x4x4xf32> to vector<4x4xf32>
    %99 = vector.shape_cast %96 : vector<4x4xf32> to vector<1x1x4x4xf32>
    tpu.vector_store %arg10[%c1_101, %c0_102, %c0_103, %c0_104], %99 {strides = array<i32>} : memref<3x3x4x4xf32, #tpu.memory_space<vmem>>, vector<1x1x4x4xf32>,
    %100 = vector.extract_strided_slice %95 {offsets = [4, 0], sizes = [4, 4], strides = [1, 1]} : vector<8x8xf32> to vector<4x4xf32>
    %c1_105 = arith.constant 1 : index
    %c1_106 = arith.constant 1 : index
    %c0_107 = arith.constant 0 : index
    %c0_108 = arith.constant 0 : index
    %101 = vector.load %arg10[%c1_105, %c1_106, %c0_107, %c0_108] : memref<3x3x4x4xf32, #tpu.memory_space<vmem>>, vector<1x1x4x4xf32>
    %102 = vector.shape_cast %101 : vector<1x1x4x4xf32> to vector<4x4xf32>
    %103 = vector.shape_cast %100 : vector<4x4xf32> to vector<1x1x4x4xf32>
    tpu.vector_store %arg10[%c1_105, %c1_106, %c0_107, %c0_108], %103 {strides = array<i32>} : memref<3x3x4x4xf32, #tpu.memory_space<vmem>>, vector<1x1x4x4xf32>,
    %104 = vector.extract_strided_slice %95 {offsets = [4, 4], sizes = [4, 4], strides = [1, 1]} : vector<8x8xf32> to vector<4x4xf32>
    %c1_109 = arith.constant 1 : index
    %c2_110 = arith.constant 2 : index
    %c0_111 = arith.constant 0 : index
    %c0_112 = arith.constant 0 : index
    %105 = vector.load %arg10[%c1_109, %c2_110, %c0_111, %c0_112] : memref<3x3x4x4xf32, #tpu.memory_space<vmem>>, vector<1x1x4x4xf32>
    %106 = vector.shape_cast %105 : vector<1x1x4x4xf32> to vector<4x4xf32>
    %107 = vector.shape_cast %104 : vector<4x4xf32> to vector<1x1x4x4xf32>
    tpu.vector_store %arg10[%c1_109, %c2_110, %c0_111, %c0_112], %107 {strides = array<i32>} : memref<3x3x4x4xf32, #tpu.memory_space<vmem>>, vector<1x1x4x4xf32>,
    %108 = vector.extract_strided_slice %95 {offsets = [0, 0], sizes = [4, 4], strides = [1, 1]} : vector<8x8xf32> to vector<4x4xf32>
    %c1_113 = arith.constant 1 : index
    %c0_114 = arith.constant 0 : index
    %c0_115 = arith.constant 0 : index
    %109 = vector.load %arg11[%c1_113, %c0_114, %c0_115] : memref<3x4x4xf32, #tpu.memory_space<vmem>>, vector<1x4x4xf32>
    %110 = vector.shape_cast %109 : vector<1x4x4xf32> to vector<4x4xf32>
    %111 = vector.shape_cast %108 : vector<4x4xf32> to vector<1x4x4xf32>
    tpu.vector_store %arg11[%c1_113, %c0_114, %c0_115], %111 {strides = array<i32>} : memref<3x4x4xf32, #tpu.memory_space<vmem>>, vector<1x4x4xf32>,
    %c2_116 = arith.constant 2 : index
    %c0_117 = arith.constant 0 : index
    %c0_118 = arith.constant 0 : index
    %112 = vector.load %arg1[%c2_116, %c0_117, %c0_118] : memref<3x32x32xf32, #tpu.memory_space<vmem>>, vector<1x32x32xf32>
    %113 = vector.shape_cast %112 : vector<1x32x32xf32> to vector<32x32xf32>
    %c0_119 = arith.constant 0 : index
    %c0_120 = arith.constant 0 : index
    %114 = vector.load %arg2[%c0_119, %c0_120] : memref<32x32xf32, #tpu.memory_space<vmem>>, vector<32x32xf32>
    %cst_121 = arith.constant dense<0.000000e+00> : vector<32x32xf32>
    %115 = tpu.matmul %114, %113, %cst_121 {dimension_numbers = #tpu.dot_dimension_numbers<[1], [0], [0], [1], [0, 0, 1, 1], [], []>} : vector<32x32xf32>, vector<32x32xf32>, vector<32x32xf32> -> vector<32x32xf32>
    %c0_122 = arith.constant 0 : index
    %c0_123 = arith.constant 0 : index
    %116 = vector.load %arg3[%c0_122, %c0_123] : memref<32x32xf32, #tpu.memory_space<vmem>>, vector<32x32xf32>
    %cst_124 = arith.constant dense<0.000000e+00> : vector<32x32xf32>
    %117 = tpu.matmul %115, %116, %cst_124 {dimension_numbers = #tpu.dot_dimension_numbers<[1], [0], [0], [1], [0, 0, 1, 1], [], []>} : vector<32x32xf32>, vector<32x32xf32>, vector<32x32xf32> -> vector<32x32xf32>
    %118 = vector.extract_strided_slice %117 {offsets = [0, 16], sizes = [16, 16], strides = [1, 1]} : vector<32x32xf32> to vector<16x16xf32>
    %c2_125 = arith.constant 2 : index
    %c0_126 = arith.constant 0 : index
    %c0_127 = arith.constant 0 : index
    %c0_128 = arith.constant 0 : index
    %119 = vector.load %arg8[%c2_125, %c0_126, %c0_127, %c0_128] : memref<3x3x16x16xf32, #tpu.memory_space<vmem>>, vector<1x1x16x16xf32>
    %120 = vector.shape_cast %119 : vector<1x1x16x16xf32> to vector<16x16xf32>
    %121 = vector.shape_cast %118 : vector<16x16xf32> to vector<1x1x16x16xf32>
    tpu.vector_store %arg8[%c2_125, %c0_126, %c0_127, %c0_128], %121 {strides = array<i32>} : memref<3x3x16x16xf32, #tpu.memory_space<vmem>>, vector<1x1x16x16xf32>,
    %122 = vector.extract_strided_slice %117 {offsets = [16, 0], sizes = [16, 16], strides = [1, 1]} : vector<32x32xf32> to vector<16x16xf32>
    %c2_129 = arith.constant 2 : index
    %c1_130 = arith.constant 1 : index
    %c0_131 = arith.constant 0 : index
    %c0_132 = arith.constant 0 : index
    %123 = vector.load %arg8[%c2_129, %c1_130, %c0_131, %c0_132] : memref<3x3x16x16xf32, #tpu.memory_space<vmem>>, vector<1x1x16x16xf32>
    %124 = vector.shape_cast %123 : vector<1x1x16x16xf32> to vector<16x16xf32>
    %125 = vector.shape_cast %122 : vector<16x16xf32> to vector<1x1x16x16xf32>
    tpu.vector_store %arg8[%c2_129, %c1_130, %c0_131, %c0_132], %125 {strides = array<i32>} : memref<3x3x16x16xf32, #tpu.memory_space<vmem>>, vector<1x1x16x16xf32>,
    %126 = vector.extract_strided_slice %117 {offsets = [16, 16], sizes = [16, 16], strides = [1, 1]} : vector<32x32xf32> to vector<16x16xf32>
    %c2_133 = arith.constant 2 : index
    %c2_134 = arith.constant 2 : index
    %c0_135 = arith.constant 0 : index
    %c0_136 = arith.constant 0 : index
    %127 = vector.load %arg8[%c2_133, %c2_134, %c0_135, %c0_136] : memref<3x3x16x16xf32, #tpu.memory_space<vmem>>, vector<1x1x16x16xf32>
    %128 = vector.shape_cast %127 : vector<1x1x16x16xf32> to vector<16x16xf32>
    %129 = vector.shape_cast %126 : vector<16x16xf32> to vector<1x1x16x16xf32>
    tpu.vector_store %arg8[%c2_133, %c2_134, %c0_135, %c0_136], %129 {strides = array<i32>} : memref<3x3x16x16xf32, #tpu.memory_space<vmem>>, vector<1x1x16x16xf32>,
    %130 = vector.extract_strided_slice %117 {offsets = [0, 0], sizes = [16, 16], strides = [1, 1]} : vector<32x32xf32> to vector<16x16xf32>
    %c0_137 = arith.constant 0 : index
    %c0_138 = arith.constant 0 : index
    %131 = vector.load %arg4[%c0_137, %c0_138] : memref<16x16xf32, #tpu.memory_space<vmem>>, vector<16x16xf32>
    %cst_139 = arith.constant dense<0.000000e+00> : vector<16x16xf32>
    %132 = tpu.matmul %131, %130, %cst_139 {dimension_numbers = #tpu.dot_dimension_numbers<[1], [0], [0], [1], [0, 0, 1, 1], [], []>} : vector<16x16xf32>, vector<16x16xf32>, vector<16x16xf32> -> vector<16x16xf32>
    %c0_140 = arith.constant 0 : index
    %c0_141 = arith.constant 0 : index
    %133 = vector.load %arg5[%c0_140, %c0_141] : memref<16x16xf32, #tpu.memory_space<vmem>>, vector<16x16xf32>
    %cst_142 = arith.constant dense<0.000000e+00> : vector<16x16xf32>
    %134 = tpu.matmul %132, %133, %cst_142 {dimension_numbers = #tpu.dot_dimension_numbers<[1], [0], [0], [1], [0, 0, 1, 1], [], []>} : vector<16x16xf32>, vector<16x16xf32>, vector<16x16xf32> -> vector<16x16xf32>
    %135 = vector.extract_strided_slice %134 {offsets = [0, 8], sizes = [8, 8], strides = [1, 1]} : vector<16x16xf32> to vector<8x8xf32>
    %c2_143 = arith.constant 2 : index
    %c0_144 = arith.constant 0 : index
    %c0_145 = arith.constant 0 : index
    %c0_146 = arith.constant 0 : index
    %136 = vector.load %arg9[%c2_143, %c0_144, %c0_145, %c0_146] : memref<3x3x8x8xf32, #tpu.memory_space<vmem>>, vector<1x1x8x8xf32>
    %137 = vector.shape_cast %136 : vector<1x1x8x8xf32> to vector<8x8xf32>
    %138 = vector.shape_cast %135 : vector<8x8xf32> to vector<1x1x8x8xf32>
    tpu.vector_store %arg9[%c2_143, %c0_144, %c0_145, %c0_146], %138 {strides = array<i32>} : memref<3x3x8x8xf32, #tpu.memory_space<vmem>>, vector<1x1x8x8xf32>,
    %139 = vector.extract_strided_slice %134 {offsets = [8, 0], sizes = [8, 8], strides = [1, 1]} : vector<16x16xf32> to vector<8x8xf32>
    %c2_147 = arith.constant 2 : index
    %c1_148 = arith.constant 1 : index
    %c0_149 = arith.constant 0 : index
    %c0_150 = arith.constant 0 : index
    %140 = vector.load %arg9[%c2_147, %c1_148, %c0_149, %c0_150] : memref<3x3x8x8xf32, #tpu.memory_space<vmem>>, vector<1x1x8x8xf32>
    %141 = vector.shape_cast %140 : vector<1x1x8x8xf32> to vector<8x8xf32>
    %142 = vector.shape_cast %139 : vector<8x8xf32> to vector<1x1x8x8xf32>
    tpu.vector_store %arg9[%c2_147, %c1_148, %c0_149, %c0_150], %142 {strides = array<i32>} : memref<3x3x8x8xf32, #tpu.memory_space<vmem>>, vector<1x1x8x8xf32>,
    %143 = vector.extract_strided_slice %134 {offsets = [8, 8], sizes = [8, 8], strides = [1, 1]} : vector<16x16xf32> to vector<8x8xf32>
    %c2_151 = arith.constant 2 : index
    %c2_152 = arith.constant 2 : index
    %c0_153 = arith.constant 0 : index
    %c0_154 = arith.constant 0 : index
    %144 = vector.load %arg9[%c2_151, %c2_152, %c0_153, %c0_154] : memref<3x3x8x8xf32, #tpu.memory_space<vmem>>, vector<1x1x8x8xf32>
    %145 = vector.shape_cast %144 : vector<1x1x8x8xf32> to vector<8x8xf32>
    %146 = vector.shape_cast %143 : vector<8x8xf32> to vector<1x1x8x8xf32>
    tpu.vector_store %arg9[%c2_151, %c2_152, %c0_153, %c0_154], %146 {strides = array<i32>} : memref<3x3x8x8xf32, #tpu.memory_space<vmem>>, vector<1x1x8x8xf32>,
    %147 = vector.extract_strided_slice %134 {offsets = [0, 0], sizes = [8, 8], strides = [1, 1]} : vector<16x16xf32> to vector<8x8xf32>
    %c0_155 = arith.constant 0 : index
    %c0_156 = arith.constant 0 : index
    %148 = vector.load %arg6[%c0_155, %c0_156] : memref<8x8xf32, #tpu.memory_space<vmem>>, vector<8x8xf32>
    %cst_157 = arith.constant dense<0.000000e+00> : vector<8x8xf32>
    %149 = tpu.matmul %148, %147, %cst_157 {dimension_numbers = #tpu.dot_dimension_numbers<[1], [0], [0], [1], [0, 0, 1, 1], [], []>} : vector<8x8xf32>, vector<8x8xf32>, vector<8x8xf32> -> vector<8x8xf32>
    %c0_158 = arith.constant 0 : index
    %c0_159 = arith.constant 0 : index
    %150 = vector.load %arg7[%c0_158, %c0_159] : memref<8x8xf32, #tpu.memory_space<vmem>>, vector<8x8xf32>
    %cst_160 = arith.constant dense<0.000000e+00> : vector<8x8xf32>
    %151 = tpu.matmul %149, %150, %cst_160 {dimension_numbers = #tpu.dot_dimension_numbers<[1], [0], [0], [1], [0, 0, 1, 1], [], []>} : vector<8x8xf32>, vector<8x8xf32>, vector<8x8xf32> -> vector<8x8xf32>
    %152 = vector.extract_strided_slice %151 {offsets = [0, 4], sizes = [4, 4], strides = [1, 1]} : vector<8x8xf32> to vector<4x4xf32>
    %c2_161 = arith.constant 2 : index
    %c0_162 = arith.constant 0 : index
    %c0_163 = arith.constant 0 : index
    %c0_164 = arith.constant 0 : index
    %153 = vector.load %arg10[%c2_161, %c0_162, %c0_163, %c0_164] : memref<3x3x4x4xf32, #tpu.memory_space<vmem>>, vector<1x1x4x4xf32>
    %154 = vector.shape_cast %153 : vector<1x1x4x4xf32> to vector<4x4xf32>
    %155 = vector.shape_cast %152 : vector<4x4xf32> to vector<1x1x4x4xf32>
    tpu.vector_store %arg10[%c2_161, %c0_162, %c0_163, %c0_164], %155 {strides = array<i32>} : memref<3x3x4x4xf32, #tpu.memory_space<vmem>>, vector<1x1x4x4xf32>,
    %156 = vector.extract_strided_slice %151 {offsets = [4, 0], sizes = [4, 4], strides = [1, 1]} : vector<8x8xf32> to vector<4x4xf32>
    %c2_165 = arith.constant 2 : index
    %c1_166 = arith.constant 1 : index
    %c0_167 = arith.constant 0 : index
    %c0_168 = arith.constant 0 : index
    %157 = vector.load %arg10[%c2_165, %c1_166, %c0_167, %c0_168] : memref<3x3x4x4xf32, #tpu.memory_space<vmem>>, vector<1x1x4x4xf32>
    %158 = vector.shape_cast %157 : vector<1x1x4x4xf32> to vector<4x4xf32>
    %159 = vector.shape_cast %156 : vector<4x4xf32> to vector<1x1x4x4xf32>
    tpu.vector_store %arg10[%c2_165, %c1_166, %c0_167, %c0_168], %159 {strides = array<i32>} : memref<3x3x4x4xf32, #tpu.memory_space<vmem>>, vector<1x1x4x4xf32>,
    %160 = vector.extract_strided_slice %151 {offsets = [4, 4], sizes = [4, 4], strides = [1, 1]} : vector<8x8xf32> to vector<4x4xf32>
    %c2_169 = arith.constant 2 : index
    %c2_170 = arith.constant 2 : index
    %c0_171 = arith.constant 0 : index
    %c0_172 = arith.constant 0 : index
    %161 = vector.load %arg10[%c2_169, %c2_170, %c0_171, %c0_172] : memref<3x3x4x4xf32, #tpu.memory_space<vmem>>, vector<1x1x4x4xf32>
    %162 = vector.shape_cast %161 : vector<1x1x4x4xf32> to vector<4x4xf32>
    %163 = vector.shape_cast %160 : vector<4x4xf32> to vector<1x1x4x4xf32>
    tpu.vector_store %arg10[%c2_169, %c2_170, %c0_171, %c0_172], %163 {strides = array<i32>} : memref<3x3x4x4xf32, #tpu.memory_space<vmem>>, vector<1x1x4x4xf32>,
    %164 = vector.extract_strided_slice %151 {offsets = [0, 0], sizes = [4, 4], strides = [1, 1]} : vector<8x8xf32> to vector<4x4xf32>
    %c2_173 = arith.constant 2 : index
    %c0_174 = arith.constant 0 : index
    %c0_175 = arith.constant 0 : index
    %165 = vector.load %arg11[%c2_173, %c0_174, %c0_175] : memref<3x4x4xf32, #tpu.memory_space<vmem>>, vector<1x4x4xf32>
    %166 = vector.shape_cast %165 : vector<1x4x4xf32> to vector<4x4xf32>
    %167 = vector.shape_cast %164 : vector<4x4xf32> to vector<1x4x4xf32>
    tpu.vector_store %arg11[%c2_173, %c0_174, %c0_175], %167 {strides = array<i32>} : memref<3x4x4xf32, #tpu.memory_space<vmem>>, vector<1x4x4xf32>,
    return
  }
  func.func @transform_0(%arg0: i32) -> (i32, i32, i32) {
    %c0_i32 = arith.constant 0 : i32
    %c0_i32_0 = arith.constant 0 : i32
    %c0_i32_1 = arith.constant 0 : i32
    return %arg0, %c0_i32, %c0_i32_0 : i32, i32, i32
  }
  func.func @transform_1(%arg0: i32) -> (i32, i32) {
    %c0_i32 = arith.constant 0 : i32
    %c0_i32_0 = arith.constant 0 : i32
    %c0_i32_1 = arith.constant 0 : i32
    return %c0_i32, %c0_i32_0 : i32, i32
  }
  func.func @transform_2(%arg0: i32) -> (i32, i32) {
    %c0_i32 = arith.constant 0 : i32
    %c0_i32_0 = arith.constant 0 : i32
    %c0_i32_1 = arith.constant 0 : i32
    return %c0_i32, %c0_i32_0 : i32, i32
  }
  func.func @transform_3(%arg0: i32) -> (i32, i32) {
    %c0_i32 = arith.constant 0 : i32
    %c0_i32_0 = arith.constant 0 : i32
    %c0_i32_1 = arith.constant 0 : i32
    return %c0_i32, %c0_i32_0 : i32, i32
  }
  func.func @transform_4(%arg0: i32) -> (i32, i32) {
    %c0_i32 = arith.constant 0 : i32
    %c0_i32_0 = arith.constant 0 : i32
    %c0_i32_1 = arith.constant 0 : i32
    return %c0_i32, %c0_i32_0 : i32, i32
  }
  func.func @transform_5(%arg0: i32) -> (i32, i32) {
    %c0_i32 = arith.constant 0 : i32
    %c0_i32_0 = arith.constant 0 : i32
    %c0_i32_1 = arith.constant 0 : i32
    return %c0_i32, %c0_i32_0 : i32, i32
  }
  func.func @transform_6(%arg0: i32) -> (i32, i32) {
    %c0_i32 = arith.constant 0 : i32
    %c0_i32_0 = arith.constant 0 : i32
    %c0_i32_1 = arith.constant 0 : i32
    return %c0_i32, %c0_i32_0 : i32, i32
  }
  func.func @transform_7(%arg0: i32) -> (i32, i32, i32, i32) {
    %c0_i32 = arith.constant 0 : i32
    %c0_i32_0 = arith.constant 0 : i32
    %c0_i32_1 = arith.constant 0 : i32
    %c0_i32_2 = arith.constant 0 : i32
    return %arg0, %c0_i32, %c0_i32_0, %c0_i32_1 : i32, i32, i32, i32
  }
  func.func @transform_8(%arg0: i32) -> (i32, i32, i32, i32) {
    %c0_i32 = arith.constant 0 : i32
    %c0_i32_0 = arith.constant 0 : i32
    %c0_i32_1 = arith.constant 0 : i32
    %c0_i32_2 = arith.constant 0 : i32
    return %arg0, %c0_i32, %c0_i32_0, %c0_i32_1 : i32, i32, i32, i32
  }
  func.func @transform_9(%arg0: i32) -> (i32, i32, i32, i32) {
    %c0_i32 = arith.constant 0 : i32
    %c0_i32_0 = arith.constant 0 : i32
    %c0_i32_1 = arith.constant 0 : i32
    %c0_i32_2 = arith.constant 0 : i32
    return %arg0, %c0_i32, %c0_i32_0, %c0_i32_1 : i32, i32, i32, i32
  }
  func.func @transform_10(%arg0: i32) -> (i32, i32, i32) {
    %c0_i32 = arith.constant 0 : i32
    %c0_i32_0 = arith.constant 0 : i32
    %c0_i32_1 = arith.constant 0 : i32
    return %arg0, %c0_i32, %c0_i32_0 : i32, i32, i32
  }
}

</mosaic_0001>

<llo_original>
// kernel: tile.13
$region0: #{tile.13}
  #allocation2 [shape = 's32[1]{0}', space=sflag, size = 0x4, scoped, tag = 'scoped memory for tile.13']
  %s0 = inlined_call_operand.hbm [shape: f32[3], index: 0, kind: input, shape index: {}]
  %s1 = inlined_call_operand.vmem [shape: f32[4,3], index: 1, kind: output, shape index: {}]
  $region1: #{tile.13} parent=0
    #allocation0 [shape = 'u8[512]{0}', space=vmem, size = 0x400, scoped, tag = 'operand span for operand 0']
    #allocation1 [shape = 's32[1]{0}', space=sflag, size = 0x4, scoped, tag = 'scoped memory for tile.13']
    %2 = vsyncpa [#allocation1], 0
    // Predicated region
    $region2: #{tile.13} parent=1 // pred_check
      _
    $region3: #{tile.13} parent=1 // pred_check_branch
      %4 = sbr.rel (0) target = $region5
    $region4: #{tile.13} parent=1 // pred_region
      %6 = vsyncadd [#allocation1], 0
      %s8 = sshll.u32 %s0, 4
      %s9 = int_to_ptr.hbm [resolvable:$true] %s8
      %s10 = sshll.u32 [#allocation0], 4
      %s11 = int_to_ptr.vmem [resolvable:$true] %s10
      %13 = dma.hbm_to_vmem [thread:$0]  %s9, 16, %s11, [#allocation1]
    $region5: #{tile.13} parent=1 // pred_fallthru
      _
    // Predicated region
    $region6: #{tile.13} parent=1 // pred_check
      _
    $region7: #{tile.13} parent=1 // pred_check_branch
      %15 = sbr.rel (0) target = $region9
    $region8: #{tile.13} parent=1 // pred_region
      %17 = dma.done [#allocation1], 16
    $region9: #{tile.13} parent=1 // pred_fallthru
      _
    %v18 = vld [vmem:[#allocation0] ss:$0 sm:$0xff]
    %19 = vst [vmem:[%s1] sm:$0xf] %v18
    %20 = vsyncpa [#allocation1], 1

// kernel: tile.1
$region0: #{tile.1}
  %s0 = inlined_call_operand.vmem [shape: f32[4,3], index: 0, kind: input, shape index: {}]
  %s1 = inlined_call_operand.vmem [shape: f32[12,1], index: 1, kind: output, shape index: {}]
  $region1: #{tile.1} parent=0
    #allocation0 [shape = 'u8[4096]{0}', space=vmem, size = 0x1000, scoped, tag = 'scoped mem for input reshape']
    %s3 = ssub.s32 16, 1
    %v4 = vld [vmem:[%s0] sm:%s3]
    %5 = vst [vmem:[#allocation0] sm:%s3] %v4
    %v6 = vld [vmem:[#allocation0] sm:$0xf]
    %vm7 = vcmask 7168
    %8 = vst.msk [vmem:[%s1] ss:$3 sm:$0xf] %vm7, %v6
    %v9 = vld [vmem:[#allocation0] sm:$0xf]
    %10 = vrot.lane.b32.xlu0 %v9, 127
    %v11 = vpop.permute.xlu0 %10
    %vm12 = vcmask 7168
    %s13 = scalar_lea.vmem %s1, 1
    %14 = vst.msk [vmem:[%s13] ss:$3 sm:$0xf] %vm12, %v11
    %v15 = vld [vmem:[#allocation0] sm:$0xf]
    %16 = vrot.lane.b32.xlu0 %v15, 126
    %v17 = vpop.permute.xlu0 %16
    %vm18 = vcmask 7168
    %s19 = scalar_lea.vmem %s1, 2
    %20 = vst.msk [vmem:[%s19] ss:$3 sm:$0xf] %vm18, %v17

// kernel: neural_renderer_forward.7
$region0: #{neural_renderer_forward.7}
  #allocation0 [shape = 'u32[]', space=smem, size = 0x4, offset = 0x4, fixed_abs, tag = 'smem constant byte address 0x4 - core index']
  #allocation1 [shape = 'u32[72,128]{1,0:T(1,128)}', space=vmem, size = 0x9000, scoped, tag = 'internal scratch']
  %s0 = inlined_call_operand.vmem [shape: f32[48,8], index: 0, kind: input, shape index: {}]
  %s1 = inlined_call_operand.hbm [shape: f32[48,24], index: 1, kind: input, shape index: {}]
  %s2 = inlined_call_operand.hbm [shape: f32[8,16], index: 2, kind: input, shape index: {}]
  %s3 = inlined_call_operand.vmem [shape: f32[96,16], index: 3, kind: output, shape index: {}]
  %s4 = sld [smem:[#allocation0]]
  $region53: #{neural_renderer_forward.7} parent=0
    _
  %s6 = ssub.s32 1, %s4
  %s7 = scalar_select 0, %s6, %s4
  $region1: #{neural_renderer_forward.7} parent=0
    #allocation2 [shape = 'u8[24576]{0}', space=vmem, size = 0x6000, scoped, tag = 'input window, operand 1, single buffered']
    #allocation3 [shape = 's32[2]{0}', space=sflag, size = 0x8, scoped, tag = 'scoped memory for neural_renderer_forward.7']
    #allocation4 [shape = 'u8[4096]{0}', space=vmem, size = 0x1000, scoped, tag = 'input window, operand 2, single buffered']
    #allocation5 [shape = 's32[1]{0}', space=sflag, size = 0x4, scoped, tag = 'scoped memory for neural_renderer_forward.7']
    %8 = vsyncpa [#allocation3], 0
    %9 = vsyncpa [#allocation5], 0
    loop: start=0, step=1, limit=4
    $region2: #{neural_renderer_forward.7} parent=1 // loop_pre_header
      _
    $region3: #{neural_renderer_forward.7} parent=1 // loop_header
      %s11 = sphi 0, %s15
      %p12 = scmp.ge.s32.totalorder %s11, 4
      %s21 = sphi 0, %s23
      %s24 = sphi 0, %s21
      %s25 = sphi 0, %s24
      %s41 = sphi 0, %s25
      %s45 = sphi 0, %s45
      %s47 = sphi 0, %s45
      %s48 = sphi 0, %s47
      %s62 = sphi 0, %s48
      %s66 = sphi 0, %s66
      %s68 = sphi 0, %s66
      %s69 = sphi 0, %s68
      %s83 = sphi 0, %s69
      %s89 = sphi 0, %s91
      %s92 = sphi 0, %s89
      %s93 = sphi 0, %s92
      %s109 = sphi 0, %s93
    $region4: #{neural_renderer_forward.7} parent=1 // loop_header_branch
      %14 = sbr.rel (%p12) target = $region8
    $region5: #{neural_renderer_forward.7} parent=1 // loop_body
      %s16 = ssub.s32 %s11, 1
      %s17 = ssub.s32 %s11, 2
      %s18 = sadd.s32 %s11, 1
      %s19 = ssub.s32 %s11, %s18
      %p20 = scmp.eq.s32.totalorder %s19, 0
      %s22 = sadd.s32 %s21, 1
      %s23 = scalar_select %p20, %s21, %s22
      %p26 = pneg %p20
      %p27 = scmp.eq.s32.totalorder %s11, 1
      %p28 = por %p26, %p27
      %p29 = scmp.ne.s32.totalorder %s21, %s24
      %p30 = scmp.eq.s32.totalorder %s11, 0
      %p31 = por %p29, %p30
      %p32 = scmp.ne.s32.totalorder %s21, %s24
      %p33 = scmp.eq.s32.totalorder %s16, 1
      %p34 = por %p32, %p33
      %p35 = scmp.ne.s32.totalorder %s24, %s25
      %p36 = scmp.eq.s32.totalorder %s16, 0
      %p37 = por %p35, %p36
      %p38 = scmp.ne.s32.totalorder %s24, %s25
      %p39 = scmp.eq.s32.totalorder %s17, 1
      %p40 = por %p38, %p39
      %p42 = scmp.ne.s32.totalorder %s25, %s41
      %p43 = scmp.eq.s32.totalorder %s17, 0
      %p44 = por %p42, %p43
      %s46 = sadd.s32 %s45, 1
      %p49 = scmp.eq.s32.totalorder %s11, 1
      %p50 = scmp.ne.s32.totalorder %s45, %s47
      %p51 = scmp.eq.s32.totalorder %s11, 0
      %p52 = por %p50, %p51
      %p53 = scmp.ne.s32.totalorder %s45, %s47
      %p54 = scmp.eq.s32.totalorder %s16, 1
      %p55 = por %p53, %p54
      %p56 = scmp.ne.s32.totalorder %s47, %s48
      %p57 = scmp.eq.s32.totalorder %s16, 0
      %p58 = por %p56, %p57
      %p59 = scmp.ne.s32.totalorder %s47, %s48
      %p60 = scmp.eq.s32.totalorder %s17, 1
      %p61 = por %p59, %p60
      %p63 = scmp.ne.s32.totalorder %s48, %s62
      %p64 = scmp.eq.s32.totalorder %s17, 0
      %p65 = por %p63, %p64
      %s67 = sadd.s32 %s66, 1
      %p70 = scmp.eq.s32.totalorder %s11, 1
      %p71 = scmp.ne.s32.totalorder %s66, %s68
      %p72 = scmp.eq.s32.totalorder %s11, 0
      %p73 = por %p71, %p72
      %p74 = scmp.ne.s32.totalorder %s66, %s68
      %p75 = scmp.eq.s32.totalorder %s16, 1
      %p76 = por %p74, %p75
      %p77 = scmp.ne.s32.totalorder %s68, %s69
      %p78 = scmp.eq.s32.totalorder %s16, 0
      %p79 = por %p77, %p78
      %p80 = scmp.ne.s32.totalorder %s68, %s69
      %p81 = scmp.eq.s32.totalorder %s17, 1
      %p82 = por %p80, %p81
      %p84 = scmp.ne.s32.totalorder %s69, %s83
      %p85 = scmp.eq.s32.totalorder %s17, 0
      %p86 = por %p84, %p85
      %s87 = ssub.s32 %s11, %s18
      %p88 = scmp.eq.s32.totalorder %s87, 0
      %s90 = sadd.s32 %s89, 1
      %s91 = scalar_select %p88, %s89, %s90
      %p94 = pneg %p88
      %p95 = scmp.eq.s32.totalorder %s11, 1
      %p96 = por %p94, %p95
      %p97 = scmp.ne.s32.totalorder %s89, %s92
      %p98 = scmp.eq.s32.totalorder %s11, 0
      %p99 = por %p97, %p98
      %p100 = scmp.ne.s32.totalorder %s89, %s92
      %p101 = scmp.eq.s32.totalorder %s16, 1
      %p102 = por %p100, %p101
      %p103 = scmp.ne.s32.totalorder %s92, %s93
      %p104 = scmp.eq.s32.totalorder %s16, 0
      %p105 = por %p103, %p104
      %p106 = scmp.ne.s32.totalorder %s92, %s93
      %p107 = scmp.eq.s32.totalorder %s17, 1
      %p108 = por %p106, %p107
      %p110 = scmp.ne.s32.totalorder %s93, %s109
      %p111 = scmp.eq.s32.totalorder %s17, 0
      %p112 = por %p110, %p111
      %p113 = scmp.le.s32.totalorder 1, %s11
      %p114 = scmp.lt.s32.totalorder %s11, 3
      %p115 = pnand %p113, %p114
      %p116 = pneg %p115
      // Predicated region
      $region9: #{neural_renderer_forward.7} parent=5 // pred_check
        _
      $region10: #{neural_renderer_forward.7} parent=5 // pred_check_branch
        %118 = sbr.rel (%p115) target = $region12
      $region11: #{neural_renderer_forward.7} parent=5 // pred_region
        %s119 = ssub.s32 %s11, 1
        // Predicated region
        $region13: #{neural_renderer_forward.7} parent=11 // pred_check
          %p120 = pneg %p58
        $region14: #{neural_renderer_forward.7} parent=11 // pred_check_branch
          %122 = sbr.rel (%p120) target = $region16
        $region15: #{neural_renderer_forward.7} parent=11 // pred_region
          %124 = vsyncadd [#allocation3], 0
          %s125 = sshll.u32 %s1, 4
          %s126 = int_to_ptr.hbm [resolvable:$true] %s125
          %s127 = sshll.u32 [#allocation2], 4
          %s128 = int_to_ptr.vmem [resolvable:$true] %s127
          %133 = dma.hbm_to_vmem [thread:$0]  %s126, 768, %s128, [#allocation3], 128, 128, 8
        $region16: #{neural_renderer_forward.7} parent=11 // pred_fallthru
          _
        // Predicated region
        $region17: #{neural_renderer_forward.7} parent=11 // pred_check
          %p134 = pneg %p79
        $region18: #{neural_renderer_forward.7} parent=11 // pred_check_branch
          %136 = sbr.rel (%p134) target = $region20
        $region19: #{neural_renderer_forward.7} parent=11 // pred_region
          %138 = vsyncadd [#allocation5], 0
          %s140 = sshll.u32 %s2, 4
          %s141 = int_to_ptr.hbm [resolvable:$true] %s140
          %s142 = sshll.u32 [#allocation4], 4
          %s143 = int_to_ptr.vmem [resolvable:$true] %s142
          %145 = dma.hbm_to_vmem [thread:$0]  %s141, 128, %s143, [#allocation5]
        $region20: #{neural_renderer_forward.7} parent=11 // pred_fallthru
          _
      $region12: #{neural_renderer_forward.7} parent=5 // pred_fallthru
        _
      %p146 = scmp.lt.s32.totalorder %s11, 2
      // Predicated region
      $region21: #{neural_renderer_forward.7} parent=5 // pred_check
        %p147 = pneg %p146
      $region22: #{neural_renderer_forward.7} parent=5 // pred_check_branch
        %149 = sbr.rel (%p147) target = $region24
      $region23: #{neural_renderer_forward.7} parent=5 // pred_region
        // Predicated region
        $region25: #{neural_renderer_forward.7} parent=23 // pred_check
          %p150 = pneg %p31
        $region26: #{neural_renderer_forward.7} parent=23 // pred_check_branch
          %152 = sbr.rel (%p150) target = $region28
        $region27: #{neural_renderer_forward.7} parent=23 // pred_region
          %s153 = smul.u32 3, %s11
          %p154 = scmp.lt.s32.totalorder %s153, 5
          %s155 = scalar_select %p154, %s153, 5
          %s156 = smul.addr %s155, 8
          %s157 = scalar_lea.vmem %s0, %s156
          %s158 = smul.u32 3, %s11
        $region28: #{neural_renderer_forward.7} parent=23 // pred_fallthru
          _
      $region24: #{neural_renderer_forward.7} parent=5 // pred_fallthru
        _
      %p159 = scmp.le.s32.totalorder 1, %s11
      %p160 = scmp.lt.s32.totalorder %s11, 3
      %p161 = pnand %p159, %p160
      %p162 = pneg %p161
      // Predicated region
      $region29: #{neural_renderer_forward.7} parent=5 // pred_check
        _
      $region30: #{neural_renderer_forward.7} parent=5 // pred_check_branch
        %164 = sbr.rel (%p161) target = $region32
      $region31: #{neural_renderer_forward.7} parent=5 // pred_region
        %s165 = ssub.s32 %s11, 1
        // Predicated region
        $region33: #{neural_renderer_forward.7} parent=31 // pred_check
          %p166 = pneg %p58
        $region34: #{neural_renderer_forward.7} parent=31 // pred_check_branch
          %168 = sbr.rel (%p166) target = $region36
        $region35: #{neural_renderer_forward.7} parent=31 // pred_region
          %170 = dma.done [#allocation3], 768
        $region36: #{neural_renderer_forward.7} parent=31 // pred_fallthru
          _
        // Predicated region
        $region37: #{neural_renderer_forward.7} parent=31 // pred_check
          %p171 = pneg %p79
        $region38: #{neural_renderer_forward.7} parent=31 // pred_check_branch
          %173 = sbr.rel (%p171) target = $region40
        $region39: #{neural_renderer_forward.7} parent=31 // pred_region
          %175 = dma.done [#allocation5], 128
        $region40: #{neural_renderer_forward.7} parent=31 // pred_fallthru
          _
        %s176 = smul.u32 3, %s16
        %p177 = scmp.lt.s32.totalorder %s176, 5
        %s178 = scalar_select %p177, %s176, 5
        %s179 = smul.addr %s178, 8
        %s180 = scalar_lea.vmem %s0, %s179
        %p181 = pneg %p37
        %p182 = pneg %p34
        %p183 = pneg %p58
        %p184 = pneg %p55
        %p185 = pneg %p79
        %p186 = pneg %p76
        %p187 = pneg %p105
        %p188 = pneg %p102
        %s189 = smul.u32 6, %s16
        %p190 = scmp.lt.s32.totalorder %s189, 11
        %s191 = scalar_select %p190, %s189, 11
        %s192 = smul.addr %s191, 8
        %s193 = scalar_lea.vmem %s3, %s192
        %s194 = smul.u32 3, %s16
        %p195 = scmp.lt.s32.totalorder %s194, 5
        %s196 = scalar_select %p195, %s194, 5
        %s197 = smul.addr %s196, 8
        %s198 = scalar_lea.vmem %s0, %s197
        %s199 = smul.u32 3, %s16
        %s200 = smul.u32 6, %s16
        %p201 = scmp.lt.s32.totalorder %s200, 11
        %s202 = scalar_select %p201, %s200, 11
        %s203 = smul.addr %s202, 8
        %s204 = scalar_lea.vmem %s3, %s203
        %s205 = smul.u32 6, %s16
        %v206 = vld [vmem:[#allocation2] sm:$0xff]
        %v207 = vld [vmem:[#allocation2 + $0x8] sm:$0xff]
        %v208 = vld [vmem:[#allocation2 + $0x10] sm:$0xff]
        %v209 = vld [vmem:[#allocation2 + $0x18] sm:$0xff]
        %v210 = vld [vmem:[#allocation2 + $0x20] sm:$0xff]
        %v211 = vld [vmem:[#allocation2 + $0x28] sm:$0xff]
        %v212 = vld [vmem:[%s198] sm:$0xff]
        %v213 = vld [vmem:[%s198 + $0x8] sm:$0xff]
        %v214 = vld [vmem:[%s198 + $0x10] sm:$0xff]
        %vm215 = vcmask 195584
        %v217 = vsel %vm215, %v206, 0
        %v220 = vsel %vm215, %v207, 0
        %v223 = vsel %vm215, %v208, 0
        %v226 = vsel %vm215, %v209, 0
        %v229 = vsel %vm215, %v210, 0
        %v232 = vsel %vm215, %v211, 0
        %234 = vmatpush.msra.mxu0 0.0
        %235 = vmatpush.msra.mxu0 0.0
        %236 = vmatpush.msra.mxu0 0.0
        %237 = vmatpush.msra.mxu0 0.0
        %238 = vmatpush.msra.mxu0 0.0
        %239 = vmatpush.msra.mxu0 0.0
        %240 = vmatpush.msra.mxu0 0.0
        %241 = vmatpush.msra.mxu0 0.0
        %242 = vmatpush.msra.mxu0 0.0
        %243 = vmatpush.msra.mxu0 0.0
        %244 = vmatpush.msra.mxu0 0.0
        %245 = vmatpush.msra.mxu0 0.0
        %246 = vmatpush.msra.mxu0 0.0
        %247 = vmatpush.msra.mxu0 %v214
        %248 = vmatpush.msra.mxu0 %v213
        %249 = vmatpush.msra.mxu0 %v212
        %250 = vmatmul.f32.gmra.mxu0 %v217
        %v251 = vpop.f32.mrf.mxu0
        %v252 = vadd.f32 0.0, %v251
        %253 = vmatmul.f32.gmra.mxu0 %v220
        %v254 = vpop.f32.mrf.mxu0
        %v255 = vadd.f32 0.0, %v254
        %256 = vmatmul.f32.gmra.mxu0 %v223
        %v257 = vpop.f32.mrf.mxu0
        %v258 = vadd.f32 0.0, %v257
        %259 = vmatmul.f32.gmra.mxu0 %v226
        %v260 = vpop.f32.mrf.mxu0
        %v261 = vadd.f32 0.0, %v260
        %262 = vmatmul.f32.gmra.mxu0 %v229
        %v263 = vpop.f32.mrf.mxu0
        %v264 = vadd.f32 0.0, %v263
        %265 = vmatmul.f32.gmra.mxu0 %v232
        %v266 = vpop.f32.mrf.mxu0
        %v267 = vadd.f32 0.0, %v266
        %268 = vdwg.mxu0
        %v269 = vld [vmem:[#allocation4] sm:$0xff]
        %vm270 = vcmask 64512
        %v272 = vsel %vm270, %v252, 0
        %v275 = vsel %vm270, %v255, 0
        %v278 = vsel %vm270, %v258, 0
        %v281 = vsel %vm270, %v261, 0
        %v284 = vsel %vm270, %v264, 0
        %v287 = vsel %vm270, %v267, 0
        %289 = vmatpush.msra.mxu0 0.0
        %290 = vmatpush.msra.mxu0 0.0
        %291 = vmatpush.msra.mxu0 0.0
        %292 = vmatpush.msra.mxu0 0.0
        %293 = vmatpush.msra.mxu0 0.0
        %294 = vmatpush.msra.mxu0 0.0
        %295 = vmatpush.msra.mxu0 0.0
        %296 = vmatpush.msra.mxu0 0.0
        %297 = vmatpush.msra.mxu0 0.0
        %298 = vmatpush.msra.mxu0 0.0
        %299 = vmatpush.msra.mxu0 0.0
        %300 = vmatpush.msra.mxu0 0.0
        %301 = vmatpush.msra.mxu0 0.0
        %302 = vmatpush.msra.mxu0 0.0
        %303 = vmatpush.msra.mxu0 0.0
        %304 = vmatpush.msra.mxu0 %v269
        %305 = vmatmul.f32.gmra.mxu0 %v272
        %v306 = vpop.f32.mrf.mxu0
        %v307 = vadd.f32 0.0, %v306
        %308 = vmatmul.f32.gmra.mxu0 %v275
        %v309 = vpop.f32.mrf.mxu0
        %v310 = vadd.f32 0.0, %v309
        %311 = vmatmul.f32.gmra.mxu0 %v278
        %v312 = vpop.f32.mrf.mxu0
        %v313 = vadd.f32 0.0, %v312
        %314 = vmatmul.f32.gmra.mxu0 %v281
        %v315 = vpop.f32.mrf.mxu0
        %v316 = vadd.f32 0.0, %v315
        %317 = vmatmul.f32.gmra.mxu0 %v284
        %v318 = vpop.f32.mrf.mxu0
        %v319 = vadd.f32 0.0, %v318
        %320 = vmatmul.f32.gmra.mxu0 %v287
        %v321 = vpop.f32.mrf.mxu0
        %v322 = vadd.f32 0.0, %v321
        %323 = vdwg.mxu0
        %vm324 = vcmask 130048
        %325 = vst.msk [vmem:[%s204] sm:$0xff] %vm324, %v307
        %326 = vst.msk [vmem:[%s204 + $0x8] sm:$0xff] %vm324, %v310
        %327 = vst.msk [vmem:[%s204 + $0x10] sm:$0xff] %vm324, %v313
        %328 = vst.msk [vmem:[%s204 + $0x18] sm:$0xff] %vm324, %v316
        %329 = vst.msk [vmem:[%s204 + $0x20] sm:$0xff] %vm324, %v319
        %330 = vst.msk [vmem:[%s204 + $0x28] sm:$0xff] %vm324, %v322
        %s331 = smul.u32 6, %s16
        %p332 = scmp.lt.s32.totalorder %s331, 11
        %s333 = scalar_select %p332, %s331, 11
        %s334 = smul.addr %s333, 8
        %s335 = scalar_lea.vmem %s3, %s334
        // Predicated region
        $region41: #{neural_renderer_forward.7} parent=31 // pred_check
          %p336 = pneg %p102
        $region42: #{neural_renderer_forward.7} parent=31 // pred_check_branch
          %338 = sbr.rel (%p336) target = $region44
        $region43: #{neural_renderer_forward.7} parent=31 // pred_region
          %s339 = smul.u32 6, %s16
        $region44: #{neural_renderer_forward.7} parent=31 // pred_fallthru
          _
      $region32: #{neural_renderer_forward.7} parent=5 // pred_fallthru
        _
      %p340 = scmp.le.s32.totalorder 2, %s11
      // Predicated region
      $region45: #{neural_renderer_forward.7} parent=5 // pred_check
        %p341 = pneg %p340
      $region46: #{neural_renderer_forward.7} parent=5 // pred_check_branch
        %343 = sbr.rel (%p341) target = $region48
      $region47: #{neural_renderer_forward.7} parent=5 // pred_region
        %s344 = ssub.s32 %s11, 2
        // Predicated region
        $region49: #{neural_renderer_forward.7} parent=47 // pred_check
          %p345 = pneg %p108
        $region50: #{neural_renderer_forward.7} parent=47 // pred_check_branch
          %347 = sbr.rel (%p345) target = $region52
        $region51: #{neural_renderer_forward.7} parent=47 // pred_region
          %s348 = smul.u32 6, %s17
          %p349 = scmp.lt.s32.totalorder %s348, 11
          %s350 = scalar_select %p349, %s348, 11
          %s351 = smul.addr %s350, 8
          %s352 = scalar_lea.vmem %s3, %s351
        $region52: #{neural_renderer_forward.7} parent=47 // pred_fallthru
          _
      $region48: #{neural_renderer_forward.7} parent=5 // pred_fallthru
        _
    $region6: #{neural_renderer_forward.7} parent=1 // loop_footer
      %s15 = sadd.s32 1, %s11
    $region7: #{neural_renderer_forward.7} parent=1 // loop_footer_branch
      %10 = sbr.rel target = $region3
    $region8: #{neural_renderer_forward.7} parent=1 // loop_exit
      _
    %353 = vsyncpa [#allocation3], 1
    %s354 = scalar_lea.sflag [#allocation3], 1
    %355 = vsyncpa %s354, 1
    %356 = vsyncpa [#allocation5], 1

// kernel: neural_renderer_forward.6
$region0: #{neural_renderer_forward.6}
  #allocation0 [shape = 'u32[]', space=smem, size = 0x4, offset = 0x4, fixed_abs, tag = 'smem constant byte address 0x4 - core index']
  #allocation1 [shape = 'u32[72,128]{1,0:T(1,128)}', space=vmem, size = 0x9000, scoped, tag = 'internal scratch']
  %s0 = inlined_call_operand.vmem [shape: f32[32,128], index: 0, kind: input, shape index: {}]
  %s1 = inlined_call_operand.hbm [shape: f32[3,32], index: 1, kind: input, shape index: {}]
  %s2 = inlined_call_operand.vmem [shape: f32[3,1], index: 2, kind: input, shape index: {}]
  %s3 = inlined_call_operand.vmem [shape: f32[3,128], index: 3, kind: output, shape index: {}]
  %s4 = sld [smem:[#allocation0]]
  $region26: #{neural_renderer_forward.6} parent=0
    _
  %s6 = ssub.s32 1, %s4
  %s7 = scalar_select 0, %s6, %s4
  $region1: #{neural_renderer_forward.6} parent=0
    #allocation2 [shape = 'u8[2048]{0}', space=vmem, size = 0x800, scoped, tag = 'input window, operand 1, single buffered']
    #allocation3 [shape = 's32[1]{0}', space=sflag, size = 0x4, scoped, tag = 'scoped memory for neural_renderer_forward.6']
    %8 = vsyncpa [#allocation3], 0
    // Predicated region
    $region2: #{neural_renderer_forward.6} parent=1 // pred_check
      _
    $region3: #{neural_renderer_forward.6} parent=1 // pred_check_branch
      %10 = sbr.rel (0) target = $region5
    $region4: #{neural_renderer_forward.6} parent=1 // pred_region
      _
    $region5: #{neural_renderer_forward.6} parent=1 // pred_fallthru
      _
    // Predicated region
    $region6: #{neural_renderer_forward.6} parent=1 // pred_check
      _
    $region7: #{neural_renderer_forward.6} parent=1 // pred_check_branch
      %12 = sbr.rel (0) target = $region9
    $region8: #{neural_renderer_forward.6} parent=1 // pred_region
      %14 = vsyncadd [#allocation3], 0
      %s16 = sshll.u32 %s1, 4
      %s17 = int_to_ptr.hbm [resolvable:$true] %s16
      %s18 = sshll.u32 [#allocation2], 4
      %s19 = int_to_ptr.vmem [resolvable:$true] %s18
      %21 = dma.hbm_to_vmem [thread:$0]  %s17, 64, %s19, [#allocation3]
    $region9: #{neural_renderer_forward.6} parent=1 // pred_fallthru
      _
    // Predicated region
    $region10: #{neural_renderer_forward.6} parent=1 // pred_check
      _
    $region11: #{neural_renderer_forward.6} parent=1 // pred_check_branch
      %23 = sbr.rel (0) target = $region13
    $region12: #{neural_renderer_forward.6} parent=1 // pred_region
      _
    $region13: #{neural_renderer_forward.6} parent=1 // pred_fallthru
      _
    // Predicated region
    $region14: #{neural_renderer_forward.6} parent=1 // pred_check
      _
    $region15: #{neural_renderer_forward.6} parent=1 // pred_check_branch
      %25 = sbr.rel (0) target = $region17
    $region16: #{neural_renderer_forward.6} parent=1 // pred_region
      %27 = dma.done [#allocation3], 64
    $region17: #{neural_renderer_forward.6} parent=1 // pred_fallthru
      _
    %v28 = vld [vmem:[#allocation2] sm:$0x7]
    %v29 = vld [vmem:[%s0] sm:$0xff]
    %v30 = vld [vmem:[%s0 + $0x8] sm:$0xff]
    %v31 = vld [vmem:[%s0 + $0x10] sm:$0xff]
    %v32 = vld [vmem:[%s0 + $0x18] sm:$0xff]
    %v33 = vld [vmem:[%s2] sm:$0x7]
    %35 = vset.pattern.permute.xlu0 0
    %36 = vperm.xlu0 %35, %v33
    %v37 = vpop.permute.xlu0 %36
    %vm39 = vcmask 261120
    %v41 = vsel %vm39, %v28, 0
    %43 = vmatpush.msra.mxu0 0.0
    %44 = vmatpush.msra.mxu0 0.0
    %45 = vmatpush.msra.mxu0 0.0
    %46 = vmatpush.msra.mxu0 0.0
    %47 = vmatpush.msra.mxu0 0.0
    %48 = vmatpush.msra.mxu0 0.0
    %49 = vmatpush.msra.mxu0 0.0
    %50 = vmatpush.msra.mxu0 0.0
    %51 = vmatpush.msra.mxu0 0.0
    %52 = vmatpush.msra.mxu0 0.0
    %53 = vmatpush.msra.mxu0 0.0
    %54 = vmatpush.msra.mxu0 0.0
    %55 = vmatpush.msra.mxu0 %v32
    %56 = vmatpush.msra.mxu0 %v31
    %57 = vmatpush.msra.mxu0 %v30
    %58 = vmatpush.msra.mxu0 %v29
    %59 = vmatmul.f32.gmra.mxu0 %v41
    %v60 = vpop.f32.mrf.mxu0
    %v61 = vadd.f32 %v37, %v60
    %62 = vdwg.mxu0
    %63 = vst [vmem:[%s3] sm:$0x7] %v61
    // Predicated region
    $region18: #{neural_renderer_forward.6} parent=1 // pred_check
      _
    $region19: #{neural_renderer_forward.6} parent=1 // pred_check_branch
      %65 = sbr.rel (0) target = $region21
    $region20: #{neural_renderer_forward.6} parent=1 // pred_region
      _
    $region21: #{neural_renderer_forward.6} parent=1 // pred_fallthru
      _
    // Predicated region
    $region22: #{neural_renderer_forward.6} parent=1 // pred_check
      _
    $region23: #{neural_renderer_forward.6} parent=1 // pred_check_branch
      %67 = sbr.rel (0) target = $region25
    $region24: #{neural_renderer_forward.6} parent=1 // pred_region
      _
    $region25: #{neural_renderer_forward.6} parent=1 // pred_fallthru
      _
    %68 = vsyncpa [#allocation3], 1

// kernel: neural_renderer_forward.8
$region0: #{neural_renderer_forward.8}
  #allocation0 [shape = 'u32[]', space=smem, size = 0x4, offset = 0x4, fixed_abs, tag = 'smem constant byte address 0x4 - core index']
  #allocation1 [shape = 'u32[72,128]{1,0:T(1,128)}', space=vmem, size = 0x9000, scoped, tag = 'internal scratch']
  %s0 = inlined_call_operand.vmem [shape: f32[32,128], index: 0, kind: input, shape index: {}]
  %s1 = inlined_call_operand.vmem [shape: f32[64,32], index: 1, kind: input, shape index: {}]
  %s2 = inlined_call_operand.vmem [shape: f32[64,1], index: 2, kind: input, shape index: {}]
  %s3 = inlined_call_operand.vmem [shape: f32[12,64], index: 3, kind: input, shape index: {}]
  %s4 = inlined_call_operand.vmem [shape: f32[12,1], index: 4, kind: input, shape index: {}]
  %s5 = inlined_call_operand.vmem [shape: f32[64,128], index: 5, kind: output, shape index: {0}]
  %s6 = inlined_call_operand.vmem [shape: f32[12,128], index: 6, kind: output, shape index: {1}]
  %7 = xla_tuple %s5, %s6
  %s8 = sld [smem:[#allocation0]]
  $region38: #{neural_renderer_forward.8} parent=0
    _
  %s10 = ssub.s32 1, %s8
  %s11 = scalar_select 0, %s10, %s8
  // Predicated region
  $region2: #{neural_renderer_forward.8} parent=0 // pred_check
    _
  $region3: #{neural_renderer_forward.8} parent=0 // pred_check_branch
    %13 = sbr.rel (0) target = $region5
  $region4: #{neural_renderer_forward.8} parent=0 // pred_region
    _
  $region5: #{neural_renderer_forward.8} parent=0 // pred_fallthru
    _
  // Predicated region
  $region6: #{neural_renderer_forward.8} parent=0 // pred_check
    _
  $region7: #{neural_renderer_forward.8} parent=0 // pred_check_branch
    %15 = sbr.rel (0) target = $region9
  $region8: #{neural_renderer_forward.8} parent=0 // pred_region
    _
  $region9: #{neural_renderer_forward.8} parent=0 // pred_fallthru
    _
  // Predicated region
  $region10: #{neural_renderer_forward.8} parent=0 // pred_check
    _
  $region11: #{neural_renderer_forward.8} parent=0 // pred_check_branch
    %17 = sbr.rel (0) target = $region13
  $region12: #{neural_renderer_forward.8} parent=0 // pred_region
    _
  $region13: #{neural_renderer_forward.8} parent=0 // pred_fallthru
    _
  // Predicated region
  $region14: #{neural_renderer_forward.8} parent=0 // pred_check
    _
  $region15: #{neural_renderer_forward.8} parent=0 // pred_check_branch
    %19 = sbr.rel (0) target = $region17
  $region16: #{neural_renderer_forward.8} parent=0 // pred_region
    _
  $region17: #{neural_renderer_forward.8} parent=0 // pred_fallthru
    _
  // Predicated region
  $region18: #{neural_renderer_forward.8} parent=0 // pred_check
    _
  $region19: #{neural_renderer_forward.8} parent=0 // pred_check_branch
    %21 = sbr.rel (0) target = $region21
  $region20: #{neural_renderer_forward.8} parent=0 // pred_region
    _
  $region21: #{neural_renderer_forward.8} parent=0 // pred_fallthru
    _
  %v22 = vld [vmem:[%s1] sm:$0xff]
  %v23 = vld [vmem:[%s1 + $0x8] sm:$0xff]
  %v24 = vld [vmem:[%s1 + $0x10] sm:$0xff]
  %v25 = vld [vmem:[%s1 + $0x18] sm:$0xff]
  %v26 = vld [vmem:[%s1 + $0x20] sm:$0xff]
  %v27 = vld [vmem:[%s1 + $0x28] sm:$0xff]
  %v28 = vld [vmem:[%s1 + $0x30] sm:$0xff]
  %v29 = vld [vmem:[%s1 + $0x38] sm:$0xff]
  %v30 = vld [vmem:[%s0] sm:$0xff]
  %v31 = vld [vmem:[%s0 + $0x8] sm:$0xff]
  %v32 = vld [vmem:[%s0 + $0x10] sm:$0xff]
  %v33 = vld [vmem:[%s0 + $0x18] sm:$0xff]
  %v34 = vld [vmem:[%s2] sm:$0xff]
  %v35 = vld [vmem:[%s2 + $0x8] sm:$0xff]
  %v36 = vld [vmem:[%s2 + $0x10] sm:$0xff]
  %v37 = vld [vmem:[%s2 + $0x18] sm:$0xff]
  %v38 = vld [vmem:[%s2 + $0x20] sm:$0xff]
  %v39 = vld [vmem:[%s2 + $0x28] sm:$0xff]
  %v40 = vld [vmem:[%s2 + $0x30] sm:$0xff]
  %v41 = vld [vmem:[%s2 + $0x38] sm:$0xff]
  %43 = vset.pattern.permute.xlu0 0
  %44 = vperm.xlu0 %43, %v34
  %v45 = vpop.permute.xlu0 %44
  %48 = vset.pattern.permute.xlu0 0
  %49 = vperm.xlu0 %48, %v35
  %v50 = vpop.permute.xlu0 %49
  %53 = vset.pattern.permute.xlu0 0
  %54 = vperm.xlu0 %53, %v36
  %v55 = vpop.permute.xlu0 %54
  %58 = vset.pattern.permute.xlu0 0
  %59 = vperm.xlu0 %58, %v37
  %v60 = vpop.permute.xlu0 %59
  %63 = vset.pattern.permute.xlu0 0
  %64 = vperm.xlu0 %63, %v38
  %v65 = vpop.permute.xlu0 %64
  %68 = vset.pattern.permute.xlu0 0
  %69 = vperm.xlu0 %68, %v39
  %v70 = vpop.permute.xlu0 %69
  %73 = vset.pattern.permute.xlu0 0
  %74 = vperm.xlu0 %73, %v40
  %v75 = vpop.permute.xlu0 %74
  %78 = vset.pattern.permute.xlu0 0
  %79 = vperm.xlu0 %78, %v41
  %v80 = vpop.permute.xlu0 %79
  %vm82 = vcmask 261120
  %v84 = vsel %vm82, %v22, 0
  %v87 = vsel %vm82, %v23, 0
  %v90 = vsel %vm82, %v24, 0
  %v93 = vsel %vm82, %v25, 0
  %v96 = vsel %vm82, %v26, 0
  %v99 = vsel %vm82, %v27, 0
  %v102 = vsel %vm82, %v28, 0
  %v105 = vsel %vm82, %v29, 0
  %107 = vmatpush.msra.mxu0 0.0
  %108 = vmatpush.msra.mxu0 0.0
  %109 = vmatpush.msra.mxu0 0.0
  %110 = vmatpush.msra.mxu0 0.0
  %111 = vmatpush.msra.mxu0 0.0
  %112 = vmatpush.msra.mxu0 0.0
  %113 = vmatpush.msra.mxu0 0.0
  %114 = vmatpush.msra.mxu0 0.0
  %115 = vmatpush.msra.mxu0 0.0
  %116 = vmatpush.msra.mxu0 0.0
  %117 = vmatpush.msra.mxu0 0.0
  %118 = vmatpush.msra.mxu0 0.0
  %119 = vmatpush.msra.mxu0 %v33
  %120 = vmatpush.msra.mxu0 %v32
  %121 = vmatpush.msra.mxu0 %v31
  %122 = vmatpush.msra.mxu0 %v30
  %123 = vmatmul.f32.gmra.mxu0 %v84
  %v124 = vpop.f32.mrf.mxu0
  %v125 = vadd.f32 %v45, %v124
  %126 = vmatmul.f32.gmra.mxu0 %v87
  %v127 = vpop.f32.mrf.mxu0
  %v128 = vadd.f32 %v50, %v127
  %129 = vmatmul.f32.gmra.mxu0 %v90
  %v130 = vpop.f32.mrf.mxu0
  %v131 = vadd.f32 %v55, %v130
  %132 = vmatmul.f32.gmra.mxu0 %v93
  %v133 = vpop.f32.mrf.mxu0
  %v134 = vadd.f32 %v60, %v133
  %135 = vmatmul.f32.gmra.mxu0 %v96
  %v136 = vpop.f32.mrf.mxu0
  %v137 = vadd.f32 %v65, %v136
  %138 = vmatmul.f32.gmra.mxu0 %v99
  %v139 = vpop.f32.mrf.mxu0
  %v140 = vadd.f32 %v70, %v139
  %141 = vmatmul.f32.gmra.mxu0 %v102
  %v142 = vpop.f32.mrf.mxu0
  %v143 = vadd.f32 %v75, %v142
  %144 = vmatmul.f32.gmra.mxu0 %v105
  %v145 = vpop.f32.mrf.mxu0
  %v146 = vadd.f32 %v80, %v145
  %147 = vdwg.mxu0
  %vm148 = vcmp.ge.f32.partialorder %v125, 0.0
  %vm149 = vcmp.ge.f32.partialorder %v128, 0.0
  %vm150 = vcmp.ge.f32.partialorder %v131, 0.0
  %vm151 = vcmp.ge.f32.partialorder %v134, 0.0
  %vm152 = vcmp.ge.f32.partialorder %v137, 0.0
  %vm153 = vcmp.ge.f32.partialorder %v140, 0.0
  %vm154 = vcmp.ge.f32.partialorder %v143, 0.0
  %vm155 = vcmp.ge.f32.partialorder %v146, 0.0
  %v156 = vmul.f32 %v125, 0.2
  %v157 = vmul.f32 %v128, 0.2
  %v158 = vmul.f32 %v131, 0.2
  %v159 = vmul.f32 %v134, 0.2
  %v160 = vmul.f32 %v137, 0.2
  %v161 = vmul.f32 %v140, 0.2
  %v162 = vmul.f32 %v143, 0.2
  %v163 = vmul.f32 %v146, 0.2
  %v164 = vsel %vm148, %v125, %v156
  %v165 = vsel %vm149, %v128, %v157
  %v166 = vsel %vm150, %v131, %v158
  %v167 = vsel %vm151, %v134, %v159
  %v168 = vsel %vm152, %v137, %v160
  %v169 = vsel %vm153, %v140, %v161
  %v170 = vsel %vm154, %v143, %v162
  %v171 = vsel %vm155, %v146, %v163
  %172 = vst [vmem:[%s5] sm:$0xff] %v164
  %173 = vst [vmem:[%s5 + $0x8] sm:$0xff] %v165
  %174 = vst [vmem:[%s5 + $0x10] sm:$0xff] %v166
  %175 = vst [vmem:[%s5 + $0x18] sm:$0xff] %v167
  %176 = vst [vmem:[%s5 + $0x20] sm:$0xff] %v168
  %177 = vst [vmem:[%s5 + $0x28] sm:$0xff] %v169
  %178 = vst [vmem:[%s5 + $0x30] sm:$0xff] %v170
  %179 = vst [vmem:[%s5 + $0x38] sm:$0xff] %v171
  %v180 = vld [vmem:[%s3] sm:$0xff]
  %v181 = vld [vmem:[%s3 + $0x8] sm:$0xf]
  %v182 = vld [vmem:[%s4] sm:$0xff]
  %v183 = vld [vmem:[%s4 + $0x8] sm:$0xf]
  %185 = vset.pattern.permute.xlu0 0
  %186 = vperm.xlu0 %185, %v182
  %v187 = vpop.permute.xlu0 %186
  %190 = vset.pattern.permute.xlu0 0
  %191 = vperm.xlu0 %190, %v183
  %v192 = vpop.permute.xlu0 %191
  %vm194 = vcmask 523264
  %v196 = vsel %vm194, %v180, 0
  %v199 = vsel %vm194, %v181, 0
  %201 = vmatpush.msra.mxu0 0.0
  %202 = vmatpush.msra.mxu0 0.0
  %203 = vmatpush.msra.mxu0 0.0
  %204 = vmatpush.msra.mxu0 0.0
  %205 = vmatpush.msra.mxu0 0.0
  %206 = vmatpush.msra.mxu0 0.0
  %207 = vmatpush.msra.mxu0 0.0
  %208 = vmatpush.msra.mxu0 0.0
  %209 = vmatpush.msra.mxu0 %v171
  %210 = vmatpush.msra.mxu0 %v170
  %211 = vmatpush.msra.mxu0 %v169
  %212 = vmatpush.msra.mxu0 %v168
  %213 = vmatpush.msra.mxu0 %v167
  %214 = vmatpush.msra.mxu0 %v166
  %215 = vmatpush.msra.mxu0 %v165
  %216 = vmatpush.msra.mxu0 %v164
  %217 = vmatmul.f32.gmra.mxu0 %v196
  %v218 = vpop.f32.mrf.mxu0
  %v219 = vadd.f32 %v187, %v218
  %220 = vmatmul.f32.gmra.mxu0 %v199
  %v221 = vpop.f32.mrf.mxu0
  %v222 = vadd.f32 %v192, %v221
  %223 = vdwg.mxu0
  %224 = vst [vmem:[%s6] sm:$0xff] %v219
  %225 = vst [vmem:[%s6 + $0x8] sm:$0xf] %v222
  // Predicated region
  $region22: #{neural_renderer_forward.8} parent=0 // pred_check
    _
  $region23: #{neural_renderer_forward.8} parent=0 // pred_check_branch
    %227 = sbr.rel (0) target = $region25
  $region24: #{neural_renderer_forward.8} parent=0 // pred_region
    _
  $region25: #{neural_renderer_forward.8} parent=0 // pred_fallthru
    _
  // Predicated region
  $region26: #{neural_renderer_forward.8} parent=0 // pred_check
    _
  $region27: #{neural_renderer_forward.8} parent=0 // pred_check_branch
    %229 = sbr.rel (0) target = $region29
  $region28: #{neural_renderer_forward.8} parent=0 // pred_region
    _
  $region29: #{neural_renderer_forward.8} parent=0 // pred_fallthru
    _
  // Predicated region
  $region30: #{neural_renderer_forward.8} parent=0 // pred_check
    _
  $region31: #{neural_renderer_forward.8} parent=0 // pred_check_branch
    %231 = sbr.rel (0) target = $region33
  $region32: #{neural_renderer_forward.8} parent=0 // pred_region
    _
  $region33: #{neural_renderer_forward.8} parent=0 // pred_fallthru
    _
  // Predicated region
  $region34: #{neural_renderer_forward.8} parent=0 // pred_check
    _
  $region35: #{neural_renderer_forward.8} parent=0 // pred_check_branch
    %233 = sbr.rel (0) target = $region37
  $region36: #{neural_renderer_forward.8} parent=0 // pred_region
    _
  $region37: #{neural_renderer_forward.8} parent=0 // pred_fallthru
    _

// kernel: neural_renderer_forward.10
$region0: #{neural_renderer_forward.10}
  #allocation0 [shape = 'u32[]', space=smem, size = 0x4, offset = 0x4, fixed_abs, tag = 'smem constant byte address 0x4 - core index']
  #allocation1 [shape = 'u32[72,128]{1,0:T(1,128)}', space=vmem, size = 0x9000, scoped, tag = 'internal scratch']
  %s0 = inlined_call_operand.vmem [shape: f32[16,512], index: 0, kind: input, shape index: {}]
  %s1 = inlined_call_operand.vmem [shape: f32[32,16], index: 1, kind: input, shape index: {}]
  %s2 = inlined_call_operand.vmem [shape: f32[32,1], index: 2, kind: input, shape index: {}]
  %s3 = inlined_call_operand.vmem [shape: f32[12,32], index: 3, kind: input, shape index: {}]
  %s4 = inlined_call_operand.vmem [shape: f32[12,1], index: 4, kind: input, shape index: {}]
  %s5 = inlined_call_operand.hbm [shape: f32[32,512], index: 5, kind: output, shape index: {0}]
  %s6 = inlined_call_operand.vmem [shape: f32[12,512], index: 6, kind: output, shape index: {1}]
  %7 = xla_tuple %s5, %s6
  %s8 = sld [smem:[#allocation0]]
  $region103: #{neural_renderer_forward.10} parent=0
    _
  %s10 = ssub.s32 1, %s8
  %s11 = scalar_select 0, %s10, %s8
  $region1: #{neural_renderer_forward.10} parent=0
    #allocation2 [shape = 'u8[32768]{0}', space=vmem, size = 0x8000, scoped, tag = 'input window, operand 0']
    #allocation3 [shape = 'u8[65536]{0}', space=vmem, size = 0x10000, scoped, tag = 'output window, operand 0']
    #allocation4 [shape = 's32[2]{0}', space=sflag, size = 0x8, scoped, tag = 'scoped memory for neural_renderer_forward.10']
    #allocation5 [shape = 'u8[32768]{0}', space=vmem, size = 0x8000, scoped, tag = 'output window, operand 1']
    %12 = vsyncpa [#allocation4], 0
    %s13 = scalar_lea.sflag [#allocation4], 1
    %14 = vsyncpa %s13, 0
    loop: start=0, step=1, limit=4
    $region2: #{neural_renderer_forward.10} parent=1 // loop_pre_header
      _
    $region3: #{neural_renderer_forward.10} parent=1 // loop_header
      %s16 = sphi 0, %s20
      %p17 = scmp.ge.s32.totalorder %s16, 4
      %s26 = sphi 0, %s28
      %s29 = sphi 0, %s26
      %s30 = sphi 0, %s29
      %s46 = sphi 0, %s30
      %s50 = sphi 0, %s50
      %s52 = sphi 0, %s50
      %s53 = sphi 0, %s52
      %s67 = sphi 0, %s53
      %s71 = sphi 0, %s71
      %s73 = sphi 0, %s71
      %s74 = sphi 0, %s73
      %s88 = sphi 0, %s74
      %s92 = sphi 0, %s92
      %s94 = sphi 0, %s92
      %s95 = sphi 0, %s94
      %s109 = sphi 0, %s95
      %s113 = sphi 0, %s113
      %s115 = sphi 0, %s113
      %s116 = sphi 0, %s115
      %s130 = sphi 0, %s116
      %s136 = sphi 0, %s138
      %s139 = sphi 0, %s136
      %s140 = sphi 0, %s139
      %s156 = sphi 0, %s140
      %s162 = sphi 0, %s164
      %s165 = sphi 0, %s162
      %s166 = sphi 0, %s165
      %s182 = sphi 0, %s166
    $region4: #{neural_renderer_forward.10} parent=1 // loop_header_branch
      %19 = sbr.rel (%p17) target = $region8
    $region5: #{neural_renderer_forward.10} parent=1 // loop_body
      %s21 = ssub.s32 %s16, 1
      %s22 = ssub.s32 %s16, 2
      %s23 = sadd.s32 %s16, 1
      %s24 = ssub.s32 %s16, %s23
      %p25 = scmp.eq.s32.totalorder %s24, 0
      %s27 = sadd.s32 %s26, 1
      %s28 = scalar_select %p25, %s26, %s27
      %p31 = pneg %p25
      %p32 = scmp.eq.s32.totalorder %s16, 1
      %p33 = por %p31, %p32
      %p34 = scmp.ne.s32.totalorder %s26, %s29
      %p35 = scmp.eq.s32.totalorder %s16, 0
      %p36 = por %p34, %p35
      %p37 = scmp.ne.s32.totalorder %s26, %s29
      %p38 = scmp.eq.s32.totalorder %s21, 1
      %p39 = por %p37, %p38
      %p40 = scmp.ne.s32.totalorder %s29, %s30
      %p41 = scmp.eq.s32.totalorder %s21, 0
      %p42 = por %p40, %p41
      %p43 = scmp.ne.s32.totalorder %s29, %s30
      %p44 = scmp.eq.s32.totalorder %s22, 1
      %p45 = por %p43, %p44
      %p47 = scmp.ne.s32.totalorder %s30, %s46
      %p48 = scmp.eq.s32.totalorder %s22, 0
      %p49 = por %p47, %p48
      %s51 = sadd.s32 %s50, 1
      %p54 = scmp.eq.s32.totalorder %s16, 1
      %p55 = scmp.ne.s32.totalorder %s50, %s52
      %p56 = scmp.eq.s32.totalorder %s16, 0
      %p57 = por %p55, %p56
      %p58 = scmp.ne.s32.totalorder %s50, %s52
      %p59 = scmp.eq.s32.totalorder %s21, 1
      %p60 = por %p58, %p59
      %p61 = scmp.ne.s32.totalorder %s52, %s53
      %p62 = scmp.eq.s32.totalorder %s21, 0
      %p63 = por %p61, %p62
      %p64 = scmp.ne.s32.totalorder %s52, %s53
      %p65 = scmp.eq.s32.totalorder %s22, 1
      %p66 = por %p64, %p65
      %p68 = scmp.ne.s32.totalorder %s53, %s67
      %p69 = scmp.eq.s32.totalorder %s22, 0
      %p70 = por %p68, %p69
      %s72 = sadd.s32 %s71, 1
      %p75 = scmp.eq.s32.totalorder %s16, 1
      %p76 = scmp.ne.s32.totalorder %s71, %s73
      %p77 = scmp.eq.s32.totalorder %s16, 0
      %p78 = por %p76, %p77
      %p79 = scmp.ne.s32.totalorder %s71, %s73
      %p80 = scmp.eq.s32.totalorder %s21, 1
      %p81 = por %p79, %p80
      %p82 = scmp.ne.s32.totalorder %s73, %s74
      %p83 = scmp.eq.s32.totalorder %s21, 0
      %p84 = por %p82, %p83
      %p85 = scmp.ne.s32.totalorder %s73, %s74
      %p86 = scmp.eq.s32.totalorder %s22, 1
      %p87 = por %p85, %p86
      %p89 = scmp.ne.s32.totalorder %s74, %s88
      %p90 = scmp.eq.s32.totalorder %s22, 0
      %p91 = por %p89, %p90
      %s93 = sadd.s32 %s92, 1
      %p96 = scmp.eq.s32.totalorder %s16, 1
      %p97 = scmp.ne.s32.totalorder %s92, %s94
      %p98 = scmp.eq.s32.totalorder %s16, 0
      %p99 = por %p97, %p98
      %p100 = scmp.ne.s32.totalorder %s92, %s94
      %p101 = scmp.eq.s32.totalorder %s21, 1
      %p102 = por %p100, %p101
      %p103 = scmp.ne.s32.totalorder %s94, %s95
      %p104 = scmp.eq.s32.totalorder %s21, 0
      %p105 = por %p103, %p104
      %p106 = scmp.ne.s32.totalorder %s94, %s95
      %p107 = scmp.eq.s32.totalorder %s22, 1
      %p108 = por %p106, %p107
      %p110 = scmp.ne.s32.totalorder %s95, %s109
      %p111 = scmp.eq.s32.totalorder %s22, 0
      %p112 = por %p110, %p111
      %s114 = sadd.s32 %s113, 1
      %p117 = scmp.eq.s32.totalorder %s16, 1
      %p118 = scmp.ne.s32.totalorder %s113, %s115
      %p119 = scmp.eq.s32.totalorder %s16, 0
      %p120 = por %p118, %p119
      %p121 = scmp.ne.s32.totalorder %s113, %s115
      %p122 = scmp.eq.s32.totalorder %s21, 1
      %p123 = por %p121, %p122
      %p124 = scmp.ne.s32.totalorder %s115, %s116
      %p125 = scmp.eq.s32.totalorder %s21, 0
      %p126 = por %p124, %p125
      %p127 = scmp.ne.s32.totalorder %s115, %s116
      %p128 = scmp.eq.s32.totalorder %s22, 1
      %p129 = por %p127, %p128
      %p131 = scmp.ne.s32.totalorder %s116, %s130
      %p132 = scmp.eq.s32.totalorder %s22, 0
      %p133 = por %p131, %p132
      %s134 = ssub.s32 %s16, %s23
      %p135 = scmp.eq.s32.totalorder %s134, 0
      %s137 = sadd.s32 %s136, 1
      %s138 = scalar_select %p135, %s136, %s137
      %p141 = pneg %p135
      %p142 = scmp.eq.s32.totalorder %s16, 1
      %p143 = por %p141, %p142
      %p144 = scmp.ne.s32.totalorder %s136, %s139
      %p145 = scmp.eq.s32.totalorder %s16, 0
      %p146 = por %p144, %p145
      %p147 = scmp.ne.s32.totalorder %s136, %s139
      %p148 = scmp.eq.s32.totalorder %s21, 1
      %p149 = por %p147, %p148
      %p150 = scmp.ne.s32.totalorder %s139, %s140
      %p151 = scmp.eq.s32.totalorder %s21, 0
      %p152 = por %p150, %p151
      %p153 = scmp.ne.s32.totalorder %s139, %s140
      %p154 = scmp.eq.s32.totalorder %s22, 1
      %p155 = por %p153, %p154
      %p157 = scmp.ne.s32.totalorder %s140, %s156
      %p158 = scmp.eq.s32.totalorder %s22, 0
      %p159 = por %p157, %p158
      %s160 = ssub.s32 %s16, %s23
      %p161 = scmp.eq.s32.totalorder %s160, 0
      %s163 = sadd.s32 %s162, 1
      %s164 = scalar_select %p161, %s162, %s163
      %p167 = pneg %p161
      %p168 = scmp.eq.s32.totalorder %s16, 1
      %p169 = por %p167, %p168
      %p170 = scmp.ne.s32.totalorder %s162, %s165
      %p171 = scmp.eq.s32.totalorder %s16, 0
      %p172 = por %p170, %p171
      %p173 = scmp.ne.s32.totalorder %s162, %s165
      %p174 = scmp.eq.s32.totalorder %s21, 1
      %p175 = por %p173, %p174
      %p176 = scmp.ne.s32.totalorder %s165, %s166
      %p177 = scmp.eq.s32.totalorder %s21, 0
      %p178 = por %p176, %p177
      %p179 = scmp.ne.s32.totalorder %s165, %s166
      %p180 = scmp.eq.s32.totalorder %s22, 1
      %p181 = por %p179, %p180
      %p183 = scmp.ne.s32.totalorder %s166, %s182
      %p184 = scmp.eq.s32.totalorder %s22, 0
      %p185 = por %p183, %p184
      %p186 = scmp.le.s32.totalorder 1, %s16
      %p187 = scmp.lt.s32.totalorder %s16, 3
      %p188 = pnand %p186, %p187
      %p189 = pneg %p188
      // Predicated region
      $region9: #{neural_renderer_forward.10} parent=5 // pred_check
        _
      $region10: #{neural_renderer_forward.10} parent=5 // pred_check_branch
        %191 = sbr.rel (%p188) target = $region12
      $region11: #{neural_renderer_forward.10} parent=5 // pred_region
        %s192 = ssub.s32 %s16, 1
        // Predicated region
        $region13: #{neural_renderer_forward.10} parent=11 // pred_check
          %p193 = pneg %p63
        $region14: #{neural_renderer_forward.10} parent=11 // pred_check_branch
          %195 = sbr.rel (%p193) target = $region16
        $region15: #{neural_renderer_forward.10} parent=11 // pred_region
          _
        $region16: #{neural_renderer_forward.10} parent=11 // pred_fallthru
          _
        // Predicated region
        $region17: #{neural_renderer_forward.10} parent=11 // pred_check
          %p196 = pneg %p84
        $region18: #{neural_renderer_forward.10} parent=11 // pred_check_branch
          %198 = sbr.rel (%p196) target = $region20
        $region19: #{neural_renderer_forward.10} parent=11 // pred_region
          _
        $region20: #{neural_renderer_forward.10} parent=11 // pred_fallthru
          _
        // Predicated region
        $region21: #{neural_renderer_forward.10} parent=11 // pred_check
          %p199 = pneg %p105
        $region22: #{neural_renderer_forward.10} parent=11 // pred_check_branch
          %201 = sbr.rel (%p199) target = $region24
        $region23: #{neural_renderer_forward.10} parent=11 // pred_region
          _
        $region24: #{neural_renderer_forward.10} parent=11 // pred_fallthru
          _
        // Predicated region
        $region25: #{neural_renderer_forward.10} parent=11 // pred_check
          %p202 = pneg %p126
        $region26: #{neural_renderer_forward.10} parent=11 // pred_check_branch
          %204 = sbr.rel (%p202) target = $region28
        $region27: #{neural_renderer_forward.10} parent=11 // pred_region
          _
        $region28: #{neural_renderer_forward.10} parent=11 // pred_fallthru
          _
      $region12: #{neural_renderer_forward.10} parent=5 // pred_fallthru
        _
      %p205 = scmp.lt.s32.totalorder %s16, 2
      // Predicated region
      $region29: #{neural_renderer_forward.10} parent=5 // pred_check
        %p206 = pneg %p205
      $region30: #{neural_renderer_forward.10} parent=5 // pred_check_branch
        %208 = sbr.rel (%p206) target = $region32
      $region31: #{neural_renderer_forward.10} parent=5 // pred_region
        // Predicated region
        $region33: #{neural_renderer_forward.10} parent=31 // pred_check
          %p209 = pneg %p36
        $region34: #{neural_renderer_forward.10} parent=31 // pred_check_branch
          %211 = sbr.rel (%p209) target = $region36
        $region35: #{neural_renderer_forward.10} parent=31 // pred_region
          %s212 = sand.u32 %s26, 1
          %s213 = sand.u32 %s26, 1
          %s214 = smul.addr %s213, 32
          %s215 = scalar_lea.vmem [#allocation2], %s214
          %s216 = smul.u32 2, %s16
          %s217 = smul.addr %s216, 8
          %s218 = scalar_lea.vmem %s0, %s217
          // Predicated region
          $region37: #{neural_renderer_forward.10} parent=35 // pred_check
            _
          $region38: #{neural_renderer_forward.10} parent=35 // pred_check_branch
            %220 = sbr.rel (0) target = $region40
          $region39: #{neural_renderer_forward.10} parent=35 // pred_region
            // Predicated region
            $region41: #{neural_renderer_forward.10} parent=39 // pred_check
              _
            $region42: #{neural_renderer_forward.10} parent=39 // pred_check_branch
              %222 = sbr.rel (0) target = $region44
            $region43: #{neural_renderer_forward.10} parent=39 // pred_region
              loop: start=0, step=1, limit=1
              $region45: #{neural_renderer_forward.10} parent=43 // loop_pre_header
                _
              $region46: #{neural_renderer_forward.10} parent=43 // loop_header
                %s224 = sphi 0, %s228
                %p225 = scmp.ge.s32.totalorder %s224, 1
                %s229 = sphi %s218, %s218
                %s230 = sphi %s215, %s215
              $region47: #{neural_renderer_forward.10} parent=43 // loop_header_branch
                %227 = sbr.rel (%p225) target = $region51
              $region48: #{neural_renderer_forward.10} parent=43 // loop_body
                %v231 = vld [vmem:[%s229] sm:$0xff]
                %232 = vst [vmem:[%s230] sm:$0xff] %v231
                %v233 = vld [vmem:[%s229 + $0x8] sm:$0xff]
                %234 = vst [vmem:[%s230 + $0x8] sm:$0xff] %v233
                %v235 = vld [vmem:[%s229 + $0x20] sm:$0xff]
                %236 = vst [vmem:[%s230 + $0x10] sm:$0xff] %v235
                %v237 = vld [vmem:[%s229 + $0x28] sm:$0xff]
                %238 = vst [vmem:[%s230 + $0x18] sm:$0xff] %v237
              $region49: #{neural_renderer_forward.10} parent=43 // loop_footer
                %s228 = sadd.s32 1, %s224
              $region50: #{neural_renderer_forward.10} parent=43 // loop_footer_branch
                %223 = sbr.rel target = $region46
              $region51: #{neural_renderer_forward.10} parent=43 // loop_exit
                _
            $region44: #{neural_renderer_forward.10} parent=39 // pred_fallthru
              _
            // Predicated region
            $region52: #{neural_renderer_forward.10} parent=39 // pred_check
              _
            $region53: #{neural_renderer_forward.10} parent=39 // pred_check_branch
              %240 = sbr.rel target = $region55
            $region54: #{neural_renderer_forward.10} parent=39 // pred_region
              _
            $region55: #{neural_renderer_forward.10} parent=39 // pred_fallthru
              _
          $region40: #{neural_renderer_forward.10} parent=35 // pred_fallthru
            _
          %241 = vnop
        $region36: #{neural_renderer_forward.10} parent=31 // pred_fallthru
          _
      $region32: #{neural_renderer_forward.10} parent=5 // pred_fallthru
        _
      %p242 = scmp.le.s32.totalorder 1, %s16
      %p243 = scmp.lt.s32.totalorder %s16, 3
      %p244 = pnand %p242, %p243
      %p245 = pneg %p244
      // Predicated region
      $region56: #{neural_renderer_forward.10} parent=5 // pred_check
        _
      $region57: #{neural_renderer_forward.10} parent=5 // pred_check_branch
        %247 = sbr.rel (%p244) target = $region59
      $region58: #{neural_renderer_forward.10} parent=5 // pred_region
        %s248 = ssub.s32 %s16, 1
        %s249 = sand.u32 %s29, 1
        %s250 = sand.u32 %s29, 1
        %s251 = smul.addr %s250, 32
        %s252 = scalar_lea.vmem [#allocation2], %s251
        // Predicated region
        $region60: #{neural_renderer_forward.10} parent=58 // pred_check
          %p253 = pneg %p42
        $region61: #{neural_renderer_forward.10} parent=58 // pred_check_branch
          %255 = sbr.rel (%p253) target = $region63
        $region62: #{neural_renderer_forward.10} parent=58 // pred_region
          _
        $region63: #{neural_renderer_forward.10} parent=58 // pred_fallthru
          _
        %s256 = sand.u32 %s29, 1
        %s257 = sand.u32 %s29, 1
        %s258 = smul.addr %s257, 32
        %s259 = scalar_lea.vmem [#allocation2], %s258
        %p260 = pneg %p42
        %p261 = pneg %p39
        %p262 = pneg %p63
        %p263 = pneg %p60
        %p264 = pneg %p84
        %p265 = pneg %p81
        %p266 = pneg %p105
        %p267 = pneg %p102
        %p268 = pneg %p126
        %p269 = pneg %p123
        %p270 = pneg %p152
        %p271 = pneg %p149
        %s272 = sand.u32 %s139, 1
        %s273 = scalar_lea.sflag [#allocation4], %s272
        %s274 = sand.u32 %s139, 1
        %s275 = smul.addr %s274, 64
        %s276 = scalar_lea.vmem [#allocation3], %s275
        %p277 = pneg %p178
        %p278 = pneg %p175
        %s279 = sand.u32 %s165, 1
        %s280 = sand.u32 %s165, 1
        %s281 = smul.addr %s280, 32
        %s282 = scalar_lea.vmem [#allocation5], %s281
        %s283 = smul.u32 2, %s21
        %s284 = smul.u32 2, %s21
        %s285 = smul.u32 2, %s21
        %v286 = vld [vmem:[%s1] sm:$0xff]
        %v287 = vld [vmem:[%s1 + $0x8] sm:$0xff]
        %v288 = vld [vmem:[%s1 + $0x10] sm:$0xff]
        %v289 = vld [vmem:[%s1 + $0x18] sm:$0xff]
        %v290 = vld [vmem:[%s252] sm:$0xff]
        %v291 = vld [vmem:[%s252 + $0x8] sm:$0xff]
        %v292 = vld [vmem:[%s252 + $0x10] sm:$0xff]
        %v293 = vld [vmem:[%s252 + $0x18] sm:$0xff]
        %v294 = vld [vmem:[%s2] sm:$0xff]
        %v295 = vld [vmem:[%s2 + $0x8] sm:$0xff]
        %v296 = vld [vmem:[%s2 + $0x10] sm:$0xff]
        %v297 = vld [vmem:[%s2 + $0x18] sm:$0xff]
        %299 = vset.pattern.permute.xlu0 0
        %300 = vperm.xlu0 %299, %v294
        %v301 = vpop.permute.xlu0 %300
        %304 = vset.pattern.permute.xlu0 0
        %305 = vperm.xlu0 %304, %v295
        %v306 = vpop.permute.xlu0 %305
        %309 = vset.pattern.permute.xlu0 0
        %310 = vperm.xlu0 %309, %v296
        %v311 = vpop.permute.xlu0 %310
        %314 = vset.pattern.permute.xlu0 0
        %315 = vperm.xlu0 %314, %v297
        %v316 = vpop.permute.xlu0 %315
        %vm318 = vcmask 130048
        %v320 = vsel %vm318, %v286, 0
        %v323 = vsel %vm318, %v287, 0
        %v326 = vsel %vm318, %v288, 0
        %v329 = vsel %vm318, %v289, 0
        %331 = vmatpush.msra.mxu0 0.0
        %332 = vmatpush.msra.mxu0 0.0
        %333 = vmatpush.msra.mxu0 0.0
        %334 = vmatpush.msra.mxu0 0.0
        %335 = vmatpush.msra.mxu0 0.0
        %336 = vmatpush.msra.mxu0 0.0
        %337 = vmatpush.msra.mxu0 0.0
        %338 = vmatpush.msra.mxu0 0.0
        %339 = vmatpush.msra.mxu0 0.0
        %340 = vmatpush.msra.mxu0 0.0
        %341 = vmatpush.msra.mxu0 0.0
        %342 = vmatpush.msra.mxu0 0.0
        %343 = vmatpush.msra.mxu0 0.0
        %344 = vmatpush.msra.mxu0 0.0
        %345 = vmatpush.msra.mxu0 %v292
        %346 = vmatpush.msra.mxu0 %v290
        %347 = vmatmul.f32.gmra.mxu0 %v320
        %v348 = vpop.f32.mrf.mxu0
        %v349 = vadd.f32 %v301, %v348
        %350 = vmatmul.f32.gmra.mxu0 %v323
        %v351 = vpop.f32.mrf.mxu0
        %v352 = vadd.f32 %v306, %v351
        %353 = vmatmul.f32.gmra.mxu0 %v326
        %v354 = vpop.f32.mrf.mxu0
        %v355 = vadd.f32 %v311, %v354
        %356 = vmatmul.f32.gmra.mxu0 %v329
        %v357 = vpop.f32.mrf.mxu0
        %v358 = vadd.f32 %v316, %v357
        %359 = vdwg.mxu0
        %360 = vmatpush.msra.mxu0 0.0
        %361 = vmatpush.msra.mxu0 0.0
        %362 = vmatpush.msra.mxu0 0.0
        %363 = vmatpush.msra.mxu0 0.0
        %364 = vmatpush.msra.mxu0 0.0
        %365 = vmatpush.msra.mxu0 0.0
        %366 = vmatpush.msra.mxu0 0.0
        %367 = vmatpush.msra.mxu0 0.0
        %368 = vmatpush.msra.mxu0 0.0
        %369 = vmatpush.msra.mxu0 0.0
        %370 = vmatpush.msra.mxu0 0.0
        %371 = vmatpush.msra.mxu0 0.0
        %372 = vmatpush.msra.mxu0 0.0
        %373 = vmatpush.msra.mxu0 0.0
        %374 = vmatpush.msra.mxu0 %v293
        %375 = vmatpush.msra.mxu0 %v291
        %376 = vmatmul.f32.gmra.mxu0 %v320
        %v377 = vpop.f32.mrf.mxu0
        %v378 = vadd.f32 %v301, %v377
        %379 = vmatmul.f32.gmra.mxu0 %v323
        %v380 = vpop.f32.mrf.mxu0
        %v381 = vadd.f32 %v306, %v380
        %382 = vmatmul.f32.gmra.mxu0 %v326
        %v383 = vpop.f32.mrf.mxu0
        %v384 = vadd.f32 %v311, %v383
        %385 = vmatmul.f32.gmra.mxu0 %v329
        %v386 = vpop.f32.mrf.mxu0
        %v387 = vadd.f32 %v316, %v386
        %388 = vdwg.mxu0
        %vm389 = vcmp.ge.f32.partialorder %v349, 0.0
        %vm390 = vcmp.ge.f32.partialorder %v378, 0.0
        %vm391 = vcmp.ge.f32.partialorder %v352, 0.0
        %vm392 = vcmp.ge.f32.partialorder %v381, 0.0
        %vm393 = vcmp.ge.f32.partialorder %v355, 0.0
        %vm394 = vcmp.ge.f32.partialorder %v384, 0.0
        %vm395 = vcmp.ge.f32.partialorder %v358, 0.0
        %vm396 = vcmp.ge.f32.partialorder %v387, 0.0
        %v397 = vmul.f32 %v349, 0.2
        %v398 = vmul.f32 %v378, 0.2
        %v399 = vmul.f32 %v352, 0.2
        %v400 = vmul.f32 %v381, 0.2
        %v401 = vmul.f32 %v355, 0.2
        %v402 = vmul.f32 %v384, 0.2
        %v403 = vmul.f32 %v358, 0.2
        %v404 = vmul.f32 %v387, 0.2
        %v405 = vsel %vm389, %v349, %v397
        %v406 = vsel %vm390, %v378, %v398
        %v407 = vsel %vm391, %v352, %v399
        %v408 = vsel %vm392, %v381, %v400
        %v409 = vsel %vm393, %v355, %v401
        %v410 = vsel %vm394, %v384, %v402
        %v411 = vsel %vm395, %v358, %v403
        %v412 = vsel %vm396, %v387, %v404
        %413 = vst [vmem:[%s276] sm:$0xff] %v405
        %414 = vst [vmem:[%s276 + $0x8] sm:$0xff] %v406
        %415 = vst [vmem:[%s276 + $0x10] sm:$0xff] %v407
        %416 = vst [vmem:[%s276 + $0x18] sm:$0xff] %v408
        %417 = vst [vmem:[%s276 + $0x20] sm:$0xff] %v409
        %418 = vst [vmem:[%s276 + $0x28] sm:$0xff] %v410
        %419 = vst [vmem:[%s276 + $0x30] sm:$0xff] %v411
        %420 = vst [vmem:[%s276 + $0x38] sm:$0xff] %v412
        %v421 = vld [vmem:[%s3] sm:$0xff]
        %v422 = vld [vmem:[%s3 + $0x8] sm:$0xf]
        %v423 = vld [vmem:[%s4] sm:$0xff]
        %v424 = vld [vmem:[%s4 + $0x8] sm:$0xf]
        %426 = vset.pattern.permute.xlu0 0
        %427 = vperm.xlu0 %426, %v423
        %v428 = vpop.permute.xlu0 %427
        %431 = vset.pattern.permute.xlu0 0
        %432 = vperm.xlu0 %431, %v424
        %v433 = vpop.permute.xlu0 %432
        %vm435 = vcmask 261120
        %v437 = vsel %vm435, %v421, 0
        %v440 = vsel %vm435, %v422, 0
        %442 = vmatpush.msra.mxu0 0.0
        %443 = vmatpush.msra.mxu0 0.0
        %444 = vmatpush.msra.mxu0 0.0
        %445 = vmatpush.msra.mxu0 0.0
        %446 = vmatpush.msra.mxu0 0.0
        %447 = vmatpush.msra.mxu0 0.0
        %448 = vmatpush.msra.mxu0 0.0
        %449 = vmatpush.msra.mxu0 0.0
        %450 = vmatpush.msra.mxu0 0.0
        %451 = vmatpush.msra.mxu0 0.0
        %452 = vmatpush.msra.mxu0 0.0
        %453 = vmatpush.msra.mxu0 0.0
        %454 = vmatpush.msra.mxu0 %v411
        %455 = vmatpush.msra.mxu0 %v409
        %456 = vmatpush.msra.mxu0 %v407
        %457 = vmatpush.msra.mxu0 %v405
        %458 = vmatmul.f32.gmra.mxu0 %v437
        %v459 = vpop.f32.mrf.mxu0
        %v460 = vadd.f32 %v428, %v459
        %461 = vmatmul.f32.gmra.mxu0 %v440
        %v462 = vpop.f32.mrf.mxu0
        %v463 = vadd.f32 %v433, %v462
        %464 = vdwg.mxu0
        %465 = vmatpush.msra.mxu0 0.0
        %466 = vmatpush.msra.mxu0 0.0
        %467 = vmatpush.msra.mxu0 0.0
        %468 = vmatpush.msra.mxu0 0.0
        %469 = vmatpush.msra.mxu0 0.0
        %470 = vmatpush.msra.mxu0 0.0
        %471 = vmatpush.msra.mxu0 0.0
        %472 = vmatpush.msra.mxu0 0.0
        %473 = vmatpush.msra.mxu0 0.0
        %474 = vmatpush.msra.mxu0 0.0
        %475 = vmatpush.msra.mxu0 0.0
        %476 = vmatpush.msra.mxu0 0.0
        %477 = vmatpush.msra.mxu0 %v412
        %478 = vmatpush.msra.mxu0 %v410
        %479 = vmatpush.msra.mxu0 %v408
        %480 = vmatpush.msra.mxu0 %v406
        %481 = vmatmul.f32.gmra.mxu0 %v437
        %v482 = vpop.f32.mrf.mxu0
        %v483 = vadd.f32 %v428, %v482
        %484 = vmatmul.f32.gmra.mxu0 %v440
        %v485 = vpop.f32.mrf.mxu0
        %v486 = vadd.f32 %v433, %v485
        %487 = vdwg.mxu0
        %488 = vst [vmem:[%s282] sm:$0xff] %v460
        %489 = vst [vmem:[%s282 + $0x8] sm:$0xff] %v483
        %490 = vst [vmem:[%s282 + $0x10] sm:$0xf] %v463
        %491 = vst [vmem:[%s282 + $0x18] sm:$0xf] %v486
        %s492 = sand.u32 %s139, 1
        %s493 = scalar_lea.sflag [#allocation4], %s492
        %s494 = sand.u32 %s139, 1
        %s495 = smul.addr %s494, 64
        %s496 = scalar_lea.vmem [#allocation3], %s495
        %s497 = sand.u32 %s165, 1
        %s498 = sand.u32 %s165, 1
        %s499 = smul.addr %s498, 32
        %s500 = scalar_lea.vmem [#allocation5], %s499
        // Predicated region
        $region64: #{neural_renderer_forward.10} parent=58 // pred_check
          %p501 = pneg %p149
        $region65: #{neural_renderer_forward.10} parent=58 // pred_check_branch
          %503 = sbr.rel (%p501) target = $region67
        $region66: #{neural_renderer_forward.10} parent=58 // pred_region
          %s504 = smul.u32 2, %s21
          %506 = vsyncadd %s493, 0
          %s507 = smul.addr %s504, 8
          %s508 = scalar_lea.hbm %s5, %s507
          %s509 = sshll.u32 %s496, 4
          %s510 = int_to_ptr.vmem [resolvable:$true] %s509
          %s511 = sshll.u32 %s508, 4
          %s512 = int_to_ptr.hbm [resolvable:$true] %s511
          %517 = dma.vmem_to_hbm [thread:$0]  %s510, 1024, %s512, %s493, 256, 512, 16
        $region67: #{neural_renderer_forward.10} parent=58 // pred_fallthru
          _
        // Predicated region
        $region68: #{neural_renderer_forward.10} parent=58 // pred_check
          %p518 = pneg %p175
        $region69: #{neural_renderer_forward.10} parent=58 // pred_check_branch
          %520 = sbr.rel (%p518) target = $region71
        $region70: #{neural_renderer_forward.10} parent=58 // pred_region
          %s521 = smul.u32 2, %s21
          %s522 = smul.addr %s521, 8
          %s523 = scalar_lea.vmem %s6, %s522
          // Predicated region
          $region72: #{neural_renderer_forward.10} parent=70 // pred_check
            _
          $region73: #{neural_renderer_forward.10} parent=70 // pred_check_branch
            %525 = sbr.rel (0) target = $region75
          $region74: #{neural_renderer_forward.10} parent=70 // pred_region
            // Predicated region
            $region76: #{neural_renderer_forward.10} parent=74 // pred_check
              _
            $region77: #{neural_renderer_forward.10} parent=74 // pred_check_branch
              %527 = sbr.rel (0) target = $region79
            $region78: #{neural_renderer_forward.10} parent=74 // pred_region
              loop: start=0, step=1, limit=1
              $region80: #{neural_renderer_forward.10} parent=78 // loop_pre_header
                _
              $region81: #{neural_renderer_forward.10} parent=78 // loop_header
                %s529 = sphi 0, %s533
                %p530 = scmp.ge.s32.totalorder %s529, 1
                %s534 = sphi %s500, %s500
                %s535 = sphi %s523, %s523
              $region82: #{neural_renderer_forward.10} parent=78 // loop_header_branch
                %532 = sbr.rel (%p530) target = $region86
              $region83: #{neural_renderer_forward.10} parent=78 // loop_body
                %v536 = vld [vmem:[%s534] sm:$0xff]
                %537 = vst [vmem:[%s535] sm:$0xff] %v536
                %v538 = vld [vmem:[%s534 + $0x8] sm:$0xff]
                %539 = vst [vmem:[%s535 + $0x8] sm:$0xff] %v538
                %v540 = vld [vmem:[%s534 + $0x10] sm:$0xff]
                %541 = vst [vmem:[%s535 + $0x20] sm:$0xff] %v540
                %v542 = vld [vmem:[%s534 + $0x18] sm:$0xff]
                %543 = vst [vmem:[%s535 + $0x28] sm:$0xff] %v542
              $region84: #{neural_renderer_forward.10} parent=78 // loop_footer
                %s533 = sadd.s32 1, %s529
              $region85: #{neural_renderer_forward.10} parent=78 // loop_footer_branch
                %528 = sbr.rel target = $region81
              $region86: #{neural_renderer_forward.10} parent=78 // loop_exit
                _
            $region79: #{neural_renderer_forward.10} parent=74 // pred_fallthru
              _
            // Predicated region
            $region87: #{neural_renderer_forward.10} parent=74 // pred_check
              _
            $region88: #{neural_renderer_forward.10} parent=74 // pred_check_branch
              %545 = sbr.rel target = $region90
            $region89: #{neural_renderer_forward.10} parent=74 // pred_region
              _
            $region90: #{neural_renderer_forward.10} parent=74 // pred_fallthru
              _
          $region75: #{neural_renderer_forward.10} parent=70 // pred_fallthru
            _
          %546 = vnop
        $region71: #{neural_renderer_forward.10} parent=58 // pred_fallthru
          _
      $region59: #{neural_renderer_forward.10} parent=5 // pred_fallthru
        _
      %p547 = scmp.le.s32.totalorder 2, %s16
      // Predicated region
      $region91: #{neural_renderer_forward.10} parent=5 // pred_check
        %p548 = pneg %p547
      $region92: #{neural_renderer_forward.10} parent=5 // pred_check_branch
        %550 = sbr.rel (%p548) target = $region94
      $region93: #{neural_renderer_forward.10} parent=5 // pred_region
        %s551 = ssub.s32 %s16, 2
        // Predicated region
        $region95: #{neural_renderer_forward.10} parent=93 // pred_check
          %p552 = pneg %p155
        $region96: #{neural_renderer_forward.10} parent=93 // pred_check_branch
          %554 = sbr.rel (%p552) target = $region98
        $region97: #{neural_renderer_forward.10} parent=93 // pred_region
          %s555 = sand.u32 %s140, 1
          %s556 = scalar_lea.sflag [#allocation4], %s555
          %s557 = sand.u32 %s140, 1
          %s558 = smul.addr %s557, 64
          %s559 = scalar_lea.vmem [#allocation3], %s558
          %561 = dma.done %s556, 1024
        $region98: #{neural_renderer_forward.10} parent=93 // pred_fallthru
          _
        // Predicated region
        $region99: #{neural_renderer_forward.10} parent=93 // pred_check
          %p562 = pneg %p181
        $region100: #{neural_renderer_forward.10} parent=93 // pred_check_branch
          %564 = sbr.rel (%p562) target = $region102
        $region101: #{neural_renderer_forward.10} parent=93 // pred_region
          %s565 = sand.u32 %s166, 1
          %s566 = sand.u32 %s166, 1
          %s567 = smul.addr %s566, 32
          %s568 = scalar_lea.vmem [#allocation5], %s567
        $region102: #{neural_renderer_forward.10} parent=93 // pred_fallthru
          _
      $region94: #{neural_renderer_forward.10} parent=5 // pred_fallthru
        _
    $region6: #{neural_renderer_forward.10} parent=1 // loop_footer
      %s20 = sadd.s32 1, %s16
    $region7: #{neural_renderer_forward.10} parent=1 // loop_footer_branch
      %15 = sbr.rel target = $region3
    $region8: #{neural_renderer_forward.10} parent=1 // loop_exit
      _
    %569 = vsyncpa [#allocation4], 1
    %s570 = scalar_lea.sflag [#allocation4], 1
    %571 = vsyncpa %s570, 1

// kernel: neural_renderer_forward.9
$region0: #{neural_renderer_forward.9}
  #allocation0 [shape = 'u32[]', space=smem, size = 0x4, offset = 0x4, fixed_abs, tag = 'smem constant byte address 0x4 - core index']
  #allocation1 [shape = 'u32[72,128]{1,0:T(1,128)}', space=vmem, size = 0x9000, scoped, tag = 'internal scratch']
  %s0 = inlined_call_operand.vmem [shape: f32[96,16], index: 0, kind: input, shape index: {}]
  %s1 = inlined_call_operand.vmem [shape: f32[96,48], index: 1, kind: input, shape index: {}]
  %s2 = inlined_call_operand.vmem [shape: f32[16,32], index: 2, kind: input, shape index: {}]
  %s3 = inlined_call_operand.vmem [shape: f32[192,32], index: 3, kind: output, shape index: {}]
  %s4 = sld [smem:[#allocation0]]
  $region45: #{neural_renderer_forward.9} parent=0
    _
  %s6 = ssub.s32 1, %s4
  %s7 = scalar_select 0, %s6, %s4
  loop: start=0, step=1, limit=4
  $region2: #{neural_renderer_forward.9} parent=0 // loop_pre_header
    _
  $region3: #{neural_renderer_forward.9} parent=0 // loop_header
    %s9 = sphi 0, %s13
    %p10 = scmp.ge.s32.totalorder %s9, 4
    %s19 = sphi 0, %s21
    %s22 = sphi 0, %s19
    %s23 = sphi 0, %s22
    %s39 = sphi 0, %s23
    %s43 = sphi 0, %s43
    %s45 = sphi 0, %s43
    %s46 = sphi 0, %s45
    %s60 = sphi 0, %s46
    %s64 = sphi 0, %s64
    %s66 = sphi 0, %s64
    %s67 = sphi 0, %s66
    %s81 = sphi 0, %s67
    %s87 = sphi 0, %s89
    %s90 = sphi 0, %s87
    %s91 = sphi 0, %s90
    %s107 = sphi 0, %s91
  $region4: #{neural_renderer_forward.9} parent=0 // loop_header_branch
    %12 = sbr.rel (%p10) target = $region8
  $region5: #{neural_renderer_forward.9} parent=0 // loop_body
    %s14 = ssub.s32 %s9, 1
    %s15 = ssub.s32 %s9, 2
    %s16 = sadd.s32 %s9, 1
    %s17 = ssub.s32 %s9, %s16
    %p18 = scmp.eq.s32.totalorder %s17, 0
    %s20 = sadd.s32 %s19, 1
    %s21 = scalar_select %p18, %s19, %s20
    %p24 = pneg %p18
    %p25 = scmp.eq.s32.totalorder %s9, 1
    %p26 = por %p24, %p25
    %p27 = scmp.ne.s32.totalorder %s19, %s22
    %p28 = scmp.eq.s32.totalorder %s9, 0
    %p29 = por %p27, %p28
    %p30 = scmp.ne.s32.totalorder %s19, %s22
    %p31 = scmp.eq.s32.totalorder %s14, 1
    %p32 = por %p30, %p31
    %p33 = scmp.ne.s32.totalorder %s22, %s23
    %p34 = scmp.eq.s32.totalorder %s14, 0
    %p35 = por %p33, %p34
    %p36 = scmp.ne.s32.totalorder %s22, %s23
    %p37 = scmp.eq.s32.totalorder %s15, 1
    %p38 = por %p36, %p37
    %p40 = scmp.ne.s32.totalorder %s23, %s39
    %p41 = scmp.eq.s32.totalorder %s15, 0
    %p42 = por %p40, %p41
    %s44 = sadd.s32 %s43, 1
    %p47 = scmp.eq.s32.totalorder %s9, 1
    %p48 = scmp.ne.s32.totalorder %s43, %s45
    %p49 = scmp.eq.s32.totalorder %s9, 0
    %p50 = por %p48, %p49
    %p51 = scmp.ne.s32.totalorder %s43, %s45
    %p52 = scmp.eq.s32.totalorder %s14, 1
    %p53 = por %p51, %p52
    %p54 = scmp.ne.s32.totalorder %s45, %s46
    %p55 = scmp.eq.s32.totalorder %s14, 0
    %p56 = por %p54, %p55
    %p57 = scmp.ne.s32.totalorder %s45, %s46
    %p58 = scmp.eq.s32.totalorder %s15, 1
    %p59 = por %p57, %p58
    %p61 = scmp.ne.s32.totalorder %s46, %s60
    %p62 = scmp.eq.s32.totalorder %s15, 0
    %p63 = por %p61, %p62
    %s65 = sadd.s32 %s64, 1
    %p68 = scmp.eq.s32.totalorder %s9, 1
    %p69 = scmp.ne.s32.totalorder %s64, %s66
    %p70 = scmp.eq.s32.totalorder %s9, 0
    %p71 = por %p69, %p70
    %p72 = scmp.ne.s32.totalorder %s64, %s66
    %p73 = scmp.eq.s32.totalorder %s14, 1
    %p74 = por %p72, %p73
    %p75 = scmp.ne.s32.totalorder %s66, %s67
    %p76 = scmp.eq.s32.totalorder %s14, 0
    %p77 = por %p75, %p76
    %p78 = scmp.ne.s32.totalorder %s66, %s67
    %p79 = scmp.eq.s32.totalorder %s15, 1
    %p80 = por %p78, %p79
    %p82 = scmp.ne.s32.totalorder %s67, %s81
    %p83 = scmp.eq.s32.totalorder %s15, 0
    %p84 = por %p82, %p83
    %s85 = ssub.s32 %s9, %s16
    %p86 = scmp.eq.s32.totalorder %s85, 0
    %s88 = sadd.s32 %s87, 1
    %s89 = scalar_select %p86, %s87, %s88
    %p92 = pneg %p86
    %p93 = scmp.eq.s32.totalorder %s9, 1
    %p94 = por %p92, %p93
    %p95 = scmp.ne.s32.totalorder %s87, %s90
    %p96 = scmp.eq.s32.totalorder %s9, 0
    %p97 = por %p95, %p96
    %p98 = scmp.ne.s32.totalorder %s87, %s90
    %p99 = scmp.eq.s32.totalorder %s14, 1
    %p100 = por %p98, %p99
    %p101 = scmp.ne.s32.totalorder %s90, %s91
    %p102 = scmp.eq.s32.totalorder %s14, 0
    %p103 = por %p101, %p102
    %p104 = scmp.ne.s32.totalorder %s90, %s91
    %p105 = scmp.eq.s32.totalorder %s15, 1
    %p106 = por %p104, %p105
    %p108 = scmp.ne.s32.totalorder %s91, %s107
    %p109 = scmp.eq.s32.totalorder %s15, 0
    %p110 = por %p108, %p109
    %p111 = scmp.le.s32.totalorder 1, %s9
    %p112 = scmp.lt.s32.totalorder %s9, 3
    %p113 = pnand %p111, %p112
    %p114 = pneg %p113
    // Predicated region
    $region9: #{neural_renderer_forward.9} parent=5 // pred_check
      _
    $region10: #{neural_renderer_forward.9} parent=5 // pred_check_branch
      %116 = sbr.rel (%p113) target = $region12
    $region11: #{neural_renderer_forward.9} parent=5 // pred_region
      %s117 = ssub.s32 %s9, 1
      // Predicated region
      $region13: #{neural_renderer_forward.9} parent=11 // pred_check
        %p118 = pneg %p56
      $region14: #{neural_renderer_forward.9} parent=11 // pred_check_branch
        %120 = sbr.rel (%p118) target = $region16
      $region15: #{neural_renderer_forward.9} parent=11 // pred_region
        _
      $region16: #{neural_renderer_forward.9} parent=11 // pred_fallthru
        _
      // Predicated region
      $region17: #{neural_renderer_forward.9} parent=11 // pred_check
        %p121 = pneg %p77
      $region18: #{neural_renderer_forward.9} parent=11 // pred_check_branch
        %123 = sbr.rel (%p121) target = $region20
      $region19: #{neural_renderer_forward.9} parent=11 // pred_region
        _
      $region20: #{neural_renderer_forward.9} parent=11 // pred_fallthru
        _
    $region12: #{neural_renderer_forward.9} parent=5 // pred_fallthru
      _
    %p124 = scmp.lt.s32.totalorder %s9, 2
    // Predicated region
    $region21: #{neural_renderer_forward.9} parent=5 // pred_check
      %p125 = pneg %p124
    $region22: #{neural_renderer_forward.9} parent=5 // pred_check_branch
      %127 = sbr.rel (%p125) target = $region24
    $region23: #{neural_renderer_forward.9} parent=5 // pred_region
      // Predicated region
      $region25: #{neural_renderer_forward.9} parent=23 // pred_check
        %p128 = pneg %p29
      $region26: #{neural_renderer_forward.9} parent=23 // pred_check_branch
        %130 = sbr.rel (%p128) target = $region28
      $region27: #{neural_renderer_forward.9} parent=23 // pred_region
        %s131 = smul.u32 6, %s9
        %p132 = scmp.lt.s32.totalorder %s131, 11
        %s133 = scalar_select %p132, %s131, 11
        %s134 = smul.addr %s133, 8
        %s135 = scalar_lea.vmem %s0, %s134
        %s136 = smul.u32 6, %s9
      $region28: #{neural_renderer_forward.9} parent=23 // pred_fallthru
        _
    $region24: #{neural_renderer_forward.9} parent=5 // pred_fallthru
      _
    %p137 = scmp.le.s32.totalorder 1, %s9
    %p138 = scmp.lt.s32.totalorder %s9, 3
    %p139 = pnand %p137, %p138
    %p140 = pneg %p139
    // Predicated region
    $region29: #{neural_renderer_forward.9} parent=5 // pred_check
      _
    $region30: #{neural_renderer_forward.9} parent=5 // pred_check_branch
      %142 = sbr.rel (%p139) target = $region32
    $region31: #{neural_renderer_forward.9} parent=5 // pred_region
      %s143 = ssub.s32 %s9, 1
      %s144 = smul.u32 6, %s14
      %p145 = scmp.lt.s32.totalorder %s144, 11
      %s146 = scalar_select %p145, %s144, 11
      %s147 = smul.addr %s146, 8
      %s148 = scalar_lea.vmem %s0, %s147
      %p149 = pneg %p35
      %p150 = pneg %p32
      %p151 = pneg %p56
      %p152 = pneg %p53
      %p153 = pneg %p77
      %p154 = pneg %p74
      %p155 = pneg %p103
      %p156 = pneg %p100
      %s157 = smul.u32 12, %s14
      %p158 = scmp.lt.s32.totalorder %s157, 23
      %s159 = scalar_select %p158, %s157, 23
      %s160 = smul.addr %s159, 8
      %s161 = scalar_lea.vmem %s3, %s160
      %s162 = smul.u32 6, %s14
      %p163 = scmp.lt.s32.totalorder %s162, 11
      %s164 = scalar_select %p163, %s162, 11
      %s165 = smul.addr %s164, 8
      %s166 = scalar_lea.vmem %s0, %s165
      %s167 = smul.u32 6, %s14
      %s168 = smul.u32 12, %s14
      %p169 = scmp.lt.s32.totalorder %s168, 23
      %s170 = scalar_select %p169, %s168, 23
      %s171 = smul.addr %s170, 8
      %s172 = scalar_lea.vmem %s3, %s171
      %s173 = smul.u32 12, %s14
      %v174 = vld [vmem:[%s1] sm:$0xff]
      %v175 = vld [vmem:[%s1 + $0x8] sm:$0xff]
      %v176 = vld [vmem:[%s1 + $0x10] sm:$0xff]
      %v177 = vld [vmem:[%s1 + $0x18] sm:$0xff]
      %v178 = vld [vmem:[%s1 + $0x20] sm:$0xff]
      %v179 = vld [vmem:[%s1 + $0x28] sm:$0xff]
      %v180 = vld [vmem:[%s1 + $0x30] sm:$0xff]
      %v181 = vld [vmem:[%s1 + $0x38] sm:$0xff]
      %v182 = vld [vmem:[%s1 + $0x40] sm:$0xff]
      %v183 = vld [vmem:[%s1 + $0x48] sm:$0xff]
      %v184 = vld [vmem:[%s1 + $0x50] sm:$0xff]
      %v185 = vld [vmem:[%s1 + $0x58] sm:$0xff]
      %v186 = vld [vmem:[%s166] sm:$0xff]
      %v187 = vld [vmem:[%s166 + $0x8] sm:$0xff]
      %v188 = vld [vmem:[%s166 + $0x10] sm:$0xff]
      %v189 = vld [vmem:[%s166 + $0x18] sm:$0xff]
      %v190 = vld [vmem:[%s166 + $0x20] sm:$0xff]
      %v191 = vld [vmem:[%s166 + $0x28] sm:$0xff]
      %vm192 = vcmask 392192
      %v194 = vsel %vm192, %v174, 0
      %v197 = vsel %vm192, %v175, 0
      %v200 = vsel %vm192, %v176, 0
      %v203 = vsel %vm192, %v177, 0
      %v206 = vsel %vm192, %v178, 0
      %v209 = vsel %vm192, %v179, 0
      %v212 = vsel %vm192, %v180, 0
      %v215 = vsel %vm192, %v181, 0
      %v218 = vsel %vm192, %v182, 0
      %v221 = vsel %vm192, %v183, 0
      %v224 = vsel %vm192, %v184, 0
      %v227 = vsel %vm192, %v185, 0
      %229 = vmatpush.msra.mxu0 0.0
      %230 = vmatpush.msra.mxu0 0.0
      %231 = vmatpush.msra.mxu0 0.0
      %232 = vmatpush.msra.mxu0 0.0
      %233 = vmatpush.msra.mxu0 0.0
      %234 = vmatpush.msra.mxu0 0.0
      %235 = vmatpush.msra.mxu0 0.0
      %236 = vmatpush.msra.mxu0 0.0
      %237 = vmatpush.msra.mxu0 0.0
      %238 = vmatpush.msra.mxu0 0.0
      %239 = vmatpush.msra.mxu0 %v191
      %240 = vmatpush.msra.mxu0 %v190
      %241 = vmatpush.msra.mxu0 %v189
      %242 = vmatpush.msra.mxu0 %v188
      %243 = vmatpush.msra.mxu0 %v187
      %244 = vmatpush.msra.mxu0 %v186
      %245 = vmatmul.f32.gmra.mxu0 %v194
      %v246 = vpop.f32.mrf.mxu0
      %v247 = vadd.f32 0.0, %v246
      %248 = vmatmul.f32.gmra.mxu0 %v197
      %v249 = vpop.f32.mrf.mxu0
      %v250 = vadd.f32 0.0, %v249
      %251 = vmatmul.f32.gmra.mxu0 %v200
      %v252 = vpop.f32.mrf.mxu0
      %v253 = vadd.f32 0.0, %v252
      %254 = vmatmul.f32.gmra.mxu0 %v203
      %v255 = vpop.f32.mrf.mxu0
      %v256 = vadd.f32 0.0, %v255
      %257 = vmatmul.f32.gmra.mxu0 %v206
      %v258 = vpop.f32.mrf.mxu0
      %v259 = vadd.f32 0.0, %v258
      %260 = vmatmul.f32.gmra.mxu0 %v209
      %v261 = vpop.f32.mrf.mxu0
      %v262 = vadd.f32 0.0, %v261
      %263 = vmatmul.f32.gmra.mxu0 %v212
      %v264 = vpop.f32.mrf.mxu0
      %v265 = vadd.f32 0.0, %v264
      %266 = vmatmul.f32.gmra.mxu0 %v215
      %v267 = vpop.f32.mrf.mxu0
      %v268 = vadd.f32 0.0, %v267
      %269 = vmatmul.f32.gmra.mxu0 %v218
      %v270 = vpop.f32.mrf.mxu0
      %v271 = vadd.f32 0.0, %v270
      %272 = vmatmul.f32.gmra.mxu0 %v221
      %v273 = vpop.f32.mrf.mxu0
      %v274 = vadd.f32 0.0, %v273
      %275 = vmatmul.f32.gmra.mxu0 %v224
      %v276 = vpop.f32.mrf.mxu0
      %v277 = vadd.f32 0.0, %v276
      %278 = vmatmul.f32.gmra.mxu0 %v227
      %v279 = vpop.f32.mrf.mxu0
      %v280 = vadd.f32 0.0, %v279
      %281 = vdwg.mxu0
      %v282 = vld [vmem:[%s2] sm:$0xff]
      %v283 = vld [vmem:[%s2 + $0x8] sm:$0xff]
      %vm284 = vcmask 130048
      %v286 = vsel %vm284, %v247, 0
      %v289 = vsel %vm284, %v250, 0
      %v292 = vsel %vm284, %v253, 0
      %v295 = vsel %vm284, %v256, 0
      %v298 = vsel %vm284, %v259, 0
      %v301 = vsel %vm284, %v262, 0
      %v304 = vsel %vm284, %v265, 0
      %v307 = vsel %vm284, %v268, 0
      %v310 = vsel %vm284, %v271, 0
      %v313 = vsel %vm284, %v274, 0
      %v316 = vsel %vm284, %v277, 0
      %v319 = vsel %vm284, %v280, 0
      %321 = vmatpush.msra.mxu0 0.0
      %322 = vmatpush.msra.mxu0 0.0
      %323 = vmatpush.msra.mxu0 0.0
      %324 = vmatpush.msra.mxu0 0.0
      %325 = vmatpush.msra.mxu0 0.0
      %326 = vmatpush.msra.mxu0 0.0
      %327 = vmatpush.msra.mxu0 0.0
      %328 = vmatpush.msra.mxu0 0.0
      %329 = vmatpush.msra.mxu0 0.0
      %330 = vmatpush.msra.mxu0 0.0
      %331 = vmatpush.msra.mxu0 0.0
      %332 = vmatpush.msra.mxu0 0.0
      %333 = vmatpush.msra.mxu0 0.0
      %334 = vmatpush.msra.mxu0 0.0
      %335 = vmatpush.msra.mxu0 %v283
      %336 = vmatpush.msra.mxu0 %v282
      %337 = vmatmul.f32.gmra.mxu0 %v286
      %v338 = vpop.f32.mrf.mxu0
      %v339 = vadd.f32 0.0, %v338
      %340 = vmatmul.f32.gmra.mxu0 %v289
      %v341 = vpop.f32.mrf.mxu0
      %v342 = vadd.f32 0.0, %v341
      %343 = vmatmul.f32.gmra.mxu0 %v292
      %v344 = vpop.f32.mrf.mxu0
      %v345 = vadd.f32 0.0, %v344
      %346 = vmatmul.f32.gmra.mxu0 %v295
      %v347 = vpop.f32.mrf.mxu0
      %v348 = vadd.f32 0.0, %v347
      %349 = vmatmul.f32.gmra.mxu0 %v298
      %v350 = vpop.f32.mrf.mxu0
      %v351 = vadd.f32 0.0, %v350
      %352 = vmatmul.f32.gmra.mxu0 %v301
      %v353 = vpop.f32.mrf.mxu0
      %v354 = vadd.f32 0.0, %v353
      %355 = vmatmul.f32.gmra.mxu0 %v304
      %v356 = vpop.f32.mrf.mxu0
      %v357 = vadd.f32 0.0, %v356
      %358 = vmatmul.f32.gmra.mxu0 %v307
      %v359 = vpop.f32.mrf.mxu0
      %v360 = vadd.f32 0.0, %v359
      %361 = vmatmul.f32.gmra.mxu0 %v310
      %v362 = vpop.f32.mrf.mxu0
      %v363 = vadd.f32 0.0, %v362
      %364 = vmatmul.f32.gmra.mxu0 %v313
      %v365 = vpop.f32.mrf.mxu0
      %v366 = vadd.f32 0.0, %v365
      %367 = vmatmul.f32.gmra.mxu0 %v316
      %v368 = vpop.f32.mrf.mxu0
      %v369 = vadd.f32 0.0, %v368
      %370 = vmatmul.f32.gmra.mxu0 %v319
      %v371 = vpop.f32.mrf.mxu0
      %v372 = vadd.f32 0.0, %v371
      %373 = vdwg.mxu0
      %vm374 = vcmask 261120
      %375 = vst.msk [vmem:[%s172] sm:$0xff] %vm374, %v339
      %376 = vst.msk [vmem:[%s172 + $0x8] sm:$0xff] %vm374, %v342
      %377 = vst.msk [vmem:[%s172 + $0x10] sm:$0xff] %vm374, %v345
      %378 = vst.msk [vmem:[%s172 + $0x18] sm:$0xff] %vm374, %v348
      %379 = vst.msk [vmem:[%s172 + $0x20] sm:$0xff] %vm374, %v351
      %380 = vst.msk [vmem:[%s172 + $0x28] sm:$0xff] %vm374, %v354
      %381 = vst.msk [vmem:[%s172 + $0x30] sm:$0xff] %vm374, %v357
      %382 = vst.msk [vmem:[%s172 + $0x38] sm:$0xff] %vm374, %v360
      %383 = vst.msk [vmem:[%s172 + $0x40] sm:$0xff] %vm374, %v363
      %384 = vst.msk [vmem:[%s172 + $0x48] sm:$0xff] %vm374, %v366
      %385 = vst.msk [vmem:[%s172 + $0x50] sm:$0xff] %vm374, %v369
      %386 = vst.msk [vmem:[%s172 + $0x58] sm:$0xff] %vm374, %v372
      %s387 = smul.u32 12, %s14
      %p388 = scmp.lt.s32.totalorder %s387, 23
      %s389 = scalar_select %p388, %s387, 23
      %s390 = smul.addr %s389, 8
      %s391 = scalar_lea.vmem %s3, %s390
      // Predicated region
      $region33: #{neural_renderer_forward.9} parent=31 // pred_check
        %p392 = pneg %p100
      $region34: #{neural_renderer_forward.9} parent=31 // pred_check_branch
        %394 = sbr.rel (%p392) target = $region36
      $region35: #{neural_renderer_forward.9} parent=31 // pred_region
        %s395 = smul.u32 12, %s14
      $region36: #{neural_renderer_forward.9} parent=31 // pred_fallthru
        _
    $region32: #{neural_renderer_forward.9} parent=5 // pred_fallthru
      _
    %p396 = scmp.le.s32.totalorder 2, %s9
    // Predicated region
    $region37: #{neural_renderer_forward.9} parent=5 // pred_check
      %p397 = pneg %p396
    $region38: #{neural_renderer_forward.9} parent=5 // pred_check_branch
      %399 = sbr.rel (%p397) target = $region40
    $region39: #{neural_renderer_forward.9} parent=5 // pred_region
      %s400 = ssub.s32 %s9, 2
      // Predicated region
      $region41: #{neural_renderer_forward.9} parent=39 // pred_check
        %p401 = pneg %p106
      $region42: #{neural_renderer_forward.9} parent=39 // pred_check_branch
        %403 = sbr.rel (%p401) target = $region44
      $region43: #{neural_renderer_forward.9} parent=39 // pred_region
        %s404 = smul.u32 12, %s15
        %p405 = scmp.lt.s32.totalorder %s404, 23
        %s406 = scalar_select %p405, %s404, 23
        %s407 = smul.addr %s406, 8
        %s408 = scalar_lea.vmem %s3, %s407
      $region44: #{neural_renderer_forward.9} parent=39 // pred_fallthru
        _
    $region40: #{neural_renderer_forward.9} parent=5 // pred_fallthru
      _
  $region6: #{neural_renderer_forward.9} parent=0 // loop_footer
    %s13 = sadd.s32 1, %s9
  $region7: #{neural_renderer_forward.9} parent=0 // loop_footer_branch
    %8 = sbr.rel target = $region3
  $region8: #{neural_renderer_forward.9} parent=0 // loop_exit
    _

// kernel: neural_renderer_forward.11
$region0: #{neural_renderer_forward.11}
  #allocation0 [shape = 'u32[]', space=smem, size = 0x4, offset = 0x4, fixed_abs, tag = 'smem constant byte address 0x4 - core index']
  #allocation1 [shape = 'u32[72,128]{1,0:T(1,128)}', space=vmem, size = 0x9000, scoped, tag = 'internal scratch']
  %s0 = inlined_call_operand.vmem [shape: f32[6,32,32], index: 0, kind: input, shape index: {}]
  %s1 = inlined_call_operand.vmem [shape: f32[32,32], index: 1, kind: input, shape index: {}]
  %s2 = inlined_call_operand.vmem [shape: f32[32,32], index: 2, kind: input, shape index: {}]
  %s3 = inlined_call_operand.vmem [shape: f32[16,16], index: 3, kind: input, shape index: {}]
  %s4 = inlined_call_operand.vmem [shape: f32[16,16], index: 4, kind: input, shape index: {}]
  %s5 = inlined_call_operand.vmem [shape: f32[8,8], index: 5, kind: input, shape index: {}]
  %s6 = inlined_call_operand.vmem [shape: f32[8,8], index: 6, kind: input, shape index: {}]
  %s7 = inlined_call_operand.hbm [shape: f32[6,3,16,16], index: 7, kind: output, shape index: {0}]
  %s8 = inlined_call_operand.hbm [shape: f32[6,3,8,8], index: 8, kind: output, shape index: {1}]
  %s9 = inlined_call_operand.hbm [shape: f32[6,3,4,4], index: 9, kind: output, shape index: {2}]
  %s10 = inlined_call_operand.hbm [shape: f32[6,4,4], index: 10, kind: output, shape index: {3}]
  %11 = xla_tuple %s7, %s8, %s9, %s10
  %s12 = sld [smem:[#allocation0]]
  $region85: #{neural_renderer_forward.11} parent=0
    _
  %s14 = ssub.s32 1, %s12
  %s15 = scalar_select 0, %s14, %s12
  $region1: #{neural_renderer_forward.11} parent=0
    #allocation2 [shape = 'u8[147456]{0}', space=vmem, size = 0x24000, scoped, tag = 'output window, operand 0']
    #allocation3 [shape = 's32[2]{0}', space=sflag, size = 0x8, scoped, tag = 'scoped memory for neural_renderer_forward.11']
    #allocation4 [shape = 'u8[73728]{0}', space=vmem, size = 0x12000, scoped, tag = 'output window, operand 1']
    #allocation5 [shape = 's32[2]{0}', space=sflag, size = 0x8, scoped, tag = 'scoped memory for neural_renderer_forward.11']
    #allocation6 [shape = 'u8[36864]{0}', space=vmem, size = 0x9000, scoped, tag = 'output window, operand 2']
    #allocation7 [shape = 'u8[12288]{0}', space=vmem, size = 0x3000, scoped, tag = 'output window, operand 3']
    #allocation8 [shape = 's32[2]{0}', space=sflag, size = 0x8, scoped, tag = 'scoped memory for neural_renderer_forward.11']
    %16 = vsyncpa [#allocation3], 0
    %s17 = scalar_lea.sflag [#allocation3], 1
    %18 = vsyncpa %s17, 0
    %19 = vsyncpa [#allocation5], 0
    %s20 = scalar_lea.sflag [#allocation5], 1
    %21 = vsyncpa %s20, 0
    %22 = vsyncpa [#allocation8], 0
    %s23 = scalar_lea.sflag [#allocation8], 1
    %24 = vsyncpa %s23, 0
    loop: start=0, step=1, limit=4
    $region2: #{neural_renderer_forward.11} parent=1 // loop_pre_header
      _
    $region3: #{neural_renderer_forward.11} parent=1 // loop_header
      %s26 = sphi 0, %s30
      %p27 = scmp.ge.s32.totalorder %s26, 4
      %s36 = sphi 0, %s38
      %s39 = sphi 0, %s36
      %s40 = sphi 0, %s39
      %s56 = sphi 0, %s40
      %s60 = sphi 0, %s60
      %s62 = sphi 0, %s60
      %s63 = sphi 0, %s62
      %s77 = sphi 0, %s63
      %s81 = sphi 0, %s81
      %s83 = sphi 0, %s81
      %s84 = sphi 0, %s83
      %s98 = sphi 0, %s84
      %s102 = sphi 0, %s102
      %s104 = sphi 0, %s102
      %s105 = sphi 0, %s104
      %s119 = sphi 0, %s105
      %s123 = sphi 0, %s123
      %s125 = sphi 0, %s123
      %s126 = sphi 0, %s125
      %s140 = sphi 0, %s126
      %s144 = sphi 0, %s144
      %s146 = sphi 0, %s144
      %s147 = sphi 0, %s146
      %s161 = sphi 0, %s147
      %s165 = sphi 0, %s165
      %s167 = sphi 0, %s165
      %s168 = sphi 0, %s167
      %s182 = sphi 0, %s168
      %s188 = sphi 0, %s190
      %s191 = sphi 0, %s188
      %s192 = sphi 0, %s191
      %s208 = sphi 0, %s192
      %s214 = sphi 0, %s216
      %s217 = sphi 0, %s214
      %s218 = sphi 0, %s217
      %s234 = sphi 0, %s218
      %s240 = sphi 0, %s242
      %s243 = sphi 0, %s240
      %s244 = sphi 0, %s243
      %s260 = sphi 0, %s244
      %s266 = sphi 0, %s268
      %s269 = sphi 0, %s266
      %s270 = sphi 0, %s269
      %s286 = sphi 0, %s270
    $region4: #{neural_renderer_forward.11} parent=1 // loop_header_branch
      %29 = sbr.rel (%p27) target = $region8
    $region5: #{neural_renderer_forward.11} parent=1 // loop_body
      %s31 = ssub.s32 %s26, 1
      %s32 = ssub.s32 %s26, 2
      %s33 = sadd.s32 %s26, 1
      %s34 = ssub.s32 %s26, %s33
      %p35 = scmp.eq.s32.totalorder %s34, 0
      %s37 = sadd.s32 %s36, 1
      %s38 = scalar_select %p35, %s36, %s37
      %p41 = pneg %p35
      %p42 = scmp.eq.s32.totalorder %s26, 1
      %p43 = por %p41, %p42
      %p44 = scmp.ne.s32.totalorder %s36, %s39
      %p45 = scmp.eq.s32.totalorder %s26, 0
      %p46 = por %p44, %p45
      %p47 = scmp.ne.s32.totalorder %s36, %s39
      %p48 = scmp.eq.s32.totalorder %s31, 1
      %p49 = por %p47, %p48
      %p50 = scmp.ne.s32.totalorder %s39, %s40
      %p51 = scmp.eq.s32.totalorder %s31, 0
      %p52 = por %p50, %p51
      %p53 = scmp.ne.s32.totalorder %s39, %s40
      %p54 = scmp.eq.s32.totalorder %s32, 1
      %p55 = por %p53, %p54
      %p57 = scmp.ne.s32.totalorder %s40, %s56
      %p58 = scmp.eq.s32.totalorder %s32, 0
      %p59 = por %p57, %p58
      %s61 = sadd.s32 %s60, 1
      %p64 = scmp.eq.s32.totalorder %s26, 1
      %p65 = scmp.ne.s32.totalorder %s60, %s62
      %p66 = scmp.eq.s32.totalorder %s26, 0
      %p67 = por %p65, %p66
      %p68 = scmp.ne.s32.totalorder %s60, %s62
      %p69 = scmp.eq.s32.totalorder %s31, 1
      %p70 = por %p68, %p69
      %p71 = scmp.ne.s32.totalorder %s62, %s63
      %p72 = scmp.eq.s32.totalorder %s31, 0
      %p73 = por %p71, %p72
      %p74 = scmp.ne.s32.totalorder %s62, %s63
      %p75 = scmp.eq.s32.totalorder %s32, 1
      %p76 = por %p74, %p75
      %p78 = scmp.ne.s32.totalorder %s63, %s77
      %p79 = scmp.eq.s32.totalorder %s32, 0
      %p80 = por %p78, %p79
      %s82 = sadd.s32 %s81, 1
      %p85 = scmp.eq.s32.totalorder %s26, 1
      %p86 = scmp.ne.s32.totalorder %s81, %s83
      %p87 = scmp.eq.s32.totalorder %s26, 0
      %p88 = por %p86, %p87
      %p89 = scmp.ne.s32.totalorder %s81, %s83
      %p90 = scmp.eq.s32.totalorder %s31, 1
      %p91 = por %p89, %p90
      %p92 = scmp.ne.s32.totalorder %s83, %s84
      %p93 = scmp.eq.s32.totalorder %s31, 0
      %p94 = por %p92, %p93
      %p95 = scmp.ne.s32.totalorder %s83, %s84
      %p96 = scmp.eq.s32.totalorder %s32, 1
      %p97 = por %p95, %p96
      %p99 = scmp.ne.s32.totalorder %s84, %s98
      %p100 = scmp.eq.s32.totalorder %s32, 0
      %p101 = por %p99, %p100
      %s103 = sadd.s32 %s102, 1
      %p106 = scmp.eq.s32.totalorder %s26, 1
      %p107 = scmp.ne.s32.totalorder %s102, %s104
      %p108 = scmp.eq.s32.totalorder %s26, 0
      %p109 = por %p107, %p108
      %p110 = scmp.ne.s32.totalorder %s102, %s104
      %p111 = scmp.eq.s32.totalorder %s31, 1
      %p112 = por %p110, %p111
      %p113 = scmp.ne.s32.totalorder %s104, %s105
      %p114 = scmp.eq.s32.totalorder %s31, 0
      %p115 = por %p113, %p114
      %p116 = scmp.ne.s32.totalorder %s104, %s105
      %p117 = scmp.eq.s32.totalorder %s32, 1
      %p118 = por %p116, %p117
      %p120 = scmp.ne.s32.totalorder %s105, %s119
      %p121 = scmp.eq.s32.totalorder %s32, 0
      %p122 = por %p120, %p121
      %s124 = sadd.s32 %s123, 1
      %p127 = scmp.eq.s32.totalorder %s26, 1
      %p128 = scmp.ne.s32.totalorder %s123, %s125
      %p129 = scmp.eq.s32.totalorder %s26, 0
      %p130 = por %p128, %p129
      %p131 = scmp.ne.s32.totalorder %s123, %s125
      %p132 = scmp.eq.s32.totalorder %s31, 1
      %p133 = por %p131, %p132
      %p134 = scmp.ne.s32.totalorder %s125, %s126
      %p135 = scmp.eq.s32.totalorder %s31, 0
      %p136 = por %p134, %p135
      %p137 = scmp.ne.s32.totalorder %s125, %s126
      %p138 = scmp.eq.s32.totalorder %s32, 1
      %p139 = por %p137, %p138
      %p141 = scmp.ne.s32.totalorder %s126, %s140
      %p142 = scmp.eq.s32.totalorder %s32, 0
      %p143 = por %p141, %p142
      %s145 = sadd.s32 %s144, 1
      %p148 = scmp.eq.s32.totalorder %s26, 1
      %p149 = scmp.ne.s32.totalorder %s144, %s146
      %p150 = scmp.eq.s32.totalorder %s26, 0
      %p151 = por %p149, %p150
      %p152 = scmp.ne.s32.totalorder %s144, %s146
      %p153 = scmp.eq.s32.totalorder %s31, 1
      %p154 = por %p152, %p153
      %p155 = scmp.ne.s32.totalorder %s146, %s147
      %p156 = scmp.eq.s32.totalorder %s31, 0
      %p157 = por %p155, %p156
      %p158 = scmp.ne.s32.totalorder %s146, %s147
      %p159 = scmp.eq.s32.totalorder %s32, 1
      %p160 = por %p158, %p159
      %p162 = scmp.ne.s32.totalorder %s147, %s161
      %p163 = scmp.eq.s32.totalorder %s32, 0
      %p164 = por %p162, %p163
      %s166 = sadd.s32 %s165, 1
      %p169 = scmp.eq.s32.totalorder %s26, 1
      %p170 = scmp.ne.s32.totalorder %s165, %s167
      %p171 = scmp.eq.s32.totalorder %s26, 0
      %p172 = por %p170, %p171
      %p173 = scmp.ne.s32.totalorder %s165, %s167
      %p174 = scmp.eq.s32.totalorder %s31, 1
      %p175 = por %p173, %p174
      %p176 = scmp.ne.s32.totalorder %s167, %s168
      %p177 = scmp.eq.s32.totalorder %s31, 0
      %p178 = por %p176, %p177
      %p179 = scmp.ne.s32.totalorder %s167, %s168
      %p180 = scmp.eq.s32.totalorder %s32, 1
      %p181 = por %p179, %p180
      %p183 = scmp.ne.s32.totalorder %s168, %s182
      %p184 = scmp.eq.s32.totalorder %s32, 0
      %p185 = por %p183, %p184
      %s186 = ssub.s32 %s26, %s33
      %p187 = scmp.eq.s32.totalorder %s186, 0
      %s189 = sadd.s32 %s188, 1
      %s190 = scalar_select %p187, %s188, %s189
      %p193 = pneg %p187
      %p194 = scmp.eq.s32.totalorder %s26, 1
      %p195 = por %p193, %p194
      %p196 = scmp.ne.s32.totalorder %s188, %s191
      %p197 = scmp.eq.s32.totalorder %s26, 0
      %p198 = por %p196, %p197
      %p199 = scmp.ne.s32.totalorder %s188, %s191
      %p200 = scmp.eq.s32.totalorder %s31, 1
      %p201 = por %p199, %p200
      %p202 = scmp.ne.s32.totalorder %s191, %s192
      %p203 = scmp.eq.s32.totalorder %s31, 0
      %p204 = por %p202, %p203
      %p205 = scmp.ne.s32.totalorder %s191, %s192
      %p206 = scmp.eq.s32.totalorder %s32, 1
      %p207 = por %p205, %p206
      %p209 = scmp.ne.s32.totalorder %s192, %s208
      %p210 = scmp.eq.s32.totalorder %s32, 0
      %p211 = por %p209, %p210
      %s212 = ssub.s32 %s26, %s33
      %p213 = scmp.eq.s32.totalorder %s212, 0
      %s215 = sadd.s32 %s214, 1
      %s216 = scalar_select %p213, %s214, %s215
      %p219 = pneg %p213
      %p220 = scmp.eq.s32.totalorder %s26, 1
      %p221 = por %p219, %p220
      %p222 = scmp.ne.s32.totalorder %s214, %s217
      %p223 = scmp.eq.s32.totalorder %s26, 0
      %p224 = por %p222, %p223
      %p225 = scmp.ne.s32.totalorder %s214, %s217
      %p226 = scmp.eq.s32.totalorder %s31, 1
      %p227 = por %p225, %p226
      %p228 = scmp.ne.s32.totalorder %s217, %s218
      %p229 = scmp.eq.s32.totalorder %s31, 0
      %p230 = por %p228, %p229
      %p231 = scmp.ne.s32.totalorder %s217, %s218
      %p232 = scmp.eq.s32.totalorder %s32, 1
      %p233 = por %p231, %p232
      %p235 = scmp.ne.s32.totalorder %s218, %s234
      %p236 = scmp.eq.s32.totalorder %s32, 0
      %p237 = por %p235, %p236
      %s238 = ssub.s32 %s26, %s33
      %p239 = scmp.eq.s32.totalorder %s238, 0
      %s241 = sadd.s32 %s240, 1
      %s242 = scalar_select %p239, %s240, %s241
      %p245 = pneg %p239
      %p246 = scmp.eq.s32.totalorder %s26, 1
      %p247 = por %p245, %p246
      %p248 = scmp.ne.s32.totalorder %s240, %s243
      %p249 = scmp.eq.s32.totalorder %s26, 0
      %p250 = por %p248, %p249
      %p251 = scmp.ne.s32.totalorder %s240, %s243
      %p252 = scmp.eq.s32.totalorder %s31, 1
      %p253 = por %p251, %p252
      %p254 = scmp.ne.s32.totalorder %s243, %s244
      %p255 = scmp.eq.s32.totalorder %s31, 0
      %p256 = por %p254, %p255
      %p257 = scmp.ne.s32.totalorder %s243, %s244
      %p258 = scmp.eq.s32.totalorder %s32, 1
      %p259 = por %p257, %p258
      %p261 = scmp.ne.s32.totalorder %s244, %s260
      %p262 = scmp.eq.s32.totalorder %s32, 0
      %p263 = por %p261, %p262
      %s264 = ssub.s32 %s26, %s33
      %p265 = scmp.eq.s32.totalorder %s264, 0
      %s267 = sadd.s32 %s266, 1
      %s268 = scalar_select %p265, %s266, %s267
      %p271 = pneg %p265
      %p272 = scmp.eq.s32.totalorder %s26, 1
      %p273 = por %p271, %p272
      %p274 = scmp.ne.s32.totalorder %s266, %s269
      %p275 = scmp.eq.s32.totalorder %s26, 0
      %p276 = por %p274, %p275
      %p277 = scmp.ne.s32.totalorder %s266, %s269
      %p278 = scmp.eq.s32.totalorder %s31, 1
      %p279 = por %p277, %p278
      %p280 = scmp.ne.s32.totalorder %s269, %s270
      %p281 = scmp.eq.s32.totalorder %s31, 0
      %p282 = por %p280, %p281
      %p283 = scmp.ne.s32.totalorder %s269, %s270
      %p284 = scmp.eq.s32.totalorder %s32, 1
      %p285 = por %p283, %p284
      %p287 = scmp.ne.s32.totalorder %s270, %s286
      %p288 = scmp.eq.s32.totalorder %s32, 0
      %p289 = por %p287, %p288
      %p290 = scmp.le.s32.totalorder 1, %s26
      %p291 = scmp.lt.s32.totalorder %s26, 3
      %p292 = pnand %p290, %p291
      %p293 = pneg %p292
      // Predicated region
      $region9: #{neural_renderer_forward.11} parent=5 // pred_check
        _
      $region10: #{neural_renderer_forward.11} parent=5 // pred_check_branch
        %295 = sbr.rel (%p292) target = $region12
      $region11: #{neural_renderer_forward.11} parent=5 // pred_region
        %s296 = ssub.s32 %s26, 1
        // Predicated region
        $region13: #{neural_renderer_forward.11} parent=11 // pred_check
          %p297 = pneg %p73
        $region14: #{neural_renderer_forward.11} parent=11 // pred_check_branch
          %299 = sbr.rel (%p297) target = $region16
        $region15: #{neural_renderer_forward.11} parent=11 // pred_region
          _
        $region16: #{neural_renderer_forward.11} parent=11 // pred_fallthru
          _
        // Predicated region
        $region17: #{neural_renderer_forward.11} parent=11 // pred_check
          %p300 = pneg %p94
        $region18: #{neural_renderer_forward.11} parent=11 // pred_check_branch
          %302 = sbr.rel (%p300) target = $region20
        $region19: #{neural_renderer_forward.11} parent=11 // pred_region
          _
        $region20: #{neural_renderer_forward.11} parent=11 // pred_fallthru
          _
        // Predicated region
        $region21: #{neural_renderer_forward.11} parent=11 // pred_check
          %p303 = pneg %p115
        $region22: #{neural_renderer_forward.11} parent=11 // pred_check_branch
          %305 = sbr.rel (%p303) target = $region24
        $region23: #{neural_renderer_forward.11} parent=11 // pred_region
          _
        $region24: #{neural_renderer_forward.11} parent=11 // pred_fallthru
          _
        // Predicated region
        $region25: #{neural_renderer_forward.11} parent=11 // pred_check
          %p306 = pneg %p136
        $region26: #{neural_renderer_forward.11} parent=11 // pred_check_branch
          %308 = sbr.rel (%p306) target = $region28
        $region27: #{neural_renderer_forward.11} parent=11 // pred_region
          _
        $region28: #{neural_renderer_forward.11} parent=11 // pred_fallthru
          _
        // Predicated region
        $region29: #{neural_renderer_forward.11} parent=11 // pred_check
          %p309 = pneg %p157
        $region30: #{neural_renderer_forward.11} parent=11 // pred_check_branch
          %311 = sbr.rel (%p309) target = $region32
        $region31: #{neural_renderer_forward.11} parent=11 // pred_region
          _
        $region32: #{neural_renderer_forward.11} parent=11 // pred_fallthru
          _
        // Predicated region
        $region33: #{neural_renderer_forward.11} parent=11 // pred_check
          %p312 = pneg %p178
        $region34: #{neural_renderer_forward.11} parent=11 // pred_check_branch
          %314 = sbr.rel (%p312) target = $region36
        $region35: #{neural_renderer_forward.11} parent=11 // pred_region
          _
        $region36: #{neural_renderer_forward.11} parent=11 // pred_fallthru
          _
      $region12: #{neural_renderer_forward.11} parent=5 // pred_fallthru
        _
      %p315 = scmp.lt.s32.totalorder %s26, 2
      // Predicated region
      $region37: #{neural_renderer_forward.11} parent=5 // pred_check
        %p316 = pneg %p315
      $region38: #{neural_renderer_forward.11} parent=5 // pred_check_branch
        %318 = sbr.rel (%p316) target = $region40
      $region39: #{neural_renderer_forward.11} parent=5 // pred_region
        // Predicated region
        $region41: #{neural_renderer_forward.11} parent=39 // pred_check
          %p319 = pneg %p46
        $region42: #{neural_renderer_forward.11} parent=39 // pred_check_branch
          %321 = sbr.rel (%p319) target = $region44
        $region43: #{neural_renderer_forward.11} parent=39 // pred_region
          %s322 = smul.u32 3, %s26
          %p323 = scmp.lt.s32.totalorder %s322, 5
          %s324 = scalar_select %p323, %s322, 5
          %s325 = smul.addr %s324, 4
          %s326 = smul.addr %s325, 8
          %s327 = scalar_lea.vmem %s0, %s326
          %s328 = smul.u32 3, %s26
        $region44: #{neural_renderer_forward.11} parent=39 // pred_fallthru
          _
      $region40: #{neural_renderer_forward.11} parent=5 // pred_fallthru
        _
      %p329 = scmp.le.s32.totalorder 1, %s26
      %p330 = scmp.lt.s32.totalorder %s26, 3
      %p331 = pnand %p329, %p330
      %p332 = pneg %p331
      // Predicated region
      $region45: #{neural_renderer_forward.11} parent=5 // pred_check
        _
      $region46: #{neural_renderer_forward.11} parent=5 // pred_check_branch
        %334 = sbr.rel (%p331) target = $region48
      $region47: #{neural_renderer_forward.11} parent=5 // pred_region
        %s335 = ssub.s32 %s26, 1
        %s336 = smul.u32 3, %s31
        %p337 = scmp.lt.s32.totalorder %s336, 5
        %s338 = scalar_select %p337, %s336, 5
        %s339 = smul.addr %s338, 4
        %s340 = smul.addr %s339, 8
        %s341 = scalar_lea.vmem %s0, %s340
        %p342 = pneg %p52
        %p343 = pneg %p49
        %p344 = pneg %p73
        %p345 = pneg %p70
        %p346 = pneg %p94
        %p347 = pneg %p91
        %p348 = pneg %p115
        %p349 = pneg %p112
        %p350 = pneg %p136
        %p351 = pneg %p133
        %p352 = pneg %p157
        %p353 = pneg %p154
        %p354 = pneg %p178
        %p355 = pneg %p175
        %p356 = pneg %p204
        %p357 = pneg %p201
        %s358 = sand.u32 %s191, 1
        %s359 = scalar_lea.sflag [#allocation3], %s358
        %s360 = sand.u32 %s191, 1
        %s361 = smul.addr %s360, 144
        %s362 = scalar_lea.vmem [#allocation2], %s361
        %p363 = pneg %p230
        %p364 = pneg %p227
        %s365 = sand.u32 %s31, 1
        %s366 = scalar_lea.sflag [#allocation5], %s365
        %s367 = sand.u32 %s217, 1
        %s368 = smul.addr %s367, 72
        %s369 = scalar_lea.vmem [#allocation4], %s368
        %p370 = pneg %p256
        %p371 = pneg %p253
        %s372 = sand.u32 %s31, 1
        %s373 = scalar_lea.sflag [#allocation5], %s372
        %s374 = sand.u32 %s243, 1
        %s375 = smul.addr %s374, 36
        %s376 = scalar_lea.vmem [#allocation6], %s375
        %p377 = pneg %p282
        %p378 = pneg %p279
        %s379 = sand.u32 %s269, 1
        %s380 = scalar_lea.sflag [#allocation8], %s379
        %s381 = sand.u32 %s269, 1
        %s382 = smul.addr %s381, 12
        %s383 = scalar_lea.vmem [#allocation7], %s382
        %s384 = smul.u32 3, %s31
        %p385 = scmp.lt.s32.totalorder %s384, 5
        %s386 = scalar_select %p385, %s384, 5
        %s387 = smul.addr %s386, 4
        %s388 = smul.addr %s387, 8
        %s389 = scalar_lea.vmem %s0, %s388
        %s390 = smul.u32 3, %s31
        %s391 = smul.u32 3, %s31
        %s392 = smul.u32 3, %s31
        %s393 = smul.u32 3, %s31
        %s394 = smul.u32 3, %s31
        %v395 = vld [vmem:[%s389] sm:$0xff]
        %v396 = vld [vmem:[%s389 + $0x8] sm:$0xff]
        %v397 = vld [vmem:[%s389 + $0x10] sm:$0xff]
        %v398 = vld [vmem:[%s389 + $0x18] sm:$0xff]
        %v399 = vld [vmem:[%s1] sm:$0xff]
        %v400 = vld [vmem:[%s1 + $0x8] sm:$0xff]
        %v401 = vld [vmem:[%s1 + $0x10] sm:$0xff]
        %v402 = vld [vmem:[%s1 + $0x18] sm:$0xff]
        %vm403 = vcmask 261120
        %v405 = vsel %vm403, %v399, 0
        %v408 = vsel %vm403, %v400, 0
        %v411 = vsel %vm403, %v401, 0
        %v414 = vsel %vm403, %v402, 0
        %416 = vmatpush.msra.mxu0 0.0
        %417 = vmatpush.msra.mxu0 0.0
        %418 = vmatpush.msra.mxu0 0.0
        %419 = vmatpush.msra.mxu0 0.0
        %420 = vmatpush.msra.mxu0 0.0
        %421 = vmatpush.msra.mxu0 0.0
        %422 = vmatpush.msra.mxu0 0.0
        %423 = vmatpush.msra.mxu0 0.0
        %424 = vmatpush.msra.mxu0 0.0
        %425 = vmatpush.msra.mxu0 0.0
        %426 = vmatpush.msra.mxu0 0.0
        %427 = vmatpush.msra.mxu0 0.0
        %428 = vmatpush.msra.mxu0 %v398
        %429 = vmatpush.msra.mxu0 %v397
        %430 = vmatpush.msra.mxu0 %v396
        %431 = vmatpush.msra.mxu0 %v395
        %432 = vmatmul.f32.gmra.mxu0 %v405
        %v433 = vpop.f32.mrf.mxu0
        %v434 = vadd.f32 0.0, %v433
        %435 = vmatmul.f32.gmra.mxu0 %v408
        %v436 = vpop.f32.mrf.mxu0
        %v437 = vadd.f32 0.0, %v436
        %438 = vmatmul.f32.gmra.mxu0 %v411
        %v439 = vpop.f32.mrf.mxu0
        %v440 = vadd.f32 0.0, %v439
        %441 = vmatmul.f32.gmra.mxu0 %v414
        %v442 = vpop.f32.mrf.mxu0
        %v443 = vadd.f32 0.0, %v442
        %444 = vdwg.mxu0
        %v445 = vld [vmem:[%s2] sm:$0xff]
        %v446 = vld [vmem:[%s2 + $0x8] sm:$0xff]
        %v447 = vld [vmem:[%s2 + $0x10] sm:$0xff]
        %v448 = vld [vmem:[%s2 + $0x18] sm:$0xff]
        %v450 = vsel %vm403, %v434, 0
        %v453 = vsel %vm403, %v437, 0
        %v456 = vsel %vm403, %v440, 0
        %v459 = vsel %vm403, %v443, 0
        %461 = vmatpush.msra.mxu0 0.0
        %462 = vmatpush.msra.mxu0 0.0
        %463 = vmatpush.msra.mxu0 0.0
        %464 = vmatpush.msra.mxu0 0.0
        %465 = vmatpush.msra.mxu0 0.0
        %466 = vmatpush.msra.mxu0 0.0
        %467 = vmatpush.msra.mxu0 0.0
        %468 = vmatpush.msra.mxu0 0.0
        %469 = vmatpush.msra.mxu0 0.0
        %470 = vmatpush.msra.mxu0 0.0
        %471 = vmatpush.msra.mxu0 0.0
        %472 = vmatpush.msra.mxu0 0.0
        %473 = vmatpush.msra.mxu0 %v448
        %474 = vmatpush.msra.mxu0 %v447
        %475 = vmatpush.msra.mxu0 %v446
        %476 = vmatpush.msra.mxu0 %v445
        %477 = vmatmul.f32.gmra.mxu0 %v450
        %v478 = vpop.f32.mrf.mxu0
        %v479 = vadd.f32 0.0, %v478
        %480 = vmatmul.f32.gmra.mxu0 %v453
        %v481 = vpop.f32.mrf.mxu0
        %v482 = vadd.f32 0.0, %v481
        %483 = vmatmul.f32.gmra.mxu0 %v456
        %v484 = vpop.f32.mrf.mxu0
        %v485 = vadd.f32 0.0, %v484
        %486 = vmatmul.f32.gmra.mxu0 %v459
        %v487 = vpop.f32.mrf.mxu0
        %v488 = vadd.f32 0.0, %v487
        %489 = vdwg.mxu0
        %492 = vrot.lane.b32.xlu0 %v479, 112
        %v493 = vpop.permute.xlu0 %492
        %494 = vrot.lane.b32.xlu0 %v482, 112
        %v495 = vpop.permute.xlu0 %494
        %vm498 = vcmask 130048
        %499 = vst.msk [vmem:[%s362] sm:$0xff] %vm498, %v493
        %500 = vst.msk [vmem:[%s362 + $0x8] sm:$0xff] %vm498, %v495
        %s501 = scalar_lea.vmem %s362, 16 [#allocation2]
        %502 = vst.msk [vmem:[%s501] sm:$0xff] %vm498, %v485
        %503 = vst.msk [vmem:[%s501 + $0x8] sm:$0xff] %vm498, %v488
        %506 = vrot.lane.b32.xlu0 %v485, 112
        %v507 = vpop.permute.xlu0 %506
        %508 = vrot.lane.b32.xlu0 %v488, 112
        %v509 = vpop.permute.xlu0 %508
        %s512 = scalar_lea.vmem %s362, 32 [#allocation2]
        %513 = vst.msk [vmem:[%s512] sm:$0xff] %vm498, %v507
        %514 = vst.msk [vmem:[%s512 + $0x8] sm:$0xff] %vm498, %v509
        %v515 = vld [vmem:[%s3] sm:$0xff]
        %v516 = vld [vmem:[%s3 + $0x8] sm:$0xff]
        %v518 = vsel %vm498, %v515, 0
        %v521 = vsel %vm498, %v516, 0
        %523 = vmatpush.msra.mxu0 0.0
        %524 = vmatpush.msra.mxu0 0.0
        %525 = vmatpush.msra.mxu0 0.0
        %526 = vmatpush.msra.mxu0 0.0
        %527 = vmatpush.msra.mxu0 0.0
        %528 = vmatpush.msra.mxu0 0.0
        %529 = vmatpush.msra.mxu0 0.0
        %530 = vmatpush.msra.mxu0 0.0
        %531 = vmatpush.msra.mxu0 0.0
        %532 = vmatpush.msra.mxu0 0.0
        %533 = vmatpush.msra.mxu0 0.0
        %534 = vmatpush.msra.mxu0 0.0
        %535 = vmatpush.msra.mxu0 0.0
        %536 = vmatpush.msra.mxu0 0.0
        %537 = vmatpush.msra.mxu0 %v482
        %538 = vmatpush.msra.mxu0 %v479
        %539 = vmatmul.f32.gmra.mxu0 %v518
        %v540 = vpop.f32.mrf.mxu0
        %v541 = vadd.f32 0.0, %v540
        %542 = vmatmul.f32.gmra.mxu0 %v521
        %v543 = vpop.f32.mrf.mxu0
        %v544 = vadd.f32 0.0, %v543
        %545 = vdwg.mxu0
        %v546 = vld [vmem:[%s4] sm:$0xff]
        %v547 = vld [vmem:[%s4 + $0x8] sm:$0xff]
        %v549 = vsel %vm498, %v541, 0
        %v552 = vsel %vm498, %v544, 0
        %554 = vmatpush.msra.mxu0 0.0
        %555 = vmatpush.msra.mxu0 0.0
        %556 = vmatpush.msra.mxu0 0.0
        %557 = vmatpush.msra.mxu0 0.0
        %558 = vmatpush.msra.mxu0 0.0
        %559 = vmatpush.msra.mxu0 0.0
        %560 = vmatpush.msra.mxu0 0.0
        %561 = vmatpush.msra.mxu0 0.0
        %562 = vmatpush.msra.mxu0 0.0
        %563 = vmatpush.msra.mxu0 0.0
        %564 = vmatpush.msra.mxu0 0.0
        %565 = vmatpush.msra.mxu0 0.0
        %566 = vmatpush.msra.mxu0 0.0
        %567 = vmatpush.msra.mxu0 0.0
        %568 = vmatpush.msra.mxu0 %v547
        %569 = vmatpush.msra.mxu0 %v546
        %570 = vmatmul.f32.gmra.mxu0 %v549
        %v571 = vpop.f32.mrf.mxu0
        %v572 = vadd.f32 0.0, %v571
        %573 = vmatmul.f32.gmra.mxu0 %v552
        %v574 = vpop.f32.mrf.mxu0
        %v575 = vadd.f32 0.0, %v574
        %576 = vdwg.mxu0
        %578 = vrot.lane.b32.xlu0 %v572, 120
        %v579 = vpop.permute.xlu0 %578
        %vm581 = vcmask 64512
        %582 = vst.msk [vmem:[%s369] sm:$0xff] %vm581, %v579
        %s583 = scalar_lea.vmem %s369, 8 [#allocation4]
        %584 = vst.msk [vmem:[%s583] sm:$0xff] %vm581, %v575
        %586 = vrot.lane.b32.xlu0 %v575, 120
        %v587 = vpop.permute.xlu0 %586
        %s589 = scalar_lea.vmem %s369, 16 [#allocation4]
        %590 = vst.msk [vmem:[%s589] sm:$0xff] %vm581, %v587
        %v591 = vld [vmem:[%s5] sm:$0xff]
        %v593 = vsel %vm581, %v591, 0
        %595 = vmatpush.msra.mxu0 0.0
        %596 = vmatpush.msra.mxu0 0.0
        %597 = vmatpush.msra.mxu0 0.0
        %598 = vmatpush.msra.mxu0 0.0
        %599 = vmatpush.msra.mxu0 0.0
        %600 = vmatpush.msra.mxu0 0.0
        %601 = vmatpush.msra.mxu0 0.0
        %602 = vmatpush.msra.mxu0 0.0
        %603 = vmatpush.msra.mxu0 0.0
        %604 = vmatpush.msra.mxu0 0.0
        %605 = vmatpush.msra.mxu0 0.0
        %606 = vmatpush.msra.mxu0 0.0
        %607 = vmatpush.msra.mxu0 0.0
        %608 = vmatpush.msra.mxu0 0.0
        %609 = vmatpush.msra.mxu0 0.0
        %610 = vmatpush.msra.mxu0 %v572
        %611 = vmatmul.f32.gmra.mxu0 %v593
        %v612 = vpop.f32.mrf.mxu0
        %v613 = vadd.f32 0.0, %v612
        %614 = vdwg.mxu0
        %v615 = vld [vmem:[%s6] sm:$0xff]
        %v617 = vsel %vm581, %v613, 0
        %619 = vmatpush.msra.mxu0 0.0
        %620 = vmatpush.msra.mxu0 0.0
        %621 = vmatpush.msra.mxu0 0.0
        %622 = vmatpush.msra.mxu0 0.0
        %623 = vmatpush.msra.mxu0 0.0
        %624 = vmatpush.msra.mxu0 0.0
        %625 = vmatpush.msra.mxu0 0.0
        %626 = vmatpush.msra.mxu0 0.0
        %627 = vmatpush.msra.mxu0 0.0
        %628 = vmatpush.msra.mxu0 0.0
        %629 = vmatpush.msra.mxu0 0.0
        %630 = vmatpush.msra.mxu0 0.0
        %631 = vmatpush.msra.mxu0 0.0
        %632 = vmatpush.msra.mxu0 0.0
        %633 = vmatpush.msra.mxu0 0.0
        %634 = vmatpush.msra.mxu0 %v615
        %635 = vmatmul.f32.gmra.mxu0 %v617
        %v636 = vpop.f32.mrf.mxu0
        %v637 = vadd.f32 0.0, %v636
        %638 = vdwg.mxu0
        %640 = vrot.lane.b32.xlu0 %v637, 124
        %v641 = vpop.permute.xlu0 %640
        %vm643 = vcmask 27648
        %644 = vst.msk [vmem:[%s376] sm:$0xf] %vm643, %v641
        %s645 = scalar_lea.vmem %s376, 4 [#allocation6]
        %vm646 = vcmask 31748
        %647 = vst.msk [vmem:[%s645 - $0x4] sm:$0xf0] %vm646, %v637
        %s648 = scalar_lea.vmem %s376, 8 [#allocation6]
        %649 = vst.msk [vmem:[%s648 - $0x4] sm:$0xf0] %vm646, %v641
        %650 = vst.msk [vmem:[%s383] sm:$0xf] %vm643, %v637
        %s651 = scalar_lea.vmem %s389, 32
        %v652 = vld [vmem:[%s651] sm:$0xff]
        %v653 = vld [vmem:[%s651 + $0x8] sm:$0xff]
        %v654 = vld [vmem:[%s651 + $0x10] sm:$0xff]
        %v655 = vld [vmem:[%s651 + $0x18] sm:$0xff]
        %v656 = vld [vmem:[%s1] sm:$0xff]
        %v657 = vld [vmem:[%s1 + $0x8] sm:$0xff]
        %v658 = vld [vmem:[%s1 + $0x10] sm:$0xff]
        %v659 = vld [vmem:[%s1 + $0x18] sm:$0xff]
        %v661 = vsel %vm403, %v656, 0
        %v664 = vsel %vm403, %v657, 0
        %v667 = vsel %vm403, %v658, 0
        %v670 = vsel %vm403, %v659, 0
        %672 = vmatpush.msra.mxu0 0.0
        %673 = vmatpush.msra.mxu0 0.0
        %674 = vmatpush.msra.mxu0 0.0
        %675 = vmatpush.msra.mxu0 0.0
        %676 = vmatpush.msra.mxu0 0.0
        %677 = vmatpush.msra.mxu0 0.0
        %678 = vmatpush.msra.mxu0 0.0
        %679 = vmatpush.msra.mxu0 0.0
        %680 = vmatpush.msra.mxu0 0.0
        %681 = vmatpush.msra.mxu0 0.0
        %682 = vmatpush.msra.mxu0 0.0
        %683 = vmatpush.msra.mxu0 0.0
        %684 = vmatpush.msra.mxu0 %v655
        %685 = vmatpush.msra.mxu0 %v654
        %686 = vmatpush.msra.mxu0 %v653
        %687 = vmatpush.msra.mxu0 %v652
        %688 = vmatmul.f32.gmra.mxu0 %v661
        %v689 = vpop.f32.mrf.mxu0
        %v690 = vadd.f32 0.0, %v689
        %691 = vmatmul.f32.gmra.mxu0 %v664
        %v692 = vpop.f32.mrf.mxu0
        %v693 = vadd.f32 0.0, %v692
        %694 = vmatmul.f32.gmra.mxu0 %v667
        %v695 = vpop.f32.mrf.mxu0
        %v696 = vadd.f32 0.0, %v695
        %697 = vmatmul.f32.gmra.mxu0 %v670
        %v698 = vpop.f32.mrf.mxu0
        %v699 = vadd.f32 0.0, %v698
        %700 = vdwg.mxu0
        %v701 = vld [vmem:[%s2] sm:$0xff]
        %v702 = vld [vmem:[%s2 + $0x8] sm:$0xff]
        %v703 = vld [vmem:[%s2 + $0x10] sm:$0xff]
        %v704 = vld [vmem:[%s2 + $0x18] sm:$0xff]
        %v706 = vsel %vm403, %v690, 0
        %v709 = vsel %vm403, %v693, 0
        %v712 = vsel %vm403, %v696, 0
        %v715 = vsel %vm403, %v699, 0
        %717 = vmatpush.msra.mxu0 0.0
        %718 = vmatpush.msra.mxu0 0.0
        %719 = vmatpush.msra.mxu0 0.0
        %720 = vmatpush.msra.mxu0 0.0
        %721 = vmatpush.msra.mxu0 0.0
        %722 = vmatpush.msra.mxu0 0.0
        %723 = vmatpush.msra.mxu0 0.0
        %724 = vmatpush.msra.mxu0 0.0
        %725 = vmatpush.msra.mxu0 0.0
        %726 = vmatpush.msra.mxu0 0.0
        %727 = vmatpush.msra.mxu0 0.0
        %728 = vmatpush.msra.mxu0 0.0
        %729 = vmatpush.msra.mxu0 %v704
        %730 = vmatpush.msra.mxu0 %v703
        %731 = vmatpush.msra.mxu0 %v702
        %732 = vmatpush.msra.mxu0 %v701
        %733 = vmatmul.f32.gmra.mxu0 %v706
        %v734 = vpop.f32.mrf.mxu0
        %v735 = vadd.f32 0.0, %v734
        %736 = vmatmul.f32.gmra.mxu0 %v709
        %v737 = vpop.f32.mrf.mxu0
        %v738 = vadd.f32 0.0, %v737
        %739 = vmatmul.f32.gmra.mxu0 %v712
        %v740 = vpop.f32.mrf.mxu0
        %v741 = vadd.f32 0.0, %v740
        %742 = vmatmul.f32.gmra.mxu0 %v715
        %v743 = vpop.f32.mrf.mxu0
        %v744 = vadd.f32 0.0, %v743
        %745 = vdwg.mxu0
        %748 = vrot.lane.b32.xlu0 %v735, 112
        %v749 = vpop.permute.xlu0 %748
        %750 = vrot.lane.b32.xlu0 %v738, 112
        %v751 = vpop.permute.xlu0 %750
        %s754 = scalar_lea.vmem %s362, 48 [#allocation2]
        %755 = vst.msk [vmem:[%s754] sm:$0xff] %vm498, %v749
        %756 = vst.msk [vmem:[%s754 + $0x8] sm:$0xff] %vm498, %v751
        %s757 = scalar_lea.vmem %s362, 64 [#allocation2]
        %758 = vst.msk [vmem:[%s757] sm:$0xff] %vm498, %v741
        %759 = vst.msk [vmem:[%s757 + $0x8] sm:$0xff] %vm498, %v744
        %762 = vrot.lane.b32.xlu0 %v741, 112
        %v763 = vpop.permute.xlu0 %762
        %764 = vrot.lane.b32.xlu0 %v744, 112
        %v765 = vpop.permute.xlu0 %764
        %s768 = scalar_lea.vmem %s362, 80 [#allocation2]
        %769 = vst.msk [vmem:[%s768] sm:$0xff] %vm498, %v763
        %770 = vst.msk [vmem:[%s768 + $0x8] sm:$0xff] %vm498, %v765
        %v771 = vld [vmem:[%s3] sm:$0xff]
        %v772 = vld [vmem:[%s3 + $0x8] sm:$0xff]
        %v774 = vsel %vm498, %v771, 0
        %v777 = vsel %vm498, %v772, 0
        %779 = vmatpush.msra.mxu0 0.0
        %780 = vmatpush.msra.mxu0 0.0
        %781 = vmatpush.msra.mxu0 0.0
        %782 = vmatpush.msra.mxu0 0.0
        %783 = vmatpush.msra.mxu0 0.0
        %784 = vmatpush.msra.mxu0 0.0
        %785 = vmatpush.msra.mxu0 0.0
        %786 = vmatpush.msra.mxu0 0.0
        %787 = vmatpush.msra.mxu0 0.0
        %788 = vmatpush.msra.mxu0 0.0
        %789 = vmatpush.msra.mxu0 0.0
        %790 = vmatpush.msra.mxu0 0.0
        %791 = vmatpush.msra.mxu0 0.0
        %792 = vmatpush.msra.mxu0 0.0
        %793 = vmatpush.msra.mxu0 %v738
        %794 = vmatpush.msra.mxu0 %v735
        %795 = vmatmul.f32.gmra.mxu0 %v774
        %v796 = vpop.f32.mrf.mxu0
        %v797 = vadd.f32 0.0, %v796
        %798 = vmatmul.f32.gmra.mxu0 %v777
        %v799 = vpop.f32.mrf.mxu0
        %v800 = vadd.f32 0.0, %v799
        %801 = vdwg.mxu0
        %v802 = vld [vmem:[%s4] sm:$0xff]
        %v803 = vld [vmem:[%s4 + $0x8] sm:$0xff]
        %v805 = vsel %vm498, %v797, 0
        %v808 = vsel %vm498, %v800, 0
        %810 = vmatpush.msra.mxu0 0.0
        %811 = vmatpush.msra.mxu0 0.0
        %812 = vmatpush.msra.mxu0 0.0
        %813 = vmatpush.msra.mxu0 0.0
        %814 = vmatpush.msra.mxu0 0.0
        %815 = vmatpush.msra.mxu0 0.0
        %816 = vmatpush.msra.mxu0 0.0
        %817 = vmatpush.msra.mxu0 0.0
        %818 = vmatpush.msra.mxu0 0.0
        %819 = vmatpush.msra.mxu0 0.0
        %820 = vmatpush.msra.mxu0 0.0
        %821 = vmatpush.msra.mxu0 0.0
        %822 = vmatpush.msra.mxu0 0.0
        %823 = vmatpush.msra.mxu0 0.0
        %824 = vmatpush.msra.mxu0 %v803
        %825 = vmatpush.msra.mxu0 %v802
        %826 = vmatmul.f32.gmra.mxu0 %v805
        %v827 = vpop.f32.mrf.mxu0
        %v828 = vadd.f32 0.0, %v827
        %829 = vmatmul.f32.gmra.mxu0 %v808
        %v830 = vpop.f32.mrf.mxu0
        %v831 = vadd.f32 0.0, %v830
        %832 = vdwg.mxu0
        %834 = vrot.lane.b32.xlu0 %v828, 120
        %v835 = vpop.permute.xlu0 %834
        %s837 = scalar_lea.vmem %s369, 24 [#allocation4]
        %838 = vst.msk [vmem:[%s837] sm:$0xff] %vm581, %v835
        %s839 = scalar_lea.vmem %s369, 32 [#allocation4]
        %840 = vst.msk [vmem:[%s839] sm:$0xff] %vm581, %v831
        %842 = vrot.lane.b32.xlu0 %v831, 120
        %v843 = vpop.permute.xlu0 %842
        %s845 = scalar_lea.vmem %s369, 40 [#allocation4]
        %846 = vst.msk [vmem:[%s845] sm:$0xff] %vm581, %v843
        %v847 = vld [vmem:[%s5] sm:$0xff]
        %v849 = vsel %vm581, %v847, 0
        %851 = vmatpush.msra.mxu0 0.0
        %852 = vmatpush.msra.mxu0 0.0
        %853 = vmatpush.msra.mxu0 0.0
        %854 = vmatpush.msra.mxu0 0.0
        %855 = vmatpush.msra.mxu0 0.0
        %856 = vmatpush.msra.mxu0 0.0
        %857 = vmatpush.msra.mxu0 0.0
        %858 = vmatpush.msra.mxu0 0.0
        %859 = vmatpush.msra.mxu0 0.0
        %860 = vmatpush.msra.mxu0 0.0
        %861 = vmatpush.msra.mxu0 0.0
        %862 = vmatpush.msra.mxu0 0.0
        %863 = vmatpush.msra.mxu0 0.0
        %864 = vmatpush.msra.mxu0 0.0
        %865 = vmatpush.msra.mxu0 0.0
        %866 = vmatpush.msra.mxu0 %v828
        %867 = vmatmul.f32.gmra.mxu0 %v849
        %v868 = vpop.f32.mrf.mxu0
        %v869 = vadd.f32 0.0, %v868
        %870 = vdwg.mxu0
        %v871 = vld [vmem:[%s6] sm:$0xff]
        %v873 = vsel %vm581, %v869, 0
        %875 = vmatpush.msra.mxu0 0.0
        %876 = vmatpush.msra.mxu0 0.0
        %877 = vmatpush.msra.mxu0 0.0
        %878 = vmatpush.msra.mxu0 0.0
        %879 = vmatpush.msra.mxu0 0.0
        %880 = vmatpush.msra.mxu0 0.0
        %881 = vmatpush.msra.mxu0 0.0
        %882 = vmatpush.msra.mxu0 0.0
        %883 = vmatpush.msra.mxu0 0.0
        %884 = vmatpush.msra.mxu0 0.0
        %885 = vmatpush.msra.mxu0 0.0
        %886 = vmatpush.msra.mxu0 0.0
        %887 = vmatpush.msra.mxu0 0.0
        %888 = vmatpush.msra.mxu0 0.0
        %889 = vmatpush.msra.mxu0 0.0
        %890 = vmatpush.msra.mxu0 %v871
        %891 = vmatmul.f32.gmra.mxu0 %v873
        %v892 = vpop.f32.mrf.mxu0
        %v893 = vadd.f32 0.0, %v892
        %894 = vdwg.mxu0
        %896 = vrot.lane.b32.xlu0 %v893, 124
        %v897 = vpop.permute.xlu0 %896
        %s899 = scalar_lea.vmem %s376, 12 [#allocation6]
        %900 = vst.msk [vmem:[%s899] sm:$0xf] %vm643, %v897
        %s901 = scalar_lea.vmem %s376, 16 [#allocation6]
        %902 = vst.msk [vmem:[%s901 - $0x4] sm:$0xf0] %vm646, %v893
        %s903 = scalar_lea.vmem %s376, 20 [#allocation6]
        %904 = vst.msk [vmem:[%s903 - $0x4] sm:$0xf0] %vm646, %v897
        %s905 = scalar_lea.vmem %s383, 4 [#allocation7]
        %906 = vst.msk [vmem:[%s905] sm:$0xf] %vm643, %v893
        %s907 = scalar_lea.vmem %s389, 64
        %v908 = vld [vmem:[%s907] sm:$0xff]
        %v909 = vld [vmem:[%s907 + $0x8] sm:$0xff]
        %v910 = vld [vmem:[%s907 + $0x10] sm:$0xff]
        %v911 = vld [vmem:[%s907 + $0x18] sm:$0xff]
        %v912 = vld [vmem:[%s1] sm:$0xff]
        %v913 = vld [vmem:[%s1 + $0x8] sm:$0xff]
        %v914 = vld [vmem:[%s1 + $0x10] sm:$0xff]
        %v915 = vld [vmem:[%s1 + $0x18] sm:$0xff]
        %v917 = vsel %vm403, %v912, 0
        %v920 = vsel %vm403, %v913, 0
        %v923 = vsel %vm403, %v914, 0
        %v926 = vsel %vm403, %v915, 0
        %928 = vmatpush.msra.mxu0 0.0
        %929 = vmatpush.msra.mxu0 0.0
        %930 = vmatpush.msra.mxu0 0.0
        %931 = vmatpush.msra.mxu0 0.0
        %932 = vmatpush.msra.mxu0 0.0
        %933 = vmatpush.msra.mxu0 0.0
        %934 = vmatpush.msra.mxu0 0.0
        %935 = vmatpush.msra.mxu0 0.0
        %936 = vmatpush.msra.mxu0 0.0
        %937 = vmatpush.msra.mxu0 0.0
        %938 = vmatpush.msra.mxu0 0.0
        %939 = vmatpush.msra.mxu0 0.0
        %940 = vmatpush.msra.mxu0 %v911
        %941 = vmatpush.msra.mxu0 %v910
        %942 = vmatpush.msra.mxu0 %v909
        %943 = vmatpush.msra.mxu0 %v908
        %944 = vmatmul.f32.gmra.mxu0 %v917
        %v945 = vpop.f32.mrf.mxu0
        %v946 = vadd.f32 0.0, %v945
        %947 = vmatmul.f32.gmra.mxu0 %v920
        %v948 = vpop.f32.mrf.mxu0
        %v949 = vadd.f32 0.0, %v948
        %950 = vmatmul.f32.gmra.mxu0 %v923
        %v951 = vpop.f32.mrf.mxu0
        %v952 = vadd.f32 0.0, %v951
        %953 = vmatmul.f32.gmra.mxu0 %v926
        %v954 = vpop.f32.mrf.mxu0
        %v955 = vadd.f32 0.0, %v954
        %956 = vdwg.mxu0
        %v957 = vld [vmem:[%s2] sm:$0xff]
        %v958 = vld [vmem:[%s2 + $0x8] sm:$0xff]
        %v959 = vld [vmem:[%s2 + $0x10] sm:$0xff]
        %v960 = vld [vmem:[%s2 + $0x18] sm:$0xff]
        %v962 = vsel %vm403, %v946, 0
        %v965 = vsel %vm403, %v949, 0
        %v968 = vsel %vm403, %v952, 0
        %v971 = vsel %vm403, %v955, 0
        %973 = vmatpush.msra.mxu0 0.0
        %974 = vmatpush.msra.mxu0 0.0
        %975 = vmatpush.msra.mxu0 0.0
        %976 = vmatpush.msra.mxu0 0.0
        %977 = vmatpush.msra.mxu0 0.0
        %978 = vmatpush.msra.mxu0 0.0
        %979 = vmatpush.msra.mxu0 0.0
        %980 = vmatpush.msra.mxu0 0.0
        %981 = vmatpush.msra.mxu0 0.0
        %982 = vmatpush.msra.mxu0 0.0
        %983 = vmatpush.msra.mxu0 0.0
        %984 = vmatpush.msra.mxu0 0.0
        %985 = vmatpush.msra.mxu0 %v960
        %986 = vmatpush.msra.mxu0 %v959
        %987 = vmatpush.msra.mxu0 %v958
        %988 = vmatpush.msra.mxu0 %v957
        %989 = vmatmul.f32.gmra.mxu0 %v962
        %v990 = vpop.f32.mrf.mxu0
        %v991 = vadd.f32 0.0, %v990
        %992 = vmatmul.f32.gmra.mxu0 %v965
        %v993 = vpop.f32.mrf.mxu0
        %v994 = vadd.f32 0.0, %v993
        %995 = vmatmul.f32.gmra.mxu0 %v968
        %v996 = vpop.f32.mrf.mxu0
        %v997 = vadd.f32 0.0, %v996
        %998 = vmatmul.f32.gmra.mxu0 %v971
        %v999 = vpop.f32.mrf.mxu0
        %v1000 = vadd.f32 0.0, %v999
        %1001 = vdwg.mxu0
        %1004 = vrot.lane.b32.xlu0 %v991, 112
        %v1005 = vpop.permute.xlu0 %1004
        %1006 = vrot.lane.b32.xlu0 %v994, 112
        %v1007 = vpop.permute.xlu0 %1006
        %s1010 = scalar_lea.vmem %s362, 96 [#allocation2]
        %1011 = vst.msk [vmem:[%s1010] sm:$0xff] %vm498, %v1005
        %1012 = vst.msk [vmem:[%s1010 + $0x8] sm:$0xff] %vm498, %v1007
        %s1013 = scalar_lea.vmem %s362, 112 [#allocation2]
        %1014 = vst.msk [vmem:[%s1013] sm:$0xff] %vm498, %v997
        %1015 = vst.msk [vmem:[%s1013 + $0x8] sm:$0xff] %vm498, %v1000
        %1018 = vrot.lane.b32.xlu0 %v997, 112
        %v1019 = vpop.permute.xlu0 %1018
        %1020 = vrot.lane.b32.xlu0 %v1000, 112
        %v1021 = vpop.permute.xlu0 %1020
        %s1024 = scalar_lea.vmem %s362, 128 [#allocation2]
        %1025 = vst.msk [vmem:[%s1024] sm:$0xff] %vm498, %v1019
        %1026 = vst.msk [vmem:[%s1024 + $0x8] sm:$0xff] %vm498, %v1021
        %v1027 = vld [vmem:[%s3] sm:$0xff]
        %v1028 = vld [vmem:[%s3 + $0x8] sm:$0xff]
        %v1030 = vsel %vm498, %v1027, 0
        %v1033 = vsel %vm498, %v1028, 0
        %1035 = vmatpush.msra.mxu0 0.0
        %1036 = vmatpush.msra.mxu0 0.0
        %1037 = vmatpush.msra.mxu0 0.0
        %1038 = vmatpush.msra.mxu0 0.0
        %1039 = vmatpush.msra.mxu0 0.0
        %1040 = vmatpush.msra.mxu0 0.0
        %1041 = vmatpush.msra.mxu0 0.0
        %1042 = vmatpush.msra.mxu0 0.0
        %1043 = vmatpush.msra.mxu0 0.0
        %1044 = vmatpush.msra.mxu0 0.0
        %1045 = vmatpush.msra.mxu0 0.0
        %1046 = vmatpush.msra.mxu0 0.0
        %1047 = vmatpush.msra.mxu0 0.0
        %1048 = vmatpush.msra.mxu0 0.0
        %1049 = vmatpush.msra.mxu0 %v994
        %1050 = vmatpush.msra.mxu0 %v991
        %1051 = vmatmul.f32.gmra.mxu0 %v1030
        %v1052 = vpop.f32.mrf.mxu0
        %v1053 = vadd.f32 0.0, %v1052
        %1054 = vmatmul.f32.gmra.mxu0 %v1033
        %v1055 = vpop.f32.mrf.mxu0
        %v1056 = vadd.f32 0.0, %v1055
        %1057 = vdwg.mxu0
        %v1058 = vld [vmem:[%s4] sm:$0xff]
        %v1059 = vld [vmem:[%s4 + $0x8] sm:$0xff]
        %v1061 = vsel %vm498, %v1053, 0
        %v1064 = vsel %vm498, %v1056, 0
        %1066 = vmatpush.msra.mxu0 0.0
        %1067 = vmatpush.msra.mxu0 0.0
        %1068 = vmatpush.msra.mxu0 0.0
        %1069 = vmatpush.msra.mxu0 0.0
        %1070 = vmatpush.msra.mxu0 0.0
        %1071 = vmatpush.msra.mxu0 0.0
        %1072 = vmatpush.msra.mxu0 0.0
        %1073 = vmatpush.msra.mxu0 0.0
        %1074 = vmatpush.msra.mxu0 0.0
        %1075 = vmatpush.msra.mxu0 0.0
        %1076 = vmatpush.msra.mxu0 0.0
        %1077 = vmatpush.msra.mxu0 0.0
        %1078 = vmatpush.msra.mxu0 0.0
        %1079 = vmatpush.msra.mxu0 0.0
        %1080 = vmatpush.msra.mxu0 %v1059
        %1081 = vmatpush.msra.mxu0 %v1058
        %1082 = vmatmul.f32.gmra.mxu0 %v1061
        %v1083 = vpop.f32.mrf.mxu0
        %v1084 = vadd.f32 0.0, %v1083
        %1085 = vmatmul.f32.gmra.mxu0 %v1064
        %v1086 = vpop.f32.mrf.mxu0
        %v1087 = vadd.f32 0.0, %v1086
        %1088 = vdwg.mxu0
        %1090 = vrot.lane.b32.xlu0 %v1084, 120
        %v1091 = vpop.permute.xlu0 %1090
        %s1093 = scalar_lea.vmem %s369, 48 [#allocation4]
        %1094 = vst.msk [vmem:[%s1093] sm:$0xff] %vm581, %v1091
        %s1095 = scalar_lea.vmem %s369, 56 [#allocation4]
        %1096 = vst.msk [vmem:[%s1095] sm:$0xff] %vm581, %v1087
        %1098 = vrot.lane.b32.xlu0 %v1087, 120
        %v1099 = vpop.permute.xlu0 %1098
        %s1101 = scalar_lea.vmem %s369, 64 [#allocation4]
        %1102 = vst.msk [vmem:[%s1101] sm:$0xff] %vm581, %v1099
        %v1103 = vld [vmem:[%s5] sm:$0xff]
        %v1105 = vsel %vm581, %v1103, 0
        %1107 = vmatpush.msra.mxu0 0.0
        %1108 = vmatpush.msra.mxu0 0.0
        %1109 = vmatpush.msra.mxu0 0.0
        %1110 = vmatpush.msra.mxu0 0.0
        %1111 = vmatpush.msra.mxu0 0.0
        %1112 = vmatpush.msra.mxu0 0.0
        %1113 = vmatpush.msra.mxu0 0.0
        %1114 = vmatpush.msra.mxu0 0.0
        %1115 = vmatpush.msra.mxu0 0.0
        %1116 = vmatpush.msra.mxu0 0.0
        %1117 = vmatpush.msra.mxu0 0.0
        %1118 = vmatpush.msra.mxu0 0.0
        %1119 = vmatpush.msra.mxu0 0.0
        %1120 = vmatpush.msra.mxu0 0.0
        %1121 = vmatpush.msra.mxu0 0.0
        %1122 = vmatpush.msra.mxu0 %v1084
        %1123 = vmatmul.f32.gmra.mxu0 %v1105
        %v1124 = vpop.f32.mrf.mxu0
        %v1125 = vadd.f32 0.0, %v1124
        %1126 = vdwg.mxu0
        %v1127 = vld [vmem:[%s6] sm:$0xff]
        %v1129 = vsel %vm581, %v1125, 0
        %1131 = vmatpush.msra.mxu0 0.0
        %1132 = vmatpush.msra.mxu0 0.0
        %1133 = vmatpush.msra.mxu0 0.0
        %1134 = vmatpush.msra.mxu0 0.0
        %1135 = vmatpush.msra.mxu0 0.0
        %1136 = vmatpush.msra.mxu0 0.0
        %1137 = vmatpush.msra.mxu0 0.0
        %1138 = vmatpush.msra.mxu0 0.0
        %1139 = vmatpush.msra.mxu0 0.0
        %1140 = vmatpush.msra.mxu0 0.0
        %1141 = vmatpush.msra.mxu0 0.0
        %1142 = vmatpush.msra.mxu0 0.0
        %1143 = vmatpush.msra.mxu0 0.0
        %1144 = vmatpush.msra.mxu0 0.0
        %1145 = vmatpush.msra.mxu0 0.0
        %1146 = vmatpush.msra.mxu0 %v1127
        %1147 = vmatmul.f32.gmra.mxu0 %v1129
        %v1148 = vpop.f32.mrf.mxu0
        %v1149 = vadd.f32 0.0, %v1148
        %1150 = vdwg.mxu0
        %1152 = vrot.lane.b32.xlu0 %v1149, 124
        %v1153 = vpop.permute.xlu0 %1152
        %s1155 = scalar_lea.vmem %s376, 24 [#allocation6]
        %1156 = vst.msk [vmem:[%s1155] sm:$0xf] %vm643, %v1153
        %s1157 = scalar_lea.vmem %s376, 28 [#allocation6]
        %1158 = vst.msk [vmem:[%s1157 - $0x4] sm:$0xf0] %vm646, %v1149
        %s1159 = scalar_lea.vmem %s376, 32 [#allocation6]
        %1160 = vst.msk [vmem:[%s1159 - $0x4] sm:$0xf0] %vm646, %v1153
        %s1161 = scalar_lea.vmem %s383, 8 [#allocation7]
        %1162 = vst.msk [vmem:[%s1161] sm:$0xf] %vm643, %v1149
        %s1163 = sand.u32 %s191, 1
        %s1164 = scalar_lea.sflag [#allocation3], %s1163
        %s1165 = sand.u32 %s191, 1
        %s1166 = smul.addr %s1165, 144
        %s1167 = scalar_lea.vmem [#allocation2], %s1166
        %s1168 = sand.u32 %s31, 1
        %s1169 = scalar_lea.sflag [#allocation5], %s1168
        %s1170 = sand.u32 %s217, 1
        %s1171 = smul.addr %s1170, 72
        %s1172 = scalar_lea.vmem [#allocation4], %s1171
        %s1173 = sand.u32 %s31, 1
        %s1174 = scalar_lea.sflag [#allocation5], %s1173
        %s1175 = sand.u32 %s243, 1
        %s1176 = smul.addr %s1175, 36
        %s1177 = scalar_lea.vmem [#allocation6], %s1176
        %s1178 = sand.u32 %s269, 1
        %s1179 = scalar_lea.sflag [#allocation8], %s1178
        %s1180 = sand.u32 %s269, 1
        %s1181 = smul.addr %s1180, 12
        %s1182 = scalar_lea.vmem [#allocation7], %s1181
        // Predicated region
        $region49: #{neural_renderer_forward.11} parent=47 // pred_check
          %p1183 = pneg %p201
        $region50: #{neural_renderer_forward.11} parent=47 // pred_check_branch
          %1185 = sbr.rel (%p1183) target = $region52
        $region51: #{neural_renderer_forward.11} parent=47 // pred_region
          %s1186 = smul.u32 3, %s31
          %1188 = vsyncadd %s1164, 0
          %s1189 = smul.addr %s1186, 6
          %s1190 = smul.addr %s1189, 8
          %s1191 = scalar_lea.hbm %s7, %s1190
          %s1192 = sshll.u32 %s1167, 4
          %s1193 = int_to_ptr.vmem [resolvable:$true] %s1192
          %s1194 = sshll.u32 %s1191, 4
          %s1195 = int_to_ptr.hbm [resolvable:$true] %s1194
          %1200 = dma.vmem_to_hbm [thread:$0]  %s1193, 2304, %s1195, %s1164, 128, 128, 8
        $region52: #{neural_renderer_forward.11} parent=47 // pred_fallthru
          _
        // Predicated region
        $region53: #{neural_renderer_forward.11} parent=47 // pred_check
          %p1201 = pneg %p227
        $region54: #{neural_renderer_forward.11} parent=47 // pred_check_branch
          %1203 = sbr.rel (%p1201) target = $region56
        $region55: #{neural_renderer_forward.11} parent=47 // pred_region
          %s1204 = smul.u32 3, %s31
          %1206 = vsyncadd %s1169, 0
          %s1207 = smul.addr %s1204, 3
          %s1208 = smul.addr %s1207, 8
          %s1209 = scalar_lea.hbm %s8, %s1208
          %s1210 = sshll.u32 %s1172, 4
          %s1211 = int_to_ptr.vmem [resolvable:$true] %s1210
          %s1212 = sshll.u32 %s1209, 4
          %s1213 = int_to_ptr.hbm [resolvable:$true] %s1212
          %1218 = dma.vmem_to_hbm [thread:$0]  %s1211, 1152, %s1213, %s1169, 128, 128, 8
        $region56: #{neural_renderer_forward.11} parent=47 // pred_fallthru
          _
        // Predicated region
        $region57: #{neural_renderer_forward.11} parent=47 // pred_check
          %p1219 = pneg %p253
        $region58: #{neural_renderer_forward.11} parent=47 // pred_check_branch
          %1221 = sbr.rel (%p1219) target = $region60
        $region59: #{neural_renderer_forward.11} parent=47 // pred_region
          %s1222 = smul.u32 3, %s31
          %1224 = vsyncadd %s1174, 0
          %s1225 = smul.addr %s1222, 3
          %s1226 = smul.addr %s1225, 4
          %s1227 = scalar_lea.hbm %s9, %s1226
          %s1228 = sshll.u32 %s1177, 4
          %s1229 = int_to_ptr.vmem [resolvable:$true] %s1228
          %s1230 = sshll.u32 %s1227, 4
          %s1231 = int_to_ptr.hbm [resolvable:$true] %s1230
          %1236 = dma.vmem_to_hbm [thread:$0]  %s1229, 576, %s1231, %s1174, 64, 64, 4
        $region60: #{neural_renderer_forward.11} parent=47 // pred_fallthru
          _
        // Predicated region
        $region61: #{neural_renderer_forward.11} parent=47 // pred_check
          %p1237 = pneg %p279
        $region62: #{neural_renderer_forward.11} parent=47 // pred_check_branch
          %1239 = sbr.rel (%p1237) target = $region64
        $region63: #{neural_renderer_forward.11} parent=47 // pred_region
          %s1240 = smul.u32 3, %s31
          %1242 = vsyncadd %s1179, 0
          %s1243 = smul.addr %s1240, 4
          %s1244 = scalar_lea.hbm %s10, %s1243
          %s1245 = sshll.u32 %s1182, 4
          %s1246 = int_to_ptr.vmem [resolvable:$true] %s1245
          %s1247 = sshll.u32 %s1244, 4
          %s1248 = int_to_ptr.hbm [resolvable:$true] %s1247
          %1253 = dma.vmem_to_hbm [thread:$0]  %s1246, 192, %s1248, %s1179, 64, 64, 4
        $region64: #{neural_renderer_forward.11} parent=47 // pred_fallthru
          _
      $region48: #{neural_renderer_forward.11} parent=5 // pred_fallthru
        _
      %p1254 = scmp.le.s32.totalorder 2, %s26
      // Predicated region
      $region65: #{neural_renderer_forward.11} parent=5 // pred_check
        %p1255 = pneg %p1254
      $region66: #{neural_renderer_forward.11} parent=5 // pred_check_branch
        %1257 = sbr.rel (%p1255) target = $region68
      $region67: #{neural_renderer_forward.11} parent=5 // pred_region
        %s1258 = ssub.s32 %s26, 2
        // Predicated region
        $region69: #{neural_renderer_forward.11} parent=67 // pred_check
          %p1259 = pneg %p207
        $region70: #{neural_renderer_forward.11} parent=67 // pred_check_branch
          %1261 = sbr.rel (%p1259) target = $region72
        $region71: #{neural_renderer_forward.11} parent=67 // pred_region
          %s1262 = sand.u32 %s192, 1
          %s1263 = scalar_lea.sflag [#allocation3], %s1262
          %s1264 = sand.u32 %s192, 1
          %s1265 = smul.addr %s1264, 144
          %s1266 = scalar_lea.vmem [#allocation2], %s1265
          %1268 = dma.done %s1263, 2304
        $region72: #{neural_renderer_forward.11} parent=67 // pred_fallthru
          _
        // Predicated region
        $region73: #{neural_renderer_forward.11} parent=67 // pred_check
          %p1269 = pneg %p233
        $region74: #{neural_renderer_forward.11} parent=67 // pred_check_branch
          %1271 = sbr.rel (%p1269) target = $region76
        $region75: #{neural_renderer_forward.11} parent=67 // pred_region
          %s1272 = sand.u32 %s32, 1
          %s1273 = scalar_lea.sflag [#allocation5], %s1272
          %s1274 = sand.u32 %s218, 1
          %s1275 = smul.addr %s1274, 72
          %s1276 = scalar_lea.vmem [#allocation4], %s1275
          %1278 = dma.done %s1273, 1152
        $region76: #{neural_renderer_forward.11} parent=67 // pred_fallthru
          _
        // Predicated region
        $region77: #{neural_renderer_forward.11} parent=67 // pred_check
          %p1279 = pneg %p259
        $region78: #{neural_renderer_forward.11} parent=67 // pred_check_branch
          %1281 = sbr.rel (%p1279) target = $region80
        $region79: #{neural_renderer_forward.11} parent=67 // pred_region
          %s1282 = sand.u32 %s32, 1
          %s1283 = scalar_lea.sflag [#allocation5], %s1282
          %s1284 = sand.u32 %s244, 1
          %s1285 = smul.addr %s1284, 36
          %s1286 = scalar_lea.vmem [#allocation6], %s1285
          %1288 = dma.done %s1283, 576
        $region80: #{neural_renderer_forward.11} parent=67 // pred_fallthru
          _
        // Predicated region
        $region81: #{neural_renderer_forward.11} parent=67 // pred_check
          %p1289 = pneg %p285
        $region82: #{neural_renderer_forward.11} parent=67 // pred_check_branch
          %1291 = sbr.rel (%p1289) target = $region84
        $region83: #{neural_renderer_forward.11} parent=67 // pred_region
          %s1292 = sand.u32 %s270, 1
          %s1293 = scalar_lea.sflag [#allocation8], %s1292
          %s1294 = sand.u32 %s270, 1
          %s1295 = smul.addr %s1294, 12
          %s1296 = scalar_lea.vmem [#allocation7], %s1295
          %1298 = dma.done %s1293, 192
        $region84: #{neural_renderer_forward.11} parent=67 // pred_fallthru
          _
      $region68: #{neural_renderer_forward.11} parent=5 // pred_fallthru
        _
    $region6: #{neural_renderer_forward.11} parent=1 // loop_footer
      %s30 = sadd.s32 1, %s26
    $region7: #{neural_renderer_forward.11} parent=1 // loop_footer_branch
      %25 = sbr.rel target = $region3
    $region8: #{neural_renderer_forward.11} parent=1 // loop_exit
      _
    %1299 = vsyncpa [#allocation3], 1
    %s1300 = scalar_lea.sflag [#allocation3], 1
    %1301 = vsyncpa %s1300, 1
    %1302 = vsyncpa [#allocation5], 1
    %s1303 = scalar_lea.sflag [#allocation5], 1
    %1304 = vsyncpa %s1303, 1
    %1305 = vsyncpa [#allocation8], 1
    %s1306 = scalar_lea.sflag [#allocation8], 1
    %1307 = vsyncpa %s1306, 1

</llo_original>
